<compile_context>
chip_gen: v7x
topology: tpu7x:2x2x1
jax: 0.10.0
libtpu: 0.0.40
codegen_flags: <defaults>
</compile_context>

<pallas_src>
import functools

import jax
import jax.numpy as jnp
import numpy as np
from jax.experimental import pallas as pl
from jax.experimental.pallas import tpu as pltpu


# layer order: cb1, cb2, l1, l2, r1, r2     (kh, kw, ph, pw)
_LAYER_DEFS = (
    (3, 3, 1, 1),
    (3, 3, 1, 1),
    (7, 1, 3, 0),
    (1, 7, 0, 3),
    (1, 7, 3, 0),   # r1: pads H, shrinks W -- exactly as in the PyTorch code
    (7, 1, 0, 3),
)
_LAYER_NAMES = ('cb1', 'cb2', 'l1', 'l2', 'r1', 'r2')
# VMEM canvas slots: cb1->0, cb2->1 (=cb), l1->2, l2->0 (=l), r1->2, r2->3 (=r)
_SRC = (-1, 0, 1, 2, 1, 2)
_DST = (0, 1, 2, 0, 2, 3)
_SLOT_CB, _SLOT_L, _SLOT_R = 1, 0, 3
_NUM_SLOTS = 4


# ------------------------------ Pallas kernel ------------------------------

def _down_kernel(x_ref, w_ref, b_ref, ssc_ref, pool_ref, im_ref, can_ref, *,
                 C, B, WC, HC, H, W, SMAX, LMAX, schedule):
    canvas = HC * WC
    slot_w = SMAX + canvas
    Wp = W // 2
    f32 = jnp.float32

    # Zero the built-in left margin of every canvas slot once per grid step:
    # the flat-shift conv reads it as the top/left zero padding, so no
    # per-layer staging copy is needed.  (Content + tail of every slot are
    # fully rewritten by each layer, so no stale data can leak.)
    for sl in range(_NUM_SLOTS):
        can_ref[sl, :, :SMAX] = jnp.zeros((C, SMAX), f32)

    # Hoisted column-within-canvas-row map (reused by every layer's mask).
    colmap = jax.lax.broadcasted_iota(jnp.int32, (C, LMAX), 1) % WC

    # Hoisted 2x2-max-pool column selector (picks the even-column anchors so
    # the pooled row comes out lane-compact via one tiny MXU matmul).
    sel = (jax.lax.broadcasted_iota(jnp.int32, (W, Wp), 0)
           == 2 * jax.lax.broadcasted_iota(jnp.int32, (W, Wp), 1)).astype(f32)

    for b in range(B):                     # lane-packed samples per grid step
        # ---- six ConvNormAct layers; intermediates stay resident in VMEM ---
        for idx, (kh, kw, ph, pw, ha, wa, hb, wb, src, dst) in enumerate(schedule):
            Lb = hb * WC                   # lane span of the output content
            kk = kh * kw * C               # folded contraction size
            s = ph * WC + pw               # flat shift == top/left zero pad

            # Source canvas (zero left margin built in), loaded once per layer
            # and sliced per tap -- the ext_ref staging copy is gone.
            if src < 0:
                a = x_ref[0, :, b * canvas:b * canvas + slot_w]
            else:
                a = can_ref[src]

            # Folded im2col: every tap is a contiguous lane window of the
            # zero-extended source canvas.
            t = 0
            for i in range(kh):
                for j in range(kw):
                    off = SMAX + i * WC + j - s
                    im_ref[t * C:(t + 1) * C, :Lb] = a[:, off:off + Lb]
                    t += 1

            # ONE MXU matmul over the folded K (per-tap K=C dots would blow up
            # the vmatmul count ~8x for the same FLOPs -- see header note).
            y = jnp.dot(w_ref[idx, :, :kk], im_ref[:kk, :Lb],
                        preferred_element_type=f32)
            y = jnp.maximum(y + b_ref[idx], 0.0)      # folded-BN bias + ReLU
            # Re-zero the wide/garbage columns so the zero-canvas invariant
            # (zeros outside the content window) holds for the next layer.
            y = jnp.where(colmap[:, :Lb] < wb, y, 0.0)

            can_ref[dst, :, SMAX:SMAX + Lb] = y
            if Lb < canvas:
                can_ref[dst, :, SMAX + Lb:slot_w] = jnp.zeros(
                    (C, canvas - Lb), f32)

        # ---- gcn = l + r ; ssc = cb + gcn ; 2x2 max-pool of gcn -------------
        # Outputs are written lane-compact in-kernel (no wrapper XLA crops).
        Lc = H * WC
        cb = can_ref[_SLOT_CB, :, SMAX:SMAX + Lc]
        gcn = (can_ref[_SLOT_L, :, SMAX:SMAX + Lc]
               + can_ref[_SLOT_R, :, SMAX:SMAX + Lc])
        ssc = cb + gcn
        for r in range(H):                                   # compact rows
            ssc_ref[b, :, r * W:(r + 1) * W] = ssc[:, r * WC:r * WC + W]

        h2 = jnp.maximum(gcn[:, :Lc - 1], gcn[:, 1:])        # horizontal pairs
        p4 = jnp.maximum(h2[:, :Lc - 1 - WC], h2[:, WC:])    # + vertical pairs
        for rp in range(H // 2):
            row = p4[:, 2 * rp * WC:2 * rp * WC + W]         # anchors @ even cols
            pool_ref[b, :, rp * Wp:(rp + 1) * Wp] = jnp.dot(
                row, sel, preferred_element_type=f32)


# ------------------------------ Pallas wrapper ------------------------------

def down_module_pallas(x_nchw, p, *, pack_b=None):
    """x_nchw: (N, in_c, H, W) float32; returns (ssc, pool), both NCHW."""
    N, in_c, H, W = x_nchw.shape
    out_c = p['cb1_w'].shape[-1]
    assert H % 2 == 0 and W % 2 == 0, "MaxPool2d(2) path assumes even H, W"
    assert W > 6, "gcn right branch needs W > 6 (as in the PyTorch module)"
    C = max(8, ((max(in_c, out_c) + 7) // 8) * 8)   # channel slots (sublanes)

    # Static content-shape chain of the six convs inside the canvas.
    shapes_in = [(H, W), (H, W), (H, W), (H, W), (H, W), (H + 6, W - 6)]
    schedule, need_wc, need_hc, smax_need = [], W, H, 1
    for (kh, kw, ph, pw), (ha, wa), src, dst in zip(
            _LAYER_DEFS, shapes_in, _SRC, _DST):
        hb = ha + 2 * ph - kh + 1          # output content height
        wb = wa + 2 * pw - kw + 1          # output content width
        schedule.append((kh, kw, ph, pw, ha, wa, hb, wb, src, dst))
        need_wc = max(need_wc, wa + 2 * pw)
        # Enough zero rows below the content so (a) down-shifted taps stay
        # in-slot and (b) with lane packing the previous sample's zero tail
        # doubles as the next sample's top padding.
        need_hc = max(need_hc, hb, hb + (kh - 1 - ph) + 1, ha + ph)
        smax_need = max(smax_need, ph * WC if False else 0)  # placeholder
    WC = 1 << (need_wc - 1).bit_length()        # pow2 canvas width (mask-safe)
    hc_mult = max(1, 128 // WC)                 # keep canvas a 128-lane multiple
    HC = -(-need_hc // hc_mult) * hc_mult
    canvas = HC * WC
    LMAX = max(e[6] * WC for e in schedule)     # largest conv-output lane span
    KMAX = max(kh * kw for kh, kw, _, _ in _LAYER_DEFS) * C
    smax_need = max(ph * WC + pw for _, _, ph, pw in _LAYER_DEFS)
    SMAX = -(-smax_need // 128) * 128           # 128-aligned zero left margin

    # Lane-pack B samples per grid step to amortize per-step overhead; keep at
    # least 2 grid steps when N >= 2 so v7x's two TensorCores both get work.
    if pack_b is None:
        B = 1 if N <= 2 else 2
    else:
        B = max(1, int(pack_b))
    Ngrid = -(-N // B)
    if N >= 2 and Ngrid < 2:
        B = -(-N // 2)
        Ngrid = -(-N // B)
    Npad = Ngrid * B

    # --- glue: zero canvas + built-in left margin; fold BN scale into W -----
    xc = jnp.pad(x_nchw.astype(jnp.float32),
                 ((0, Npad - N), (0, C - in_c), (0, HC - H), (0, WC - W)))
    xc = xc.reshape(Npad, C, canvas).reshape(Ngrid, B, C, canvas)
    xc = xc.transpose(0, 2, 1, 3).reshape(Ngrid, C, B * canvas)
    xc = jnp.pad(xc, ((0, 0), (0, 0), (SMAX, 0)))   # zero left margin

    wmats, bvecs = [], []
    for name, (kh, kw, _, _) in zip(_LAYER_NAMES, _LAYER_DEFS):
        w = p[f'{name}_w'] * p[f'{name}_s'][None, None, None, :]
        ci, co = w.shape[2], w.shape[3]
        w = jnp.pad(w, ((0, 0), (0, 0), (0, C - ci), (0, C - co)))
        wm = jnp.transpose(w.reshape(kh * kw * C, C))           # (C, taps*C)
        wmats.append(jnp.pad(wm, ((0, 0), (0, KMAX - kh * kw * C))))
        bvecs.append(jnp.pad(p[f'{name}_b'], (0, C - co)).reshape(C, 1))
    w_all = jnp.stack(wmats)        # (6, C, KMAX)
    b_all = jnp.stack(bvecs)        # (6, C, 1)

    Hp, Wp = H // 2, W // 2
    kernel = functools.partial(_down_kernel, C=C, B=B, WC=WC, HC=HC, H=H, W=W,
                               SMAX=SMAX, LMAX=LMAX, schedule=tuple(schedule))
    ssc_raw, pool_raw = pl.pallas_call(
        kernel,
        out_shape=(jax.ShapeDtypeStruct((Npad, C, H * W), jnp.float32),
                   jax.ShapeDtypeStruct((Npad, C, Hp * Wp), jnp.float32)),
        grid=(Ngrid,),
        in_specs=[
            pl.BlockSpec((1, C, SMAX + B * canvas), lambda n: (n, 0, 0)),
            pl.BlockSpec((6, C, KMAX), lambda n: (0, 0, 0)),
            pl.BlockSpec((6, C, 1), lambda n: (0, 0, 0)),
        ],
        out_specs=[pl.BlockSpec((B, C, H * W), lambda n: (n, 0, 0)),
                   pl.BlockSpec((B, C, Hp * Wp), lambda n: (n, 0, 0))],
        scratch_shapes=[
            pltpu.VMEM((KMAX, LMAX), jnp.float32),                    # im2col
            pltpu.VMEM((_NUM_SLOTS, C, SMAX + canvas), jnp.float32),  # cb/l/r
        ],
        compiler_params=pltpu.CompilerParams(
            dimension_semantics=("parallel",),   # v7x: shard steps over 2 TCs
            vmem_limit_bytes=32 * 1024 * 1024),  # ample headroom (~0.5 MiB used)
    )(xc, w_all, b_all)

    # Outputs are already lane-compact; only an (often no-op) batch/channel
    # crop and a free reshape remain in the wrapper.
    ssc = ssc_raw[:N, :out_c].reshape(N, out_c, H, W)
    pool = pool_raw[:N, :out_c].reshape(N, out_c, Hp, Wp)
    return ssc, pool


# ------------------------- parameters (synthetic) ---------------------------

def init_params(key, in_c, out_c):
    specs = {
        'cb1': (3, 3, in_c, out_c),
        'cb2': (3, 3, out_c, out_c),
        'l1': (7, 1, out_c, out_c),
        'l2': (1, 7, out_c, out_c),
        'r1': (1, 7, out_c, out_c),
        'r2': (7, 1, out_c, out_c),
    }
    eps = 1e-5
    p = {}
    for name, (kh, kw, ci, co) in specs.items():
        key, k_w, k_g, k_b = jax.random.split(key, 4)
        fan_in = kh * kw * ci
        p[f'{name}_w'] = (jax.random.normal(k_w, (kh, kw, ci, co), jnp.float32)
                          / jnp.sqrt(float(fan_in)))
        gamma = jax.random.uniform(k_g, (co,), jnp.float32, 0.5, 1.5)
        beta = jax.random.normal(k_b, (co,), jnp.float32) * 0.1
        # BatchNorm2d (eval mode, running_mean=0, running_var=1) folded into a
        # per-channel affine.
        p[f'{name}_s'] = gamma / jnp.sqrt(1.0 + eps)
        p[f'{name}_b'] = beta
    return p


# --------------------------- pure-JAX reference -----------------------------

def _conv_norm_act_ref(x, w, scale, bias, pad):
    y = jax.lax.conv_general_dilated(
        x, w, window_strides=(1, 1),
        padding=((pad[0], pad[0]), (pad[1], pad[1])),
        dimension_numbers=('NHWC', 'HWIO', 'NHWC'))
    y = y * scale.reshape(1, 1, 1, -1) + bias.reshape(1, 1, 1, -1)
    return jnp.maximum(y, 0.0)


def down_module_ref(x_nchw, p):
    x = jnp.transpose(x_nchw, (0, 2, 3, 1))
    y = _conv_norm_act_ref(x, p['cb1_w'], p['cb1_s'], p['cb1_b'], (1, 1))
    cb = _conv_norm_act_ref(y, p['cb2_w'], p['cb2_s'], p['cb2_b'], (1, 1))
    l = _conv_norm_act_ref(cb, p['l1_w'], p['l1_s'], p['l1_b'], (3, 0))
    l = _conv_norm_act_ref(l, p['l2_w'], p['l2_s'], p['l2_b'], (0, 3))
    r = _conv_norm_act_ref(cb, p['r1_w'], p['r1_s'], p['r1_b'], (3, 0))
    r = _conv_norm_act_ref(r, p['r2_w'], p['r2_s'], p['r2_b'], (0, 3))
    gcn = l + r
    ssc = cb + gcn
    pool = jax.lax.reduce_window(gcn, -jnp.inf, jax.lax.max,
                                 (1, 2, 2, 1), (1, 2, 2, 1), 'VALID')
    return (jnp.transpose(ssc, (0, 3, 1, 2)), jnp.transpose(pool, (0, 3, 1, 2)))


# ----------------------------------- main -----------------------------------

if __name__ == "__main__":
    key = jax.random.PRNGKey(0)
    k_x, k_p, k_x2, k_p2 = jax.random.split(key, 4)

    # Case 1: headline shape (N=2 -> B=1, grid=2: both v7x TensorCores busy).
    N, in_c, out_c, H, W = 2, 4, 8, 16, 16
    x = jax.random.normal(k_x, (N, in_c, H, W), jnp.float32)   # PyTorch NCHW
    params = init_params(k_p, in_c, out_c)

    ssc, pool = down_module_pallas(x, params)
    jax.block_until_ready((ssc, pool))
    assert ssc.shape == (N, out_c, H, W)
    assert pool.shape == (N, out_c, H // 2, W // 2)

    ssc_expect, pool_expect = down_module_ref(x, params)
    np.testing.assert_allclose(np.asarray(ssc), np.asarray(ssc_expect),
                               rtol=1e-4, atol=1e-4)
    np.testing.assert_allclose(np.asarray(pool), np.asarray(pool_expect),
                               rtol=1e-4, atol=1e-4)

    # Case 2: exercises lane-packing (B=2), batch padding and channel crop.
    N2, in_c2, out_c2, H2, W2 = 5, 3, 6, 8, 8
    x2 = jax.random.normal(k_x2, (N2, in_c2, H2, W2), jnp.float32)
    params2 = init_params(k_p2, in_c2, out_c2)

    ssc2, pool2 = down_module_pallas(x2, params2)
    jax.block_until_ready((ssc2, pool2))
    assert ssc2.shape == (N2, out_c2, H2, W2)
    assert pool2.shape == (N2, out_c2, H2 // 2, W2 // 2)

    ssc2_expect, pool2_expect = down_module_ref(x2, params2)
    np.testing.assert_allclose(np.asarray(ssc2), np.asarray(ssc2_expect),
                               rtol=1e-4, atol=1e-4)
    np.testing.assert_allclose(np.asarray(pool2), np.asarray(pool2_expect),
                               rtol=1e-4, atol=1e-4)

    print("KERNEL_OK")
</pallas_src>

<mosaic_0001>
module attributes {stable_mosaic.version = 11 : i64} {
  func.func @_down_kernel(%arg0: i32, %arg1: memref<1x8x896xf32, #tpu.memory_space<vmem>>, %arg2: memref<6x8x72xf32, #tpu.memory_space<vmem>>, %arg3: memref<6x8x1xf32, #tpu.memory_space<vmem>>, %arg4: memref<1x8x256xf32, #tpu.memory_space<vmem>>, %arg5: memref<1x8x64xf32, #tpu.memory_space<vmem>>, %arg6: memref<72x704xf32, #tpu.memory_space<vmem>>, %arg7: memref<4x8x896xf32, #tpu.memory_space<vmem>>) attributes {dimension_semantics = [#tpu.dimension_semantics<parallel>], iteration_bounds = array<i64: 2>, scalar_prefetch = 0 : i64, scratch_operands = 2 : i64, tpu.core_type = #tpu.core_type<tc>, window_params = [{transform_indices = @transform_0, window_bounds = array<i64: 1, 8, 896>}, {pipeline_mode = #tpu.pipeline_mode<synchronous>, transform_indices = @transform_1, window_bounds = array<i64: 6, 8, 72>}, {pipeline_mode = #tpu.pipeline_mode<synchronous>, transform_indices = @transform_2, window_bounds = array<i64: 6, 8, 1>}, {transform_indices = @transform_3, window_bounds = array<i64: 1, 8, 256>}, {transform_indices = @transform_4, window_bounds = array<i64: 1, 8, 64>}]} {
    %cst = arith.constant 0.000000e+00 : f32
    %0 = vector.broadcast %cst : f32 to vector<8x128xf32>
    %c0 = arith.constant 0 : index
    %c0_0 = arith.constant 0 : index
    %c0_1 = arith.constant 0 : index
    %1 = vector.load %arg7[%c0, %c0_0, %c0_1] : memref<4x8x896xf32, #tpu.memory_space<vmem>>, vector<1x8x128xf32>
    %2 = vector.shape_cast %1 : vector<1x8x128xf32> to vector<8x128xf32>
    %3 = vector.shape_cast %0 : vector<8x128xf32> to vector<1x8x128xf32>
    tpu.vector_store %arg7[%c0, %c0_0, %c0_1], %3 {strides = array<i32>} : memref<4x8x896xf32, #tpu.memory_space<vmem>>, vector<1x8x128xf32>,
    %cst_2 = arith.constant 0.000000e+00 : f32
    %4 = vector.broadcast %cst_2 : f32 to vector<8x128xf32>
    %c1 = arith.constant 1 : index
    %c0_3 = arith.constant 0 : index
    %c0_4 = arith.constant 0 : index
    %5 = vector.load %arg7[%c1, %c0_3, %c0_4] : memref<4x8x896xf32, #tpu.memory_space<vmem>>, vector<1x8x128xf32>
    %6 = vector.shape_cast %5 : vector<1x8x128xf32> to vector<8x128xf32>
    %7 = vector.shape_cast %4 : vector<8x128xf32> to vector<1x8x128xf32>
    tpu.vector_store %arg7[%c1, %c0_3, %c0_4], %7 {strides = array<i32>} : memref<4x8x896xf32, #tpu.memory_space<vmem>>, vector<1x8x128xf32>,
    %cst_5 = arith.constant 0.000000e+00 : f32
    %8 = vector.broadcast %cst_5 : f32 to vector<8x128xf32>
    %c2 = arith.constant 2 : index
    %c0_6 = arith.constant 0 : index
    %c0_7 = arith.constant 0 : index
    %9 = vector.load %arg7[%c2, %c0_6, %c0_7] : memref<4x8x896xf32, #tpu.memory_space<vmem>>, vector<1x8x128xf32>
    %10 = vector.shape_cast %9 : vector<1x8x128xf32> to vector<8x128xf32>
    %11 = vector.shape_cast %8 : vector<8x128xf32> to vector<1x8x128xf32>
    tpu.vector_store %arg7[%c2, %c0_6, %c0_7], %11 {strides = array<i32>} : memref<4x8x896xf32, #tpu.memory_space<vmem>>, vector<1x8x128xf32>,
    %cst_8 = arith.constant 0.000000e+00 : f32
    %12 = vector.broadcast %cst_8 : f32 to vector<8x128xf32>
    %c3 = arith.constant 3 : index
    %c0_9 = arith.constant 0 : index
    %c0_10 = arith.constant 0 : index
    %13 = vector.load %arg7[%c3, %c0_9, %c0_10] : memref<4x8x896xf32, #tpu.memory_space<vmem>>, vector<1x8x128xf32>
    %14 = vector.shape_cast %13 : vector<1x8x128xf32> to vector<8x128xf32>
    %15 = vector.shape_cast %12 : vector<8x128xf32> to vector<1x8x128xf32>
    tpu.vector_store %arg7[%c3, %c0_9, %c0_10], %15 {strides = array<i32>} : memref<4x8x896xf32, #tpu.memory_space<vmem>>, vector<1x8x128xf32>,
    %16 = tpu.iota {dimensions = array<i32: 1>} : vector<8x704xi32>
    %c32_i32 = arith.constant 32 : i32
    %c0_i32 = arith.constant 0 : i32
    %17 = arith.cmpi eq, %c32_i32, %c0_i32 : i32
    %c1_i32 = arith.constant 1 : i32
    %18 = arith.select %17, %c1_i32, %c32_i32 : i32
    %19 = vector.broadcast %18 : i32 to vector<8x704xi32>
    %20 = arith.remsi %16, %19 : vector<8x704xi32>
    %c0_i32_11 = arith.constant 0 : i32
    %21 = vector.broadcast %c0_i32_11 : i32 to vector<8x704xi32>
    %22 = arith.cmpi ne, %20, %21 : vector<8x704xi32>
    %c0_i32_12 = arith.constant 0 : i32
    %23 = vector.broadcast %c0_i32_12 : i32 to vector<8x704xi32>
    %24 = arith.cmpi slt, %20, %23 : vector<8x704xi32>
    %c0_i32_13 = arith.constant 0 : i32
    %25 = arith.cmpi slt, %18, %c0_i32_13 : i32
    %26 = vector.broadcast %25 : i1 to vector<8x704xi1>
    %27 = vector.broadcast %26 : vector<8x704xi1> to vector<8x704xi1>
    %28 = arith.xori %24, %27 : vector<8x704xi1>
    %29 = arith.andi %28, %22 : vector<8x704xi1>
    %30 = vector.broadcast %18 : i32 to vector<8x704xi32>
    %31 = arith.addi %20, %30 : vector<8x704xi32>
    %32 = arith.select %29, %31, %20 : vector<8x704xi1>, vector<8x704xi32>
    %33 = tpu.iota {dimensions = array<i32: 0>} : vector<16x8xi32>
    %34 = tpu.iota {dimensions = array<i32: 1>} : vector<16x8xi32>
    %c2_i32 = arith.constant 2 : i32
    %35 = vector.broadcast %c2_i32 : i32 to vector<16x8xi32>
    %36 = arith.muli %35, %34 : vector<16x8xi32>
    %37 = arith.cmpi eq, %33, %36 : vector<16x8xi32>
    %38 = arith.extui %37 : vector<16x8xi1> to vector<16x8xi32>
    %39 = arith.sitofp %38 : vector<16x8xi32> to vector<16x8xf32>
    %c0_14 = arith.constant 0 : index
    %c0_15 = arith.constant 0 : index
    %c0_16 = arith.constant 0 : index
    %40 = vector.load %arg1[%c0_14, %c0_15, %c0_16] : memref<1x8x896xf32, #tpu.memory_space<vmem>>, vector<1x8x896xf32>
    %41 = vector.shape_cast %40 : vector<1x8x896xf32> to vector<8x896xf32>
    %42 = vector.extract_strided_slice %41 {offsets = [0, 95], sizes = [8, 512], strides = [1, 1]} : vector<8x896xf32> to vector<8x512xf32>
    %c0_17 = arith.constant 0 : index
    %c0_18 = arith.constant 0 : index
    %43 = vector.load %arg6[%c0_17, %c0_18] : memref<72x704xf32, #tpu.memory_space<vmem>>, vector<8x512xf32>
    tpu.vector_store %arg6[%c0_17, %c0_18], %42 {strides = array<i32>} : memref<72x704xf32, #tpu.memory_space<vmem>>, vector<8x512xf32>,
    %44 = vector.extract_strided_slice %41 {offsets = [0, 96], sizes = [8, 512], strides = [1, 1]} : vector<8x896xf32> to vector<8x512xf32>
    %c8 = arith.constant 8 : index
    %c0_19 = arith.constant 0 : index
    %45 = vector.load %arg6[%c8, %c0_19] : memref<72x704xf32, #tpu.memory_space<vmem>>, vector<8x512xf32>
    tpu.vector_store %arg6[%c8, %c0_19], %44 {strides = array<i32>} : memref<72x704xf32, #tpu.memory_space<vmem>>, vector<8x512xf32>,
    %46 = vector.extract_strided_slice %41 {offsets = [0, 97], sizes = [8, 512], strides = [1, 1]} : vector<8x896xf32> to vector<8x512xf32>
    %c16 = arith.constant 16 : index
    %c0_20 = arith.constant 0 : index
    %47 = vector.load %arg6[%c16, %c0_20] : memref<72x704xf32, #tpu.memory_space<vmem>>, vector<8x512xf32>
    tpu.vector_store %arg6[%c16, %c0_20], %46 {strides = array<i32>} : memref<72x704xf32, #tpu.memory_space<vmem>>, vector<8x512xf32>,
    %48 = vector.extract_strided_slice %41 {offsets = [0, 127], sizes = [8, 512], strides = [1, 1]} : vector<8x896xf32> to vector<8x512xf32>
    %c24 = arith.constant 24 : index
    %c0_21 = arith.constant 0 : index
    %49 = vector.load %arg6[%c24, %c0_21] : memref<72x704xf32, #tpu.memory_space<vmem>>, vector<8x512xf32>
    tpu.vector_store %arg6[%c24, %c0_21], %48 {strides = array<i32>} : memref<72x704xf32, #tpu.memory_space<vmem>>, vector<8x512xf32>,
    %50 = vector.extract_strided_slice %41 {offsets = [0, 128], sizes = [8, 512], strides = [1, 1]} : vector<8x896xf32> to vector<8x512xf32>
    %c32 = arith.constant 32 : index
    %c0_22 = arith.constant 0 : index
    %51 = vector.load %arg6[%c32, %c0_22] : memref<72x704xf32, #tpu.memory_space<vmem>>, vector<8x512xf32>
    tpu.vector_store %arg6[%c32, %c0_22], %50 {strides = array<i32>} : memref<72x704xf32, #tpu.memory_space<vmem>>, vector<8x512xf32>,
    %52 = vector.extract_strided_slice %41 {offsets = [0, 129], sizes = [8, 512], strides = [1, 1]} : vector<8x896xf32> to vector<8x512xf32>
    %c40 = arith.constant 40 : index
    %c0_23 = arith.constant 0 : index
    %53 = vector.load %arg6[%c40, %c0_23] : memref<72x704xf32, #tpu.memory_space<vmem>>, vector<8x512xf32>
    tpu.vector_store %arg6[%c40, %c0_23], %52 {strides = array<i32>} : memref<72x704xf32, #tpu.memory_space<vmem>>, vector<8x512xf32>,
    %54 = vector.extract_strided_slice %41 {offsets = [0, 159], sizes = [8, 512], strides = [1, 1]} : vector<8x896xf32> to vector<8x512xf32>
    %c48 = arith.constant 48 : index
    %c0_24 = arith.constant 0 : index
    %55 = vector.load %arg6[%c48, %c0_24] : memref<72x704xf32, #tpu.memory_space<vmem>>, vector<8x512xf32>
    tpu.vector_store %arg6[%c48, %c0_24], %54 {strides = array<i32>} : memref<72x704xf32, #tpu.memory_space<vmem>>, vector<8x512xf32>,
    %56 = vector.extract_strided_slice %41 {offsets = [0, 160], sizes = [8, 512], strides = [1, 1]} : vector<8x896xf32> to vector<8x512xf32>
    %c56 = arith.constant 56 : index
    %c0_25 = arith.constant 0 : index
    %57 = vector.load %arg6[%c56, %c0_25] : memref<72x704xf32, #tpu.memory_space<vmem>>, vector<8x512xf32>
    tpu.vector_store %arg6[%c56, %c0_25], %56 {strides = array<i32>} : memref<72x704xf32, #tpu.memory_space<vmem>>, vector<8x512xf32>,
    %58 = vector.extract_strided_slice %41 {offsets = [0, 161], sizes = [8, 512], strides = [1, 1]} : vector<8x896xf32> to vector<8x512xf32>
    %c64 = arith.constant 64 : index
    %c0_26 = arith.constant 0 : index
    %59 = vector.load %arg6[%c64, %c0_26] : memref<72x704xf32, #tpu.memory_space<vmem>>, vector<8x512xf32>
    tpu.vector_store %arg6[%c64, %c0_26], %58 {strides = array<i32>} : memref<72x704xf32, #tpu.memory_space<vmem>>, vector<8x512xf32>,
    %c0_27 = arith.constant 0 : index
    %c0_28 = arith.constant 0 : index
    %c0_29 = arith.constant 0 : index
    %60 = vector.load %arg2[%c0_27, %c0_28, %c0_29] : memref<6x8x72xf32, #tpu.memory_space<vmem>>, vector<1x8x72xf32>
    %61 = vector.shape_cast %60 : vector<1x8x72xf32> to vector<8x72xf32>
    %c0_30 = arith.constant 0 : index
    %c0_31 = arith.constant 0 : index
    %62 = vector.load %arg6[%c0_30, %c0_31] : memref<72x704xf32, #tpu.memory_space<vmem>>, vector<72x512xf32>
    %cst_32 = arith.constant dense<0.000000e+00> : vector<8x512xf32>
    %63 = tpu.matmul %61, %62, %cst_32 {dimension_numbers = #tpu.dot_dimension_numbers<[1], [0], [0], [1], [0, 0, 1, 1], [], []>} : vector<8x72xf32>, vector<72x512xf32>, vector<8x512xf32> -> vector<8x512xf32>
    %c0_33 = arith.constant 0 : index
    %c0_34 = arith.constant 0 : index
    %c0_35 = arith.constant 0 : index
    %64 = vector.load %arg3[%c0_33, %c0_34, %c0_35] : memref<6x8x1xf32, #tpu.memory_space<vmem>>, vector<1x8x1xf32>
    %65 = vector.shape_cast %64 : vector<1x8x1xf32> to vector<8x1xf32>
    %66 = vector.broadcast %65 : vector<8x1xf32> to vector<8x512xf32>
    %67 = arith.addf %63, %66 : vector<8x512xf32>
    %cst_36 = arith.constant 0.000000e+00 : f32
    %68 = vector.broadcast %cst_36 : f32 to vector<8x512xf32>
    %69 = arith.maximumf %67, %68 : vector<8x512xf32>
    %70 = vector.extract_strided_slice %32 {offsets = [0, 0], sizes = [8, 512], strides = [1, 1]} : vector<8x704xi32> to vector<8x512xi32>
    %c16_i32 = arith.constant 16 : i32
    %71 = vector.broadcast %c16_i32 : i32 to vector<8x512xi32>
    %72 = arith.cmpi slt, %70, %71 : vector<8x512xi32>
    %cst_37 = arith.constant 0.000000e+00 : f32
    %73 = vector.broadcast %cst_37 : f32 to vector<8x512xf32>
    %74 = arith.select %72, %69, %73 : vector<8x512xi1>, vector<8x512xf32>
    %c0_38 = arith.constant 0 : index
    %c0_39 = arith.constant 0 : index
    %c128 = arith.constant 128 : index
    %75 = vector.load %arg7[%c0_38, %c0_39, %c128] : memref<4x8x896xf32, #tpu.memory_space<vmem>>, vector<1x8x512xf32>
    %76 = vector.shape_cast %75 : vector<1x8x512xf32> to vector<8x512xf32>
    %77 = vector.shape_cast %74 : vector<8x512xf32> to vector<1x8x512xf32>
    tpu.vector_store %arg7[%c0_38, %c0_39, %c128], %77 {strides = array<i32>} : memref<4x8x896xf32, #tpu.memory_space<vmem>>, vector<1x8x512xf32>,
    %cst_40 = arith.constant 0.000000e+00 : f32
    %78 = vector.broadcast %cst_40 : f32 to vector<8x256xf32>
    %c0_41 = arith.constant 0 : index
    %c0_42 = arith.constant 0 : index
    %c640 = arith.constant 640 : index
    %79 = vector.load %arg7[%c0_41, %c0_42, %c640] : memref<4x8x896xf32, #tpu.memory_space<vmem>>, vector<1x8x256xf32>
    %80 = vector.shape_cast %79 : vector<1x8x256xf32> to vector<8x256xf32>
    %81 = vector.shape_cast %78 : vector<8x256xf32> to vector<1x8x256xf32>
    tpu.vector_store %arg7[%c0_41, %c0_42, %c640], %81 {strides = array<i32>} : memref<4x8x896xf32, #tpu.memory_space<vmem>>, vector<1x8x256xf32>,
    %c0_43 = arith.constant 0 : index
    %c0_44 = arith.constant 0 : index
    %c0_45 = arith.constant 0 : index
    %82 = vector.load %arg7[%c0_43, %c0_44, %c0_45] : memref<4x8x896xf32, #tpu.memory_space<vmem>>, vector<1x8x896xf32>
    %83 = vector.shape_cast %82 : vector<1x8x896xf32> to vector<8x896xf32>
    %84 = vector.extract_strided_slice %83 {offsets = [0, 95], sizes = [8, 512], strides = [1, 1]} : vector<8x896xf32> to vector<8x512xf32>
    %c0_46 = arith.constant 0 : index
    %c0_47 = arith.constant 0 : index
    %85 = vector.load %arg6[%c0_46, %c0_47] : memref<72x704xf32, #tpu.memory_space<vmem>>, vector<8x512xf32>
    tpu.vector_store %arg6[%c0_46, %c0_47], %84 {strides = array<i32>} : memref<72x704xf32, #tpu.memory_space<vmem>>, vector<8x512xf32>,
    %86 = vector.extract_strided_slice %83 {offsets = [0, 96], sizes = [8, 512], strides = [1, 1]} : vector<8x896xf32> to vector<8x512xf32>
    %c8_48 = arith.constant 8 : index
    %c0_49 = arith.constant 0 : index
    %87 = vector.load %arg6[%c8_48, %c0_49] : memref<72x704xf32, #tpu.memory_space<vmem>>, vector<8x512xf32>
    tpu.vector_store %arg6[%c8_48, %c0_49], %86 {strides = array<i32>} : memref<72x704xf32, #tpu.memory_space<vmem>>, vector<8x512xf32>,
    %88 = vector.extract_strided_slice %83 {offsets = [0, 97], sizes = [8, 512], strides = [1, 1]} : vector<8x896xf32> to vector<8x512xf32>
    %c16_50 = arith.constant 16 : index
    %c0_51 = arith.constant 0 : index
    %89 = vector.load %arg6[%c16_50, %c0_51] : memref<72x704xf32, #tpu.memory_space<vmem>>, vector<8x512xf32>
    tpu.vector_store %arg6[%c16_50, %c0_51], %88 {strides = array<i32>} : memref<72x704xf32, #tpu.memory_space<vmem>>, vector<8x512xf32>,
    %90 = vector.extract_strided_slice %83 {offsets = [0, 127], sizes = [8, 512], strides = [1, 1]} : vector<8x896xf32> to vector<8x512xf32>
    %c24_52 = arith.constant 24 : index
    %c0_53 = arith.constant 0 : index
    %91 = vector.load %arg6[%c24_52, %c0_53] : memref<72x704xf32, #tpu.memory_space<vmem>>, vector<8x512xf32>
    tpu.vector_store %arg6[%c24_52, %c0_53], %90 {strides = array<i32>} : memref<72x704xf32, #tpu.memory_space<vmem>>, vector<8x512xf32>,
    %92 = vector.extract_strided_slice %83 {offsets = [0, 128], sizes = [8, 512], strides = [1, 1]} : vector<8x896xf32> to vector<8x512xf32>
    %c32_54 = arith.constant 32 : index
    %c0_55 = arith.constant 0 : index
    %93 = vector.load %arg6[%c32_54, %c0_55] : memref<72x704xf32, #tpu.memory_space<vmem>>, vector<8x512xf32>
    tpu.vector_store %arg6[%c32_54, %c0_55], %92 {strides = array<i32>} : memref<72x704xf32, #tpu.memory_space<vmem>>, vector<8x512xf32>,
    %94 = vector.extract_strided_slice %83 {offsets = [0, 129], sizes = [8, 512], strides = [1, 1]} : vector<8x896xf32> to vector<8x512xf32>
    %c40_56 = arith.constant 40 : index
    %c0_57 = arith.constant 0 : index
    %95 = vector.load %arg6[%c40_56, %c0_57] : memref<72x704xf32, #tpu.memory_space<vmem>>, vector<8x512xf32>
    tpu.vector_store %arg6[%c40_56, %c0_57], %94 {strides = array<i32>} : memref<72x704xf32, #tpu.memory_space<vmem>>, vector<8x512xf32>,
    %96 = vector.extract_strided_slice %83 {offsets = [0, 159], sizes = [8, 512], strides = [1, 1]} : vector<8x896xf32> to vector<8x512xf32>
    %c48_58 = arith.constant 48 : index
    %c0_59 = arith.constant 0 : index
    %97 = vector.load %arg6[%c48_58, %c0_59] : memref<72x704xf32, #tpu.memory_space<vmem>>, vector<8x512xf32>
    tpu.vector_store %arg6[%c48_58, %c0_59], %96 {strides = array<i32>} : memref<72x704xf32, #tpu.memory_space<vmem>>, vector<8x512xf32>,
    %98 = vector.extract_strided_slice %83 {offsets = [0, 160], sizes = [8, 512], strides = [1, 1]} : vector<8x896xf32> to vector<8x512xf32>
    %c56_60 = arith.constant 56 : index
    %c0_61 = arith.constant 0 : index
    %99 = vector.load %arg6[%c56_60, %c0_61] : memref<72x704xf32, #tpu.memory_space<vmem>>, vector<8x512xf32>
    tpu.vector_store %arg6[%c56_60, %c0_61], %98 {strides = array<i32>} : memref<72x704xf32, #tpu.memory_space<vmem>>, vector<8x512xf32>,
    %100 = vector.extract_strided_slice %83 {offsets = [0, 161], sizes = [8, 512], strides = [1, 1]} : vector<8x896xf32> to vector<8x512xf32>
    %c64_62 = arith.constant 64 : index
    %c0_63 = arith.constant 0 : index
    %101 = vector.load %arg6[%c64_62, %c0_63] : memref<72x704xf32, #tpu.memory_space<vmem>>, vector<8x512xf32>
    tpu.vector_store %arg6[%c64_62, %c0_63], %100 {strides = array<i32>} : memref<72x704xf32, #tpu.memory_space<vmem>>, vector<8x512xf32>,
    %c1_64 = arith.constant 1 : index
    %c0_65 = arith.constant 0 : index
    %c0_66 = arith.constant 0 : index
    %102 = vector.load %arg2[%c1_64, %c0_65, %c0_66] : memref<6x8x72xf32, #tpu.memory_space<vmem>>, vector<1x8x72xf32>
    %103 = vector.shape_cast %102 : vector<1x8x72xf32> to vector<8x72xf32>
    %c0_67 = arith.constant 0 : index
    %c0_68 = arith.constant 0 : index
    %104 = vector.load %arg6[%c0_67, %c0_68] : memref<72x704xf32, #tpu.memory_space<vmem>>, vector<72x512xf32>
    %cst_69 = arith.constant dense<0.000000e+00> : vector<8x512xf32>
    %105 = tpu.matmul %103, %104, %cst_69 {dimension_numbers = #tpu.dot_dimension_numbers<[1], [0], [0], [1], [0, 0, 1, 1], [], []>} : vector<8x72xf32>, vector<72x512xf32>, vector<8x512xf32> -> vector<8x512xf32>
    %c1_70 = arith.constant 1 : index
    %c0_71 = arith.constant 0 : index
    %c0_72 = arith.constant 0 : index
    %106 = vector.load %arg3[%c1_70, %c0_71, %c0_72] : memref<6x8x1xf32, #tpu.memory_space<vmem>>, vector<1x8x1xf32>
    %107 = vector.shape_cast %106 : vector<1x8x1xf32> to vector<8x1xf32>
    %108 = vector.broadcast %107 : vector<8x1xf32> to vector<8x512xf32>
    %109 = arith.addf %105, %108 : vector<8x512xf32>
    %cst_73 = arith.constant 0.000000e+00 : f32
    %110 = vector.broadcast %cst_73 : f32 to vector<8x512xf32>
    %111 = arith.maximumf %109, %110 : vector<8x512xf32>
    %112 = vector.extract_strided_slice %32 {offsets = [0, 0], sizes = [8, 512], strides = [1, 1]} : vector<8x704xi32> to vector<8x512xi32>
    %c16_i32_74 = arith.constant 16 : i32
    %113 = vector.broadcast %c16_i32_74 : i32 to vector<8x512xi32>
    %114 = arith.cmpi slt, %112, %113 : vector<8x512xi32>
    %cst_75 = arith.constant 0.000000e+00 : f32
    %115 = vector.broadcast %cst_75 : f32 to vector<8x512xf32>
    %116 = arith.select %114, %111, %115 : vector<8x512xi1>, vector<8x512xf32>
    %c1_76 = arith.constant 1 : index
    %c0_77 = arith.constant 0 : index
    %c128_78 = arith.constant 128 : index
    %117 = vector.load %arg7[%c1_76, %c0_77, %c128_78] : memref<4x8x896xf32, #tpu.memory_space<vmem>>, vector<1x8x512xf32>
    %118 = vector.shape_cast %117 : vector<1x8x512xf32> to vector<8x512xf32>
    %119 = vector.shape_cast %116 : vector<8x512xf32> to vector<1x8x512xf32>
    tpu.vector_store %arg7[%c1_76, %c0_77, %c128_78], %119 {strides = array<i32>} : memref<4x8x896xf32, #tpu.memory_space<vmem>>, vector<1x8x512xf32>,
    %cst_79 = arith.constant 0.000000e+00 : f32
    %120 = vector.broadcast %cst_79 : f32 to vector<8x256xf32>
    %c1_80 = arith.constant 1 : index
    %c0_81 = arith.constant 0 : index
    %c640_82 = arith.constant 640 : index
    %121 = vector.load %arg7[%c1_80, %c0_81, %c640_82] : memref<4x8x896xf32, #tpu.memory_space<vmem>>, vector<1x8x256xf32>
    %122 = vector.shape_cast %121 : vector<1x8x256xf32> to vector<8x256xf32>
    %123 = vector.shape_cast %120 : vector<8x256xf32> to vector<1x8x256xf32>
    tpu.vector_store %arg7[%c1_80, %c0_81, %c640_82], %123 {strides = array<i32>} : memref<4x8x896xf32, #tpu.memory_space<vmem>>, vector<1x8x256xf32>,
    %c1_83 = arith.constant 1 : index
    %c0_84 = arith.constant 0 : index
    %c0_85 = arith.constant 0 : index
    %124 = vector.load %arg7[%c1_83, %c0_84, %c0_85] : memref<4x8x896xf32, #tpu.memory_space<vmem>>, vector<1x8x896xf32>
    %125 = vector.shape_cast %124 : vector<1x8x896xf32> to vector<8x896xf32>
    %126 = vector.extract_strided_slice %125 {offsets = [0, 32], sizes = [8, 512], strides = [1, 1]} : vector<8x896xf32> to vector<8x512xf32>
    %c0_86 = arith.constant 0 : index
    %c0_87 = arith.constant 0 : index
    %127 = vector.load %arg6[%c0_86, %c0_87] : memref<72x704xf32, #tpu.memory_space<vmem>>, vector<8x512xf32>
    tpu.vector_store %arg6[%c0_86, %c0_87], %126 {strides = array<i32>} : memref<72x704xf32, #tpu.memory_space<vmem>>, vector<8x512xf32>,
    %128 = vector.extract_strided_slice %125 {offsets = [0, 64], sizes = [8, 512], strides = [1, 1]} : vector<8x896xf32> to vector<8x512xf32>
    %c8_88 = arith.constant 8 : index
    %c0_89 = arith.constant 0 : index
    %129 = vector.load %arg6[%c8_88, %c0_89] : memref<72x704xf32, #tpu.memory_space<vmem>>, vector<8x512xf32>
    tpu.vector_store %arg6[%c8_88, %c0_89], %128 {strides = array<i32>} : memref<72x704xf32, #tpu.memory_space<vmem>>, vector<8x512xf32>,
    %130 = vector.extract_strided_slice %125 {offsets = [0, 96], sizes = [8, 512], strides = [1, 1]} : vector<8x896xf32> to vector<8x512xf32>
    %c16_90 = arith.constant 16 : index
    %c0_91 = arith.constant 0 : index
    %131 = vector.load %arg6[%c16_90, %c0_91] : memref<72x704xf32, #tpu.memory_space<vmem>>, vector<8x512xf32>
    tpu.vector_store %arg6[%c16_90, %c0_91], %130 {strides = array<i32>} : memref<72x704xf32, #tpu.memory_space<vmem>>, vector<8x512xf32>,
    %132 = vector.extract_strided_slice %125 {offsets = [0, 128], sizes = [8, 512], strides = [1, 1]} : vector<8x896xf32> to vector<8x512xf32>
    %c24_92 = arith.constant 24 : index
    %c0_93 = arith.constant 0 : index
    %133 = vector.load %arg6[%c24_92, %c0_93] : memref<72x704xf32, #tpu.memory_space<vmem>>, vector<8x512xf32>
    tpu.vector_store %arg6[%c24_92, %c0_93], %132 {strides = array<i32>} : memref<72x704xf32, #tpu.memory_space<vmem>>, vector<8x512xf32>,
    %134 = vector.extract_strided_slice %125 {offsets = [0, 160], sizes = [8, 512], strides = [1, 1]} : vector<8x896xf32> to vector<8x512xf32>
    %c32_94 = arith.constant 32 : index
    %c0_95 = arith.constant 0 : index
    %135 = vector.load %arg6[%c32_94, %c0_95] : memref<72x704xf32, #tpu.memory_space<vmem>>, vector<8x512xf32>
    tpu.vector_store %arg6[%c32_94, %c0_95], %134 {strides = array<i32>} : memref<72x704xf32, #tpu.memory_space<vmem>>, vector<8x512xf32>,
    %136 = vector.extract_strided_slice %125 {offsets = [0, 192], sizes = [8, 512], strides = [1, 1]} : vector<8x896xf32> to vector<8x512xf32>
    %c40_96 = arith.constant 40 : index
    %c0_97 = arith.constant 0 : index
    %137 = vector.load %arg6[%c40_96, %c0_97] : memref<72x704xf32, #tpu.memory_space<vmem>>, vector<8x512xf32>
    tpu.vector_store %arg6[%c40_96, %c0_97], %136 {strides = array<i32>} : memref<72x704xf32, #tpu.memory_space<vmem>>, vector<8x512xf32>,
    %138 = vector.extract_strided_slice %125 {offsets = [0, 224], sizes = [8, 512], strides = [1, 1]} : vector<8x896xf32> to vector<8x512xf32>
    %c48_98 = arith.constant 48 : index
    %c0_99 = arith.constant 0 : index
    %139 = vector.load %arg6[%c48_98, %c0_99] : memref<72x704xf32, #tpu.memory_space<vmem>>, vector<8x512xf32>
    tpu.vector_store %arg6[%c48_98, %c0_99], %138 {strides = array<i32>} : memref<72x704xf32, #tpu.memory_space<vmem>>, vector<8x512xf32>,
    %c2_100 = arith.constant 2 : index
    %c0_101 = arith.constant 0 : index
    %c0_102 = arith.constant 0 : index
    %140 = vector.load %arg2[%c2_100, %c0_101, %c0_102] : memref<6x8x72xf32, #tpu.memory_space<vmem>>, vector<1x8x56xf32>
    %141 = vector.shape_cast %140 : vector<1x8x56xf32> to vector<8x56xf32>
    %c0_103 = arith.constant 0 : index
    %c0_104 = arith.constant 0 : index
    %142 = vector.load %arg6[%c0_103, %c0_104] : memref<72x704xf32, #tpu.memory_space<vmem>>, vector<56x512xf32>
    %cst_105 = arith.constant dense<0.000000e+00> : vector<8x512xf32>
    %143 = tpu.matmul %141, %142, %cst_105 {dimension_numbers = #tpu.dot_dimension_numbers<[1], [0], [0], [1], [0, 0, 1, 1], [], []>} : vector<8x56xf32>, vector<56x512xf32>, vector<8x512xf32> -> vector<8x512xf32>
    %c2_106 = arith.constant 2 : index
    %c0_107 = arith.constant 0 : index
    %c0_108 = arith.constant 0 : index
    %144 = vector.load %arg3[%c2_106, %c0_107, %c0_108] : memref<6x8x1xf32, #tpu.memory_space<vmem>>, vector<1x8x1xf32>
    %145 = vector.shape_cast %144 : vector<1x8x1xf32> to vector<8x1xf32>
    %146 = vector.broadcast %145 : vector<8x1xf32> to vector<8x512xf32>
    %147 = arith.addf %143, %146 : vector<8x512xf32>
    %cst_109 = arith.constant 0.000000e+00 : f32
    %148 = vector.broadcast %cst_109 : f32 to vector<8x512xf32>
    %149 = arith.maximumf %147, %148 : vector<8x512xf32>
    %150 = vector.extract_strided_slice %32 {offsets = [0, 0], sizes = [8, 512], strides = [1, 1]} : vector<8x704xi32> to vector<8x512xi32>
    %c16_i32_110 = arith.constant 16 : i32
    %151 = vector.broadcast %c16_i32_110 : i32 to vector<8x512xi32>
    %152 = arith.cmpi slt, %150, %151 : vector<8x512xi32>
    %cst_111 = arith.constant 0.000000e+00 : f32
    %153 = vector.broadcast %cst_111 : f32 to vector<8x512xf32>
    %154 = arith.select %152, %149, %153 : vector<8x512xi1>, vector<8x512xf32>
    %c2_112 = arith.constant 2 : index
    %c0_113 = arith.constant 0 : index
    %c128_114 = arith.constant 128 : index
    %155 = vector.load %arg7[%c2_112, %c0_113, %c128_114] : memref<4x8x896xf32, #tpu.memory_space<vmem>>, vector<1x8x512xf32>
    %156 = vector.shape_cast %155 : vector<1x8x512xf32> to vector<8x512xf32>
    %157 = vector.shape_cast %154 : vector<8x512xf32> to vector<1x8x512xf32>
    tpu.vector_store %arg7[%c2_112, %c0_113, %c128_114], %157 {strides = array<i32>} : memref<4x8x896xf32, #tpu.memory_space<vmem>>, vector<1x8x512xf32>,
    %cst_115 = arith.constant 0.000000e+00 : f32
    %158 = vector.broadcast %cst_115 : f32 to vector<8x256xf32>
    %c2_116 = arith.constant 2 : index
    %c0_117 = arith.constant 0 : index
    %c640_118 = arith.constant 640 : index
    %159 = vector.load %arg7[%c2_116, %c0_117, %c640_118] : memref<4x8x896xf32, #tpu.memory_space<vmem>>, vector<1x8x256xf32>
    %160 = vector.shape_cast %159 : vector<1x8x256xf32> to vector<8x256xf32>
    %161 = vector.shape_cast %158 : vector<8x256xf32> to vector<1x8x256xf32>
    tpu.vector_store %arg7[%c2_116, %c0_117, %c640_118], %161 {strides = array<i32>} : memref<4x8x896xf32, #tpu.memory_space<vmem>>, vector<1x8x256xf32>,
    %c2_119 = arith.constant 2 : index
    %c0_120 = arith.constant 0 : index
    %c0_121 = arith.constant 0 : index
    %162 = vector.load %arg7[%c2_119, %c0_120, %c0_121] : memref<4x8x896xf32, #tpu.memory_space<vmem>>, vector<1x8x896xf32>
    %163 = vector.shape_cast %162 : vector<1x8x896xf32> to vector<8x896xf32>
    %164 = vector.extract_strided_slice %163 {offsets = [0, 125], sizes = [8, 512], strides = [1, 1]} : vector<8x896xf32> to vector<8x512xf32>
    %c0_122 = arith.constant 0 : index
    %c0_123 = arith.constant 0 : index
    %165 = vector.load %arg6[%c0_122, %c0_123] : memref<72x704xf32, #tpu.memory_space<vmem>>, vector<8x512xf32>
    tpu.vector_store %arg6[%c0_122, %c0_123], %164 {strides = array<i32>} : memref<72x704xf32, #tpu.memory_space<vmem>>, vector<8x512xf32>,
    %166 = vector.extract_strided_slice %163 {offsets = [0, 126], sizes = [8, 512], strides = [1, 1]} : vector<8x896xf32> to vector<8x512xf32>
    %c8_124 = arith.constant 8 : index
    %c0_125 = arith.constant 0 : index
    %167 = vector.load %arg6[%c8_124, %c0_125] : memref<72x704xf32, #tpu.memory_space<vmem>>, vector<8x512xf32>
    tpu.vector_store %arg6[%c8_124, %c0_125], %166 {strides = array<i32>} : memref<72x704xf32, #tpu.memory_space<vmem>>, vector<8x512xf32>,
    %168 = vector.extract_strided_slice %163 {offsets = [0, 127], sizes = [8, 512], strides = [1, 1]} : vector<8x896xf32> to vector<8x512xf32>
    %c16_126 = arith.constant 16 : index
    %c0_127 = arith.constant 0 : index
    %169 = vector.load %arg6[%c16_126, %c0_127] : memref<72x704xf32, #tpu.memory_space<vmem>>, vector<8x512xf32>
    tpu.vector_store %arg6[%c16_126, %c0_127], %168 {strides = array<i32>} : memref<72x704xf32, #tpu.memory_space<vmem>>, vector<8x512xf32>,
    %170 = vector.extract_strided_slice %163 {offsets = [0, 128], sizes = [8, 512], strides = [1, 1]} : vector<8x896xf32> to vector<8x512xf32>
    %c24_128 = arith.constant 24 : index
    %c0_129 = arith.constant 0 : index
    %171 = vector.load %arg6[%c24_128, %c0_129] : memref<72x704xf32, #tpu.memory_space<vmem>>, vector<8x512xf32>
    tpu.vector_store %arg6[%c24_128, %c0_129], %170 {strides = array<i32>} : memref<72x704xf32, #tpu.memory_space<vmem>>, vector<8x512xf32>,
    %172 = vector.extract_strided_slice %163 {offsets = [0, 129], sizes = [8, 512], strides = [1, 1]} : vector<8x896xf32> to vector<8x512xf32>
    %c32_130 = arith.constant 32 : index
    %c0_131 = arith.constant 0 : index
    %173 = vector.load %arg6[%c32_130, %c0_131] : memref<72x704xf32, #tpu.memory_space<vmem>>, vector<8x512xf32>
    tpu.vector_store %arg6[%c32_130, %c0_131], %172 {strides = array<i32>} : memref<72x704xf32, #tpu.memory_space<vmem>>, vector<8x512xf32>,
    %174 = vector.extract_strided_slice %163 {offsets = [0, 130], sizes = [8, 512], strides = [1, 1]} : vector<8x896xf32> to vector<8x512xf32>
    %c40_132 = arith.constant 40 : index
    %c0_133 = arith.constant 0 : index
    %175 = vector.load %arg6[%c40_132, %c0_133] : memref<72x704xf32, #tpu.memory_space<vmem>>, vector<8x512xf32>
    tpu.vector_store %arg6[%c40_132, %c0_133], %174 {strides = array<i32>} : memref<72x704xf32, #tpu.memory_space<vmem>>, vector<8x512xf32>,
    %176 = vector.extract_strided_slice %163 {offsets = [0, 131], sizes = [8, 512], strides = [1, 1]} : vector<8x896xf32> to vector<8x512xf32>
    %c48_134 = arith.constant 48 : index
    %c0_135 = arith.constant 0 : index
    %177 = vector.load %arg6[%c48_134, %c0_135] : memref<72x704xf32, #tpu.memory_space<vmem>>, vector<8x512xf32>
    tpu.vector_store %arg6[%c48_134, %c0_135], %176 {strides = array<i32>} : memref<72x704xf32, #tpu.memory_space<vmem>>, vector<8x512xf32>,
    %c3_136 = arith.constant 3 : index
    %c0_137 = arith.constant 0 : index
    %c0_138 = arith.constant 0 : index
    %178 = vector.load %arg2[%c3_136, %c0_137, %c0_138] : memref<6x8x72xf32, #tpu.memory_space<vmem>>, vector<1x8x56xf32>
    %179 = vector.shape_cast %178 : vector<1x8x56xf32> to vector<8x56xf32>
    %c0_139 = arith.constant 0 : index
    %c0_140 = arith.constant 0 : index
    %180 = vector.load %arg6[%c0_139, %c0_140] : memref<72x704xf32, #tpu.memory_space<vmem>>, vector<56x512xf32>
    %cst_141 = arith.constant dense<0.000000e+00> : vector<8x512xf32>
    %181 = tpu.matmul %179, %180, %cst_141 {dimension_numbers = #tpu.dot_dimension_numbers<[1], [0], [0], [1], [0, 0, 1, 1], [], []>} : vector<8x56xf32>, vector<56x512xf32>, vector<8x512xf32> -> vector<8x512xf32>
    %c3_142 = arith.constant 3 : index
    %c0_143 = arith.constant 0 : index
    %c0_144 = arith.constant 0 : index
    %182 = vector.load %arg3[%c3_142, %c0_143, %c0_144] : memref<6x8x1xf32, #tpu.memory_space<vmem>>, vector<1x8x1xf32>
    %183 = vector.shape_cast %182 : vector<1x8x1xf32> to vector<8x1xf32>
    %184 = vector.broadcast %183 : vector<8x1xf32> to vector<8x512xf32>
    %185 = arith.addf %181, %184 : vector<8x512xf32>
    %cst_145 = arith.constant 0.000000e+00 : f32
    %186 = vector.broadcast %cst_145 : f32 to vector<8x512xf32>
    %187 = arith.maximumf %185, %186 : vector<8x512xf32>
    %188 = vector.extract_strided_slice %32 {offsets = [0, 0], sizes = [8, 512], strides = [1, 1]} : vector<8x704xi32> to vector<8x512xi32>
    %c16_i32_146 = arith.constant 16 : i32
    %189 = vector.broadcast %c16_i32_146 : i32 to vector<8x512xi32>
    %190 = arith.cmpi slt, %188, %189 : vector<8x512xi32>
    %cst_147 = arith.constant 0.000000e+00 : f32
    %191 = vector.broadcast %cst_147 : f32 to vector<8x512xf32>
    %192 = arith.select %190, %187, %191 : vector<8x512xi1>, vector<8x512xf32>
    %c0_148 = arith.constant 0 : index
    %c0_149 = arith.constant 0 : index
    %c128_150 = arith.constant 128 : index
    %193 = vector.load %arg7[%c0_148, %c0_149, %c128_150] : memref<4x8x896xf32, #tpu.memory_space<vmem>>, vector<1x8x512xf32>
    %194 = vector.shape_cast %193 : vector<1x8x512xf32> to vector<8x512xf32>
    %195 = vector.shape_cast %192 : vector<8x512xf32> to vector<1x8x512xf32>
    tpu.vector_store %arg7[%c0_148, %c0_149, %c128_150], %195 {strides = array<i32>} : memref<4x8x896xf32, #tpu.memory_space<vmem>>, vector<1x8x512xf32>,
    %cst_151 = arith.constant 0.000000e+00 : f32
    %196 = vector.broadcast %cst_151 : f32 to vector<8x256xf32>
    %c0_152 = arith.constant 0 : index
    %c0_153 = arith.constant 0 : index
    %c640_154 = arith.constant 640 : index
    %197 = vector.load %arg7[%c0_152, %c0_153, %c640_154] : memref<4x8x896xf32, #tpu.memory_space<vmem>>, vector<1x8x256xf32>
    %198 = vector.shape_cast %197 : vector<1x8x256xf32> to vector<8x256xf32>
    %199 = vector.shape_cast %196 : vector<8x256xf32> to vector<1x8x256xf32>
    tpu.vector_store %arg7[%c0_152, %c0_153, %c640_154], %199 {strides = array<i32>} : memref<4x8x896xf32, #tpu.memory_space<vmem>>, vector<1x8x256xf32>,
    %c1_155 = arith.constant 1 : index
    %c0_156 = arith.constant 0 : index
    %c0_157 = arith.constant 0 : index
    %200 = vector.load %arg7[%c1_155, %c0_156, %c0_157] : memref<4x8x896xf32, #tpu.memory_space<vmem>>, vector<1x8x896xf32>
    %201 = vector.shape_cast %200 : vector<1x8x896xf32> to vector<8x896xf32>
    %202 = vector.extract_strided_slice %201 {offsets = [0, 32], sizes = [8, 704], strides = [1, 1]} : vector<8x896xf32> to vector<8x704xf32>
    %c0_158 = arith.constant 0 : index
    %c0_159 = arith.constant 0 : index
    %203 = vector.load %arg6[%c0_158, %c0_159] : memref<72x704xf32, #tpu.memory_space<vmem>>, vector<8x704xf32>
    tpu.vector_store %arg6[%c0_158, %c0_159], %202 {strides = array<i32>} : memref<72x704xf32, #tpu.memory_space<vmem>>, vector<8x704xf32>,
    %204 = vector.extract_strided_slice %201 {offsets = [0, 33], sizes = [8, 704], strides = [1, 1]} : vector<8x896xf32> to vector<8x704xf32>
    %c8_160 = arith.constant 8 : index
    %c0_161 = arith.constant 0 : index
    %205 = vector.load %arg6[%c8_160, %c0_161] : memref<72x704xf32, #tpu.memory_space<vmem>>, vector<8x704xf32>
    tpu.vector_store %arg6[%c8_160, %c0_161], %204 {strides = array<i32>} : memref<72x704xf32, #tpu.memory_space<vmem>>, vector<8x704xf32>,
    %206 = vector.extract_strided_slice %201 {offsets = [0, 34], sizes = [8, 704], strides = [1, 1]} : vector<8x896xf32> to vector<8x704xf32>
    %c16_162 = arith.constant 16 : index
    %c0_163 = arith.constant 0 : index
    %207 = vector.load %arg6[%c16_162, %c0_163] : memref<72x704xf32, #tpu.memory_space<vmem>>, vector<8x704xf32>
    tpu.vector_store %arg6[%c16_162, %c0_163], %206 {strides = array<i32>} : memref<72x704xf32, #tpu.memory_space<vmem>>, vector<8x704xf32>,
    %208 = vector.extract_strided_slice %201 {offsets = [0, 35], sizes = [8, 704], strides = [1, 1]} : vector<8x896xf32> to vector<8x704xf32>
    %c24_164 = arith.constant 24 : index
    %c0_165 = arith.constant 0 : index
    %209 = vector.load %arg6[%c24_164, %c0_165] : memref<72x704xf32, #tpu.memory_space<vmem>>, vector<8x704xf32>
    tpu.vector_store %arg6[%c24_164, %c0_165], %208 {strides = array<i32>} : memref<72x704xf32, #tpu.memory_space<vmem>>, vector<8x704xf32>,
    %210 = vector.extract_strided_slice %201 {offsets = [0, 36], sizes = [8, 704], strides = [1, 1]} : vector<8x896xf32> to vector<8x704xf32>
    %c32_166 = arith.constant 32 : index
    %c0_167 = arith.constant 0 : index
    %211 = vector.load %arg6[%c32_166, %c0_167] : memref<72x704xf32, #tpu.memory_space<vmem>>, vector<8x704xf32>
    tpu.vector_store %arg6[%c32_166, %c0_167], %210 {strides = array<i32>} : memref<72x704xf32, #tpu.memory_space<vmem>>, vector<8x704xf32>,
    %212 = vector.extract_strided_slice %201 {offsets = [0, 37], sizes = [8, 704], strides = [1, 1]} : vector<8x896xf32> to vector<8x704xf32>
    %c40_168 = arith.constant 40 : index
    %c0_169 = arith.constant 0 : index
    %213 = vector.load %arg6[%c40_168, %c0_169] : memref<72x704xf32, #tpu.memory_space<vmem>>, vector<8x704xf32>
    tpu.vector_store %arg6[%c40_168, %c0_169], %212 {strides = array<i32>} : memref<72x704xf32, #tpu.memory_space<vmem>>, vector<8x704xf32>,
    %214 = vector.extract_strided_slice %201 {offsets = [0, 38], sizes = [8, 704], strides = [1, 1]} : vector<8x896xf32> to vector<8x704xf32>
    %c48_170 = arith.constant 48 : index
    %c0_171 = arith.constant 0 : index
    %215 = vector.load %arg6[%c48_170, %c0_171] : memref<72x704xf32, #tpu.memory_space<vmem>>, vector<8x704xf32>
    tpu.vector_store %arg6[%c48_170, %c0_171], %214 {strides = array<i32>} : memref<72x704xf32, #tpu.memory_space<vmem>>, vector<8x704xf32>,
    %c4 = arith.constant 4 : index
    %c0_172 = arith.constant 0 : index
    %c0_173 = arith.constant 0 : index
    %216 = vector.load %arg2[%c4, %c0_172, %c0_173] : memref<6x8x72xf32, #tpu.memory_space<vmem>>, vector<1x8x56xf32>
    %217 = vector.shape_cast %216 : vector<1x8x56xf32> to vector<8x56xf32>
    %c0_174 = arith.constant 0 : index
    %c0_175 = arith.constant 0 : index
    %218 = vector.load %arg6[%c0_174, %c0_175] : memref<72x704xf32, #tpu.memory_space<vmem>>, vector<56x704xf32>
    %cst_176 = arith.constant dense<0.000000e+00> : vector<8x704xf32>
    %219 = tpu.matmul %217, %218, %cst_176 {dimension_numbers = #tpu.dot_dimension_numbers<[1], [0], [0], [1], [0, 0, 1, 1], [], []>} : vector<8x56xf32>, vector<56x704xf32>, vector<8x704xf32> -> vector<8x704xf32>
    %c4_177 = arith.constant 4 : index
    %c0_178 = arith.constant 0 : index
    %c0_179 = arith.constant 0 : index
    %220 = vector.load %arg3[%c4_177, %c0_178, %c0_179] : memref<6x8x1xf32, #tpu.memory_space<vmem>>, vector<1x8x1xf32>
    %221 = vector.shape_cast %220 : vector<1x8x1xf32> to vector<8x1xf32>
    %222 = vector.broadcast %221 : vector<8x1xf32> to vector<8x704xf32>
    %223 = arith.addf %219, %222 : vector<8x704xf32>
    %cst_180 = arith.constant 0.000000e+00 : f32
    %224 = vector.broadcast %cst_180 : f32 to vector<8x704xf32>
    %225 = arith.maximumf %223, %224 : vector<8x704xf32>
    %c10_i32 = arith.constant 10 : i32
    %226 = vector.broadcast %c10_i32 : i32 to vector<8x704xi32>
    %227 = arith.cmpi slt, %32, %226 : vector<8x704xi32>
    %cst_181 = arith.constant 0.000000e+00 : f32
    %228 = vector.broadcast %cst_181 : f32 to vector<8x704xf32>
    %229 = arith.select %227, %225, %228 : vector<8x704xi1>, vector<8x704xf32>
    %c2_182 = arith.constant 2 : index
    %c0_183 = arith.constant 0 : index
    %c128_184 = arith.constant 128 : index
    %230 = vector.load %arg7[%c2_182, %c0_183, %c128_184] : memref<4x8x896xf32, #tpu.memory_space<vmem>>, vector<1x8x704xf32>
    %231 = vector.shape_cast %230 : vector<1x8x704xf32> to vector<8x704xf32>
    %232 = vector.shape_cast %229 : vector<8x704xf32> to vector<1x8x704xf32>
    tpu.vector_store %arg7[%c2_182, %c0_183, %c128_184], %232 {strides = array<i32>} : memref<4x8x896xf32, #tpu.memory_space<vmem>>, vector<1x8x704xf32>,
    %cst_185 = arith.constant 0.000000e+00 : f32
    %233 = vector.broadcast %cst_185 : f32 to vector<8x64xf32>
    %c2_186 = arith.constant 2 : index
    %c0_187 = arith.constant 0 : index
    %c832 = arith.constant 832 : index
    %234 = vector.load %arg7[%c2_186, %c0_187, %c832] : memref<4x8x896xf32, #tpu.memory_space<vmem>>, vector<1x8x64xf32>
    %235 = vector.shape_cast %234 : vector<1x8x64xf32> to vector<8x64xf32>
    %236 = vector.shape_cast %233 : vector<8x64xf32> to vector<1x8x64xf32>
    tpu.vector_store %arg7[%c2_186, %c0_187, %c832], %236 {strides = array<i32>} : memref<4x8x896xf32, #tpu.memory_space<vmem>>, vector<1x8x64xf32>,
    %c2_188 = arith.constant 2 : index
    %c0_189 = arith.constant 0 : index
    %c0_190 = arith.constant 0 : index
    %237 = vector.load %arg7[%c2_188, %c0_189, %c0_190] : memref<4x8x896xf32, #tpu.memory_space<vmem>>, vector<1x8x896xf32>
    %238 = vector.shape_cast %237 : vector<1x8x896xf32> to vector<8x896xf32>
    %239 = vector.extract_strided_slice %238 {offsets = [0, 125], sizes = [8, 512], strides = [1, 1]} : vector<8x896xf32> to vector<8x512xf32>
    %c0_191 = arith.constant 0 : index
    %c0_192 = arith.constant 0 : index
    %240 = vector.load %arg6[%c0_191, %c0_192] : memref<72x704xf32, #tpu.memory_space<vmem>>, vector<8x512xf32>
    tpu.vector_store %arg6[%c0_191, %c0_192], %239 {strides = array<i32>} : memref<72x704xf32, #tpu.memory_space<vmem>>, vector<8x512xf32>,
    %241 = vector.extract_strided_slice %238 {offsets = [0, 157], sizes = [8, 512], strides = [1, 1]} : vector<8x896xf32> to vector<8x512xf32>
    %c8_193 = arith.constant 8 : index
    %c0_194 = arith.constant 0 : index
    %242 = vector.load %arg6[%c8_193, %c0_194] : memref<72x704xf32, #tpu.memory_space<vmem>>, vector<8x512xf32>
    tpu.vector_store %arg6[%c8_193, %c0_194], %241 {strides = array<i32>} : memref<72x704xf32, #tpu.memory_space<vmem>>, vector<8x512xf32>,
    %243 = vector.extract_strided_slice %238 {offsets = [0, 189], sizes = [8, 512], strides = [1, 1]} : vector<8x896xf32> to vector<8x512xf32>
    %c16_195 = arith.constant 16 : index
    %c0_196 = arith.constant 0 : index
    %244 = vector.load %arg6[%c16_195, %c0_196] : memref<72x704xf32, #tpu.memory_space<vmem>>, vector<8x512xf32>
    tpu.vector_store %arg6[%c16_195, %c0_196], %243 {strides = array<i32>} : memref<72x704xf32, #tpu.memory_space<vmem>>, vector<8x512xf32>,
    %245 = vector.extract_strided_slice %238 {offsets = [0, 221], sizes = [8, 512], strides = [1, 1]} : vector<8x896xf32> to vector<8x512xf32>
    %c24_197 = arith.constant 24 : index
    %c0_198 = arith.constant 0 : index
    %246 = vector.load %arg6[%c24_197, %c0_198] : memref<72x704xf32, #tpu.memory_space<vmem>>, vector<8x512xf32>
    tpu.vector_store %arg6[%c24_197, %c0_198], %245 {strides = array<i32>} : memref<72x704xf32, #tpu.memory_space<vmem>>, vector<8x512xf32>,
    %247 = vector.extract_strided_slice %238 {offsets = [0, 253], sizes = [8, 512], strides = [1, 1]} : vector<8x896xf32> to vector<8x512xf32>
    %c32_199 = arith.constant 32 : index
    %c0_200 = arith.constant 0 : index
    %248 = vector.load %arg6[%c32_199, %c0_200] : memref<72x704xf32, #tpu.memory_space<vmem>>, vector<8x512xf32>
    tpu.vector_store %arg6[%c32_199, %c0_200], %247 {strides = array<i32>} : memref<72x704xf32, #tpu.memory_space<vmem>>, vector<8x512xf32>,
    %249 = vector.extract_strided_slice %238 {offsets = [0, 285], sizes = [8, 512], strides = [1, 1]} : vector<8x896xf32> to vector<8x512xf32>
    %c40_201 = arith.constant 40 : index
    %c0_202 = arith.constant 0 : index
    %250 = vector.load %arg6[%c40_201, %c0_202] : memref<72x704xf32, #tpu.memory_space<vmem>>, vector<8x512xf32>
    tpu.vector_store %arg6[%c40_201, %c0_202], %249 {strides = array<i32>} : memref<72x704xf32, #tpu.memory_space<vmem>>, vector<8x512xf32>,
    %251 = vector.extract_strided_slice %238 {offsets = [0, 317], sizes = [8, 512], strides = [1, 1]} : vector<8x896xf32> to vector<8x512xf32>
    %c48_203 = arith.constant 48 : index
    %c0_204 = arith.constant 0 : index
    %252 = vector.load %arg6[%c48_203, %c0_204] : memref<72x704xf32, #tpu.memory_space<vmem>>, vector<8x512xf32>
    tpu.vector_store %arg6[%c48_203, %c0_204], %251 {strides = array<i32>} : memref<72x704xf32, #tpu.memory_space<vmem>>, vector<8x512xf32>,
    %c5 = arith.constant 5 : index
    %c0_205 = arith.constant 0 : index
    %c0_206 = arith.constant 0 : index
    %253 = vector.load %arg2[%c5, %c0_205, %c0_206] : memref<6x8x72xf32, #tpu.memory_space<vmem>>, vector<1x8x56xf32>
    %254 = vector.shape_cast %253 : vector<1x8x56xf32> to vector<8x56xf32>
    %c0_207 = arith.constant 0 : index
    %c0_208 = arith.constant 0 : index
    %255 = vector.load %arg6[%c0_207, %c0_208] : memref<72x704xf32, #tpu.memory_space<vmem>>, vector<56x512xf32>
    %cst_209 = arith.constant dense<0.000000e+00> : vector<8x512xf32>
    %256 = tpu.matmul %254, %255, %cst_209 {dimension_numbers = #tpu.dot_dimension_numbers<[1], [0], [0], [1], [0, 0, 1, 1], [], []>} : vector<8x56xf32>, vector<56x512xf32>, vector<8x512xf32> -> vector<8x512xf32>
    %c5_210 = arith.constant 5 : index
    %c0_211 = arith.constant 0 : index
    %c0_212 = arith.constant 0 : index
    %257 = vector.load %arg3[%c5_210, %c0_211, %c0_212] : memref<6x8x1xf32, #tpu.memory_space<vmem>>, vector<1x8x1xf32>
    %258 = vector.shape_cast %257 : vector<1x8x1xf32> to vector<8x1xf32>
    %259 = vector.broadcast %258 : vector<8x1xf32> to vector<8x512xf32>
    %260 = arith.addf %256, %259 : vector<8x512xf32>
    %cst_213 = arith.constant 0.000000e+00 : f32
    %261 = vector.broadcast %cst_213 : f32 to vector<8x512xf32>
    %262 = arith.maximumf %260, %261 : vector<8x512xf32>
    %263 = vector.extract_strided_slice %32 {offsets = [0, 0], sizes = [8, 512], strides = [1, 1]} : vector<8x704xi32> to vector<8x512xi32>
    %c16_i32_214 = arith.constant 16 : i32
    %264 = vector.broadcast %c16_i32_214 : i32 to vector<8x512xi32>
    %265 = arith.cmpi slt, %263, %264 : vector<8x512xi32>
    %cst_215 = arith.constant 0.000000e+00 : f32
    %266 = vector.broadcast %cst_215 : f32 to vector<8x512xf32>
    %267 = arith.select %265, %262, %266 : vector<8x512xi1>, vector<8x512xf32>
    %c3_216 = arith.constant 3 : index
    %c0_217 = arith.constant 0 : index
    %c128_218 = arith.constant 128 : index
    %268 = vector.load %arg7[%c3_216, %c0_217, %c128_218] : memref<4x8x896xf32, #tpu.memory_space<vmem>>, vector<1x8x512xf32>
    %269 = vector.shape_cast %268 : vector<1x8x512xf32> to vector<8x512xf32>
    %270 = vector.shape_cast %267 : vector<8x512xf32> to vector<1x8x512xf32>
    tpu.vector_store %arg7[%c3_216, %c0_217, %c128_218], %270 {strides = array<i32>} : memref<4x8x896xf32, #tpu.memory_space<vmem>>, vector<1x8x512xf32>,
    %cst_219 = arith.constant 0.000000e+00 : f32
    %271 = vector.broadcast %cst_219 : f32 to vector<8x256xf32>
    %c3_220 = arith.constant 3 : index
    %c0_221 = arith.constant 0 : index
    %c640_222 = arith.constant 640 : index
    %272 = vector.load %arg7[%c3_220, %c0_221, %c640_222] : memref<4x8x896xf32, #tpu.memory_space<vmem>>, vector<1x8x256xf32>
    %273 = vector.shape_cast %272 : vector<1x8x256xf32> to vector<8x256xf32>
    %274 = vector.shape_cast %271 : vector<8x256xf32> to vector<1x8x256xf32>
    tpu.vector_store %arg7[%c3_220, %c0_221, %c640_222], %274 {strides = array<i32>} : memref<4x8x896xf32, #tpu.memory_space<vmem>>, vector<1x8x256xf32>,
    %c1_223 = arith.constant 1 : index
    %c0_224 = arith.constant 0 : index
    %c128_225 = arith.constant 128 : index
    %275 = vector.load %arg7[%c1_223, %c0_224, %c128_225] : memref<4x8x896xf32, #tpu.memory_space<vmem>>, vector<1x8x512xf32>
    %276 = vector.shape_cast %275 : vector<1x8x512xf32> to vector<8x512xf32>
    %c0_226 = arith.constant 0 : index
    %c0_227 = arith.constant 0 : index
    %c128_228 = arith.constant 128 : index
    %277 = vector.load %arg7[%c0_226, %c0_227, %c128_228] : memref<4x8x896xf32, #tpu.memory_space<vmem>>, vector<1x8x512xf32>
    %278 = vector.shape_cast %277 : vector<1x8x512xf32> to vector<8x512xf32>
    %c3_229 = arith.constant 3 : index
    %c0_230 = arith.constant 0 : index
    %c128_231 = arith.constant 128 : index
    %279 = vector.load %arg7[%c3_229, %c0_230, %c128_231] : memref<4x8x896xf32, #tpu.memory_space<vmem>>, vector<1x8x512xf32>
    %280 = vector.shape_cast %279 : vector<1x8x512xf32> to vector<8x512xf32>
    %281 = arith.addf %278, %280 : vector<8x512xf32>
    %282 = arith.addf %276, %281 : vector<8x512xf32>
    %283 = vector.extract_strided_slice %282 {offsets = [0, 0], sizes = [8, 16], strides = [1, 1]} : vector<8x512xf32> to vector<8x16xf32>
    %c0_232 = arith.constant 0 : index
    %c0_233 = arith.constant 0 : index
    %c0_234 = arith.constant 0 : index
    %284 = vector.load %arg4[%c0_232, %c0_233, %c0_234] : memref<1x8x256xf32, #tpu.memory_space<vmem>>, vector<1x8x16xf32>
    %285 = vector.shape_cast %284 : vector<1x8x16xf32> to vector<8x16xf32>
    %286 = vector.shape_cast %283 : vector<8x16xf32> to vector<1x8x16xf32>
    tpu.vector_store %arg4[%c0_232, %c0_233, %c0_234], %286 {strides = array<i32>} : memref<1x8x256xf32, #tpu.memory_space<vmem>>, vector<1x8x16xf32>,
    %287 = vector.extract_strided_slice %282 {offsets = [0, 32], sizes = [8, 16], strides = [1, 1]} : vector<8x512xf32> to vector<8x16xf32>
    %c0_235 = arith.constant 0 : index
    %c0_236 = arith.constant 0 : index
    %c16_237 = arith.constant 16 : index
    %288 = vector.load %arg4[%c0_235, %c0_236, %c16_237] : memref<1x8x256xf32, #tpu.memory_space<vmem>>, vector<1x8x16xf32>
    %289 = vector.shape_cast %288 : vector<1x8x16xf32> to vector<8x16xf32>
    %290 = vector.shape_cast %287 : vector<8x16xf32> to vector<1x8x16xf32>
    tpu.vector_store %arg4[%c0_235, %c0_236, %c16_237], %290 {strides = array<i32>} : memref<1x8x256xf32, #tpu.memory_space<vmem>>, vector<1x8x16xf32>,
    %291 = vector.extract_strided_slice %282 {offsets = [0, 64], sizes = [8, 16], strides = [1, 1]} : vector<8x512xf32> to vector<8x16xf32>
    %c0_238 = arith.constant 0 : index
    %c0_239 = arith.constant 0 : index
    %c32_240 = arith.constant 32 : index
    %292 = vector.load %arg4[%c0_238, %c0_239, %c32_240] : memref<1x8x256xf32, #tpu.memory_space<vmem>>, vector<1x8x16xf32>
    %293 = vector.shape_cast %292 : vector<1x8x16xf32> to vector<8x16xf32>
    %294 = vector.shape_cast %291 : vector<8x16xf32> to vector<1x8x16xf32>
    tpu.vector_store %arg4[%c0_238, %c0_239, %c32_240], %294 {strides = array<i32>} : memref<1x8x256xf32, #tpu.memory_space<vmem>>, vector<1x8x16xf32>,
    %295 = vector.extract_strided_slice %282 {offsets = [0, 96], sizes = [8, 16], strides = [1, 1]} : vector<8x512xf32> to vector<8x16xf32>
    %c0_241 = arith.constant 0 : index
    %c0_242 = arith.constant 0 : index
    %c48_243 = arith.constant 48 : index
    %296 = vector.load %arg4[%c0_241, %c0_242, %c48_243] : memref<1x8x256xf32, #tpu.memory_space<vmem>>, vector<1x8x16xf32>
    %297 = vector.shape_cast %296 : vector<1x8x16xf32> to vector<8x16xf32>
    %298 = vector.shape_cast %295 : vector<8x16xf32> to vector<1x8x16xf32>
    tpu.vector_store %arg4[%c0_241, %c0_242, %c48_243], %298 {strides = array<i32>} : memref<1x8x256xf32, #tpu.memory_space<vmem>>, vector<1x8x16xf32>,
    %299 = vector.extract_strided_slice %282 {offsets = [0, 128], sizes = [8, 16], strides = [1, 1]} : vector<8x512xf32> to vector<8x16xf32>
    %c0_244 = arith.constant 0 : index
    %c0_245 = arith.constant 0 : index
    %c64_246 = arith.constant 64 : index
    %300 = vector.load %arg4[%c0_244, %c0_245, %c64_246] : memref<1x8x256xf32, #tpu.memory_space<vmem>>, vector<1x8x16xf32>
    %301 = vector.shape_cast %300 : vector<1x8x16xf32> to vector<8x16xf32>
    %302 = vector.shape_cast %299 : vector<8x16xf32> to vector<1x8x16xf32>
    tpu.vector_store %arg4[%c0_244, %c0_245, %c64_246], %302 {strides = array<i32>} : memref<1x8x256xf32, #tpu.memory_space<vmem>>, vector<1x8x16xf32>,
    %303 = vector.extract_strided_slice %282 {offsets = [0, 160], sizes = [8, 16], strides = [1, 1]} : vector<8x512xf32> to vector<8x16xf32>
    %c0_247 = arith.constant 0 : index
    %c0_248 = arith.constant 0 : index
    %c80 = arith.constant 80 : index
    %304 = vector.load %arg4[%c0_247, %c0_248, %c80] : memref<1x8x256xf32, #tpu.memory_space<vmem>>, vector<1x8x16xf32>
    %305 = vector.shape_cast %304 : vector<1x8x16xf32> to vector<8x16xf32>
    %306 = vector.shape_cast %303 : vector<8x16xf32> to vector<1x8x16xf32>
    tpu.vector_store %arg4[%c0_247, %c0_248, %c80], %306 {strides = array<i32>} : memref<1x8x256xf32, #tpu.memory_space<vmem>>, vector<1x8x16xf32>,
    %307 = vector.extract_strided_slice %282 {offsets = [0, 192], sizes = [8, 16], strides = [1, 1]} : vector<8x512xf32> to vector<8x16xf32>
    %c0_249 = arith.constant 0 : index
    %c0_250 = arith.constant 0 : index
    %c96 = arith.constant 96 : index
    %308 = vector.load %arg4[%c0_249, %c0_250, %c96] : memref<1x8x256xf32, #tpu.memory_space<vmem>>, vector<1x8x16xf32>
    %309 = vector.shape_cast %308 : vector<1x8x16xf32> to vector<8x16xf32>
    %310 = vector.shape_cast %307 : vector<8x16xf32> to vector<1x8x16xf32>
    tpu.vector_store %arg4[%c0_249, %c0_250, %c96], %310 {strides = array<i32>} : memref<1x8x256xf32, #tpu.memory_space<vmem>>, vector<1x8x16xf32>,
    %311 = vector.extract_strided_slice %282 {offsets = [0, 224], sizes = [8, 16], strides = [1, 1]} : vector<8x512xf32> to vector<8x16xf32>
    %c0_251 = arith.constant 0 : index
    %c0_252 = arith.constant 0 : index
    %c112 = arith.constant 112 : index
    %312 = vector.load %arg4[%c0_251, %c0_252, %c112] : memref<1x8x256xf32, #tpu.memory_space<vmem>>, vector<1x8x16xf32>
    %313 = vector.shape_cast %312 : vector<1x8x16xf32> to vector<8x16xf32>
    %314 = vector.shape_cast %311 : vector<8x16xf32> to vector<1x8x16xf32>
    tpu.vector_store %arg4[%c0_251, %c0_252, %c112], %314 {strides = array<i32>} : memref<1x8x256xf32, #tpu.memory_space<vmem>>, vector<1x8x16xf32>,
    %315 = vector.extract_strided_slice %282 {offsets = [0, 256], sizes = [8, 16], strides = [1, 1]} : vector<8x512xf32> to vector<8x16xf32>
    %c0_253 = arith.constant 0 : index
    %c0_254 = arith.constant 0 : index
    %c128_255 = arith.constant 128 : index
    %316 = vector.load %arg4[%c0_253, %c0_254, %c128_255] : memref<1x8x256xf32, #tpu.memory_space<vmem>>, vector<1x8x16xf32>
    %317 = vector.shape_cast %316 : vector<1x8x16xf32> to vector<8x16xf32>
    %318 = vector.shape_cast %315 : vector<8x16xf32> to vector<1x8x16xf32>
    tpu.vector_store %arg4[%c0_253, %c0_254, %c128_255], %318 {strides = array<i32>} : memref<1x8x256xf32, #tpu.memory_space<vmem>>, vector<1x8x16xf32>,
    %319 = vector.extract_strided_slice %282 {offsets = [0, 288], sizes = [8, 16], strides = [1, 1]} : vector<8x512xf32> to vector<8x16xf32>
    %c0_256 = arith.constant 0 : index
    %c0_257 = arith.constant 0 : index
    %c144 = arith.constant 144 : index
    %320 = vector.load %arg4[%c0_256, %c0_257, %c144] : memref<1x8x256xf32, #tpu.memory_space<vmem>>, vector<1x8x16xf32>
    %321 = vector.shape_cast %320 : vector<1x8x16xf32> to vector<8x16xf32>
    %322 = vector.shape_cast %319 : vector<8x16xf32> to vector<1x8x16xf32>
    tpu.vector_store %arg4[%c0_256, %c0_257, %c144], %322 {strides = array<i32>} : memref<1x8x256xf32, #tpu.memory_space<vmem>>, vector<1x8x16xf32>,
    %323 = vector.extract_strided_slice %282 {offsets = [0, 320], sizes = [8, 16], strides = [1, 1]} : vector<8x512xf32> to vector<8x16xf32>
    %c0_258 = arith.constant 0 : index
    %c0_259 = arith.constant 0 : index
    %c160 = arith.constant 160 : index
    %324 = vector.load %arg4[%c0_258, %c0_259, %c160] : memref<1x8x256xf32, #tpu.memory_space<vmem>>, vector<1x8x16xf32>
    %325 = vector.shape_cast %324 : vector<1x8x16xf32> to vector<8x16xf32>
    %326 = vector.shape_cast %323 : vector<8x16xf32> to vector<1x8x16xf32>
    tpu.vector_store %arg4[%c0_258, %c0_259, %c160], %326 {strides = array<i32>} : memref<1x8x256xf32, #tpu.memory_space<vmem>>, vector<1x8x16xf32>,
    %327 = vector.extract_strided_slice %282 {offsets = [0, 352], sizes = [8, 16], strides = [1, 1]} : vector<8x512xf32> to vector<8x16xf32>
    %c0_260 = arith.constant 0 : index
    %c0_261 = arith.constant 0 : index
    %c176 = arith.constant 176 : index
    %328 = vector.load %arg4[%c0_260, %c0_261, %c176] : memref<1x8x256xf32, #tpu.memory_space<vmem>>, vector<1x8x16xf32>
    %329 = vector.shape_cast %328 : vector<1x8x16xf32> to vector<8x16xf32>
    %330 = vector.shape_cast %327 : vector<8x16xf32> to vector<1x8x16xf32>
    tpu.vector_store %arg4[%c0_260, %c0_261, %c176], %330 {strides = array<i32>} : memref<1x8x256xf32, #tpu.memory_space<vmem>>, vector<1x8x16xf32>,
    %331 = vector.extract_strided_slice %282 {offsets = [0, 384], sizes = [8, 16], strides = [1, 1]} : vector<8x512xf32> to vector<8x16xf32>
    %c0_262 = arith.constant 0 : index
    %c0_263 = arith.constant 0 : index
    %c192 = arith.constant 192 : index
    %332 = vector.load %arg4[%c0_262, %c0_263, %c192] : memref<1x8x256xf32, #tpu.memory_space<vmem>>, vector<1x8x16xf32>
    %333 = vector.shape_cast %332 : vector<1x8x16xf32> to vector<8x16xf32>
    %334 = vector.shape_cast %331 : vector<8x16xf32> to vector<1x8x16xf32>
    tpu.vector_store %arg4[%c0_262, %c0_263, %c192], %334 {strides = array<i32>} : memref<1x8x256xf32, #tpu.memory_space<vmem>>, vector<1x8x16xf32>,
    %335 = vector.extract_strided_slice %282 {offsets = [0, 416], sizes = [8, 16], strides = [1, 1]} : vector<8x512xf32> to vector<8x16xf32>
    %c0_264 = arith.constant 0 : index
    %c0_265 = arith.constant 0 : index
    %c208 = arith.constant 208 : index
    %336 = vector.load %arg4[%c0_264, %c0_265, %c208] : memref<1x8x256xf32, #tpu.memory_space<vmem>>, vector<1x8x16xf32>
    %337 = vector.shape_cast %336 : vector<1x8x16xf32> to vector<8x16xf32>
    %338 = vector.shape_cast %335 : vector<8x16xf32> to vector<1x8x16xf32>
    tpu.vector_store %arg4[%c0_264, %c0_265, %c208], %338 {strides = array<i32>} : memref<1x8x256xf32, #tpu.memory_space<vmem>>, vector<1x8x16xf32>,
    %339 = vector.extract_strided_slice %282 {offsets = [0, 448], sizes = [8, 16], strides = [1, 1]} : vector<8x512xf32> to vector<8x16xf32>
    %c0_266 = arith.constant 0 : index
    %c0_267 = arith.constant 0 : index
    %c224 = arith.constant 224 : index
    %340 = vector.load %arg4[%c0_266, %c0_267, %c224] : memref<1x8x256xf32, #tpu.memory_space<vmem>>, vector<1x8x16xf32>
    %341 = vector.shape_cast %340 : vector<1x8x16xf32> to vector<8x16xf32>
    %342 = vector.shape_cast %339 : vector<8x16xf32> to vector<1x8x16xf32>
    tpu.vector_store %arg4[%c0_266, %c0_267, %c224], %342 {strides = array<i32>} : memref<1x8x256xf32, #tpu.memory_space<vmem>>, vector<1x8x16xf32>,
    %343 = vector.extract_strided_slice %282 {offsets = [0, 480], sizes = [8, 16], strides = [1, 1]} : vector<8x512xf32> to vector<8x16xf32>
    %c0_268 = arith.constant 0 : index
    %c0_269 = arith.constant 0 : index
    %c240 = arith.constant 240 : index
    %344 = vector.load %arg4[%c0_268, %c0_269, %c240] : memref<1x8x256xf32, #tpu.memory_space<vmem>>, vector<1x8x16xf32>
    %345 = vector.shape_cast %344 : vector<1x8x16xf32> to vector<8x16xf32>
    %346 = vector.shape_cast %343 : vector<8x16xf32> to vector<1x8x16xf32>
    tpu.vector_store %arg4[%c0_268, %c0_269, %c240], %346 {strides = array<i32>} : memref<1x8x256xf32, #tpu.memory_space<vmem>>, vector<1x8x16xf32>,
    %347 = vector.extract_strided_slice %281 {offsets = [0, 0], sizes = [8, 511], strides = [1, 1]} : vector<8x512xf32> to vector<8x511xf32>
    %348 = vector.extract_strided_slice %281 {offsets = [0, 1], sizes = [8, 511], strides = [1, 1]} : vector<8x512xf32> to vector<8x511xf32>
    %349 = arith.maximumf %347, %348 : vector<8x511xf32>
    %350 = vector.extract_strided_slice %349 {offsets = [0, 0], sizes = [8, 479], strides = [1, 1]} : vector<8x511xf32> to vector<8x479xf32>
    %351 = vector.extract_strided_slice %349 {offsets = [0, 32], sizes = [8, 479], strides = [1, 1]} : vector<8x511xf32> to vector<8x479xf32>
    %352 = arith.maximumf %350, %351 : vector<8x479xf32>
    %353 = vector.extract_strided_slice %352 {offsets = [0, 0], sizes = [8, 16], strides = [1, 1]} : vector<8x479xf32> to vector<8x16xf32>
    %cst_270 = arith.constant dense<0.000000e+00> : vector<8x8xf32>
    %354 = tpu.matmul %353, %39, %cst_270 {dimension_numbers = #tpu.dot_dimension_numbers<[1], [0], [0], [1], [0, 0, 1, 1], [], []>} : vector<8x16xf32>, vector<16x8xf32>, vector<8x8xf32> -> vector<8x8xf32>
    %c0_271 = arith.constant 0 : index
    %c0_272 = arith.constant 0 : index
    %c0_273 = arith.constant 0 : index
    %355 = vector.load %arg5[%c0_271, %c0_272, %c0_273] : memref<1x8x64xf32, #tpu.memory_space<vmem>>, vector<1x8x8xf32>
    %356 = vector.shape_cast %355 : vector<1x8x8xf32> to vector<8x8xf32>
    %357 = vector.shape_cast %354 : vector<8x8xf32> to vector<1x8x8xf32>
    tpu.vector_store %arg5[%c0_271, %c0_272, %c0_273], %357 {strides = array<i32>} : memref<1x8x64xf32, #tpu.memory_space<vmem>>, vector<1x8x8xf32>,
    %358 = vector.extract_strided_slice %352 {offsets = [0, 64], sizes = [8, 16], strides = [1, 1]} : vector<8x479xf32> to vector<8x16xf32>
    %cst_274 = arith.constant dense<0.000000e+00> : vector<8x8xf32>
    %359 = tpu.matmul %358, %39, %cst_274 {dimension_numbers = #tpu.dot_dimension_numbers<[1], [0], [0], [1], [0, 0, 1, 1], [], []>} : vector<8x16xf32>, vector<16x8xf32>, vector<8x8xf32> -> vector<8x8xf32>
    %c0_275 = arith.constant 0 : index
    %c0_276 = arith.constant 0 : index
    %c8_277 = arith.constant 8 : index
    %360 = vector.load %arg5[%c0_275, %c0_276, %c8_277] : memref<1x8x64xf32, #tpu.memory_space<vmem>>, vector<1x8x8xf32>
    %361 = vector.shape_cast %360 : vector<1x8x8xf32> to vector<8x8xf32>
    %362 = vector.shape_cast %359 : vector<8x8xf32> to vector<1x8x8xf32>
    tpu.vector_store %arg5[%c0_275, %c0_276, %c8_277], %362 {strides = array<i32>} : memref<1x8x64xf32, #tpu.memory_space<vmem>>, vector<1x8x8xf32>,
    %363 = vector.extract_strided_slice %352 {offsets = [0, 128], sizes = [8, 16], strides = [1, 1]} : vector<8x479xf32> to vector<8x16xf32>
    %cst_278 = arith.constant dense<0.000000e+00> : vector<8x8xf32>
    %364 = tpu.matmul %363, %39, %cst_278 {dimension_numbers = #tpu.dot_dimension_numbers<[1], [0], [0], [1], [0, 0, 1, 1], [], []>} : vector<8x16xf32>, vector<16x8xf32>, vector<8x8xf32> -> vector<8x8xf32>
    %c0_279 = arith.constant 0 : index
    %c0_280 = arith.constant 0 : index
    %c16_281 = arith.constant 16 : index
    %365 = vector.load %arg5[%c0_279, %c0_280, %c16_281] : memref<1x8x64xf32, #tpu.memory_space<vmem>>, vector<1x8x8xf32>
    %366 = vector.shape_cast %365 : vector<1x8x8xf32> to vector<8x8xf32>
    %367 = vector.shape_cast %364 : vector<8x8xf32> to vector<1x8x8xf32>
    tpu.vector_store %arg5[%c0_279, %c0_280, %c16_281], %367 {strides = array<i32>} : memref<1x8x64xf32, #tpu.memory_space<vmem>>, vector<1x8x8xf32>,
    %368 = vector.extract_strided_slice %352 {offsets = [0, 192], sizes = [8, 16], strides = [1, 1]} : vector<8x479xf32> to vector<8x16xf32>
    %cst_282 = arith.constant dense<0.000000e+00> : vector<8x8xf32>
    %369 = tpu.matmul %368, %39, %cst_282 {dimension_numbers = #tpu.dot_dimension_numbers<[1], [0], [0], [1], [0, 0, 1, 1], [], []>} : vector<8x16xf32>, vector<16x8xf32>, vector<8x8xf32> -> vector<8x8xf32>
    %c0_283 = arith.constant 0 : index
    %c0_284 = arith.constant 0 : index
    %c24_285 = arith.constant 24 : index
    %370 = vector.load %arg5[%c0_283, %c0_284, %c24_285] : memref<1x8x64xf32, #tpu.memory_space<vmem>>, vector<1x8x8xf32>
    %371 = vector.shape_cast %370 : vector<1x8x8xf32> to vector<8x8xf32>
    %372 = vector.shape_cast %369 : vector<8x8xf32> to vector<1x8x8xf32>
    tpu.vector_store %arg5[%c0_283, %c0_284, %c24_285], %372 {strides = array<i32>} : memref<1x8x64xf32, #tpu.memory_space<vmem>>, vector<1x8x8xf32>,
    %373 = vector.extract_strided_slice %352 {offsets = [0, 256], sizes = [8, 16], strides = [1, 1]} : vector<8x479xf32> to vector<8x16xf32>
    %cst_286 = arith.constant dense<0.000000e+00> : vector<8x8xf32>
    %374 = tpu.matmul %373, %39, %cst_286 {dimension_numbers = #tpu.dot_dimension_numbers<[1], [0], [0], [1], [0, 0, 1, 1], [], []>} : vector<8x16xf32>, vector<16x8xf32>, vector<8x8xf32> -> vector<8x8xf32>
    %c0_287 = arith.constant 0 : index
    %c0_288 = arith.constant 0 : index
    %c32_289 = arith.constant 32 : index
    %375 = vector.load %arg5[%c0_287, %c0_288, %c32_289] : memref<1x8x64xf32, #tpu.memory_space<vmem>>, vector<1x8x8xf32>
    %376 = vector.shape_cast %375 : vector<1x8x8xf32> to vector<8x8xf32>
    %377 = vector.shape_cast %374 : vector<8x8xf32> to vector<1x8x8xf32>
    tpu.vector_store %arg5[%c0_287, %c0_288, %c32_289], %377 {strides = array<i32>} : memref<1x8x64xf32, #tpu.memory_space<vmem>>, vector<1x8x8xf32>,
    %378 = vector.extract_strided_slice %352 {offsets = [0, 320], sizes = [8, 16], strides = [1, 1]} : vector<8x479xf32> to vector<8x16xf32>
    %cst_290 = arith.constant dense<0.000000e+00> : vector<8x8xf32>
    %379 = tpu.matmul %378, %39, %cst_290 {dimension_numbers = #tpu.dot_dimension_numbers<[1], [0], [0], [1], [0, 0, 1, 1], [], []>} : vector<8x16xf32>, vector<16x8xf32>, vector<8x8xf32> -> vector<8x8xf32>
    %c0_291 = arith.constant 0 : index
    %c0_292 = arith.constant 0 : index
    %c40_293 = arith.constant 40 : index
    %380 = vector.load %arg5[%c0_291, %c0_292, %c40_293] : memref<1x8x64xf32, #tpu.memory_space<vmem>>, vector<1x8x8xf32>
    %381 = vector.shape_cast %380 : vector<1x8x8xf32> to vector<8x8xf32>
    %382 = vector.shape_cast %379 : vector<8x8xf32> to vector<1x8x8xf32>
    tpu.vector_store %arg5[%c0_291, %c0_292, %c40_293], %382 {strides = array<i32>} : memref<1x8x64xf32, #tpu.memory_space<vmem>>, vector<1x8x8xf32>,
    %383 = vector.extract_strided_slice %352 {offsets = [0, 384], sizes = [8, 16], strides = [1, 1]} : vector<8x479xf32> to vector<8x16xf32>
    %cst_294 = arith.constant dense<0.000000e+00> : vector<8x8xf32>
    %384 = tpu.matmul %383, %39, %cst_294 {dimension_numbers = #tpu.dot_dimension_numbers<[1], [0], [0], [1], [0, 0, 1, 1], [], []>} : vector<8x16xf32>, vector<16x8xf32>, vector<8x8xf32> -> vector<8x8xf32>
    %c0_295 = arith.constant 0 : index
    %c0_296 = arith.constant 0 : index
    %c48_297 = arith.constant 48 : index
    %385 = vector.load %arg5[%c0_295, %c0_296, %c48_297] : memref<1x8x64xf32, #tpu.memory_space<vmem>>, vector<1x8x8xf32>
    %386 = vector.shape_cast %385 : vector<1x8x8xf32> to vector<8x8xf32>
    %387 = vector.shape_cast %384 : vector<8x8xf32> to vector<1x8x8xf32>
    tpu.vector_store %arg5[%c0_295, %c0_296, %c48_297], %387 {strides = array<i32>} : memref<1x8x64xf32, #tpu.memory_space<vmem>>, vector<1x8x8xf32>,
    %388 = vector.extract_strided_slice %352 {offsets = [0, 448], sizes = [8, 16], strides = [1, 1]} : vector<8x479xf32> to vector<8x16xf32>
    %cst_298 = arith.constant dense<0.000000e+00> : vector<8x8xf32>
    %389 = tpu.matmul %388, %39, %cst_298 {dimension_numbers = #tpu.dot_dimension_numbers<[1], [0], [0], [1], [0, 0, 1, 1], [], []>} : vector<8x16xf32>, vector<16x8xf32>, vector<8x8xf32> -> vector<8x8xf32>
    %c0_299 = arith.constant 0 : index
    %c0_300 = arith.constant 0 : index
    %c56_301 = arith.constant 56 : index
    %390 = vector.load %arg5[%c0_299, %c0_300, %c56_301] : memref<1x8x64xf32, #tpu.memory_space<vmem>>, vector<1x8x8xf32>
    %391 = vector.shape_cast %390 : vector<1x8x8xf32> to vector<8x8xf32>
    %392 = vector.shape_cast %389 : vector<8x8xf32> to vector<1x8x8xf32>
    tpu.vector_store %arg5[%c0_299, %c0_300, %c56_301], %392 {strides = array<i32>} : memref<1x8x64xf32, #tpu.memory_space<vmem>>, vector<1x8x8xf32>,
    return
  }
  func.func @transform_0(%arg0: i32) -> (i32, i32, i32) {
    %c0_i32 = arith.constant 0 : i32
    %c0_i32_0 = arith.constant 0 : i32
    %c0_i32_1 = arith.constant 0 : i32
    return %arg0, %c0_i32, %c0_i32_0 : i32, i32, i32
  }
  func.func @transform_1(%arg0: i32) -> (i32, i32, i32) {
    %c0_i32 = arith.constant 0 : i32
    %c0_i32_0 = arith.constant 0 : i32
    %c0_i32_1 = arith.constant 0 : i32
    %c0_i32_2 = arith.constant 0 : i32
    return %c0_i32, %c0_i32_0, %c0_i32_1 : i32, i32, i32
  }
  func.func @transform_2(%arg0: i32) -> (i32, i32, i32) {
    %c0_i32 = arith.constant 0 : i32
    %c0_i32_0 = arith.constant 0 : i32
    %c0_i32_1 = arith.constant 0 : i32
    %c0_i32_2 = arith.constant 0 : i32
    return %c0_i32, %c0_i32_0, %c0_i32_1 : i32, i32, i32
  }
  func.func @transform_3(%arg0: i32) -> (i32, i32, i32) {
    %c0_i32 = arith.constant 0 : i32
    %c0_i32_0 = arith.constant 0 : i32
    %c0_i32_1 = arith.constant 0 : i32
    return %arg0, %c0_i32, %c0_i32_0 : i32, i32, i32
  }
  func.func @transform_4(%arg0: i32) -> (i32, i32, i32) {
    %c0_i32 = arith.constant 0 : i32
    %c0_i32_0 = arith.constant 0 : i32
    %c0_i32_1 = arith.constant 0 : i32
    return %arg0, %c0_i32, %c0_i32_0 : i32, i32, i32
  }
}

</mosaic_0001>

<llo_original>
// kernel: tpu_custom_call.1
$region0: #{tpu_custom_call.1}
  #allocation0 [shape = 'u32[]', space=smem, size = 0x4, offset = 0x4, fixed_abs, tag = 'smem constant byte address 0x4 - core index']
  #allocation1 [shape = 'u32[144,128]{1,0:T(1,128)}', space=vmem, size = 0x12000, scoped, tag = 'internal scratch']
  #allocation2 [shape = 'f32[72,704]{1,0:T(8,128)}', space=vmem, size = 0x36000, scoped, tag = 'scratch operand']
  #allocation3 [shape = 'f32[4,8,896]{2,1,0:T(8,128)}', space=vmem, size = 0x1c000, scoped, tag = 'scratch operand']
  %s0 = inlined_call_operand.hbm [shape: f32[2,8,896], index: 0, kind: input, shape index: {}]
  %s1 = inlined_call_operand.vmem [shape: f32[6,8,72], index: 1, kind: input, shape index: {}]
  %s2 = inlined_call_operand.vmem [shape: f32[6,8,1], index: 2, kind: input, shape index: {}]
  %s3 = inlined_call_operand.hbm [shape: f32[2,8,256], index: 3, kind: output, shape index: {0}]
  %s4 = inlined_call_operand.hbm [shape: f32[2,8,64], index: 4, kind: output, shape index: {1}]
  %5 = xla_tuple %s3, %s4
  %s6 = sld [smem:[#allocation0]]
  $region57: #{tpu_custom_call.1} parent=0
    _
  %s8 = ssub.s32 1, %s6
  %s9 = scalar_select 0, %s8, %s6
  $region1: #{tpu_custom_call.1} parent=0
    #allocation4 [shape = 'u8[57344]{0}', space=vmem, size = 0xe000, scoped, tag = 'input window, operand 0']
    #allocation5 [shape = 's32[2]{0}', space=sflag, size = 0x8, scoped, tag = 'scoped memory for tpu_custom_call.1']
    #allocation6 [shape = 's32[2]{0}', space=sflag, size = 0x8, scoped, tag = 'scoped memory for tpu_custom_call.1']
    #allocation7 [shape = 'u8[16384]{0}', space=vmem, size = 0x4000, scoped, tag = 'output window, operand 0']
    #allocation8 [shape = 'u8[8192]{0}', space=vmem, size = 0x2000, scoped, tag = 'output window, operand 1']
    #allocation9 [shape = 's32[2]{0}', space=sflag, size = 0x8, scoped, tag = 'scoped memory for tpu_custom_call.1']
    %10 = vsyncpa [#allocation5], 0
    %s11 = scalar_lea.sflag [#allocation5], 1
    %12 = vsyncpa %s11, 0
    %13 = vsyncpa [#allocation6], 0
    %s14 = scalar_lea.sflag [#allocation6], 1
    %15 = vsyncpa %s14, 0
    %16 = vsyncpa [#allocation9], 0
    %s17 = scalar_lea.sflag [#allocation9], 1
    %18 = vsyncpa %s17, 0
    loop: start=0, step=1, limit=4
    $region2: #{tpu_custom_call.1} parent=1 // loop_pre_header
      _
    $region3: #{tpu_custom_call.1} parent=1 // loop_header
      %s20 = sphi 0, %s24
      %p21 = scmp.ge.s32.totalorder %s20, 4
      %s30 = sphi 0, %s32
      %s33 = sphi 0, %s30
      %s34 = sphi 0, %s33
      %s50 = sphi 0, %s34
      %s54 = sphi 0, %s54
      %s56 = sphi 0, %s54
      %s57 = sphi 0, %s56
      %s71 = sphi 0, %s57
      %s75 = sphi 0, %s75
      %s77 = sphi 0, %s75
      %s78 = sphi 0, %s77
      %s92 = sphi 0, %s78
      %s98 = sphi 0, %s100
      %s101 = sphi 0, %s98
      %s102 = sphi 0, %s101
      %s118 = sphi 0, %s102
      %s124 = sphi 0, %s126
      %s127 = sphi 0, %s124
      %s128 = sphi 0, %s127
      %s144 = sphi 0, %s128
    $region4: #{tpu_custom_call.1} parent=1 // loop_header_branch
      %23 = sbr.rel (%p21) target = $region8
    $region5: #{tpu_custom_call.1} parent=1 // loop_body
      %s25 = ssub.s32 %s20, 1
      %s26 = ssub.s32 %s20, 2
      %s27 = sadd.s32 %s20, 1
      %s28 = ssub.s32 %s20, %s27
      %p29 = scmp.eq.s32.totalorder %s28, 0
      %s31 = sadd.s32 %s30, 1
      %s32 = scalar_select %p29, %s30, %s31
      %p35 = pneg %p29
      %p36 = scmp.eq.s32.totalorder %s20, 1
      %p37 = por %p35, %p36
      %p38 = scmp.ne.s32.totalorder %s30, %s33
      %p39 = scmp.eq.s32.totalorder %s20, 0
      %p40 = por %p38, %p39
      %p41 = scmp.ne.s32.totalorder %s30, %s33
      %p42 = scmp.eq.s32.totalorder %s25, 1
      %p43 = por %p41, %p42
      %p44 = scmp.ne.s32.totalorder %s33, %s34
      %p45 = scmp.eq.s32.totalorder %s25, 0
      %p46 = por %p44, %p45
      %p47 = scmp.ne.s32.totalorder %s33, %s34
      %p48 = scmp.eq.s32.totalorder %s26, 1
      %p49 = por %p47, %p48
      %p51 = scmp.ne.s32.totalorder %s34, %s50
      %p52 = scmp.eq.s32.totalorder %s26, 0
      %p53 = por %p51, %p52
      %s55 = sadd.s32 %s54, 1
      %p58 = scmp.eq.s32.totalorder %s20, 1
      %p59 = scmp.ne.s32.totalorder %s54, %s56
      %p60 = scmp.eq.s32.totalorder %s20, 0
      %p61 = por %p59, %p60
      %p62 = scmp.ne.s32.totalorder %s54, %s56
      %p63 = scmp.eq.s32.totalorder %s25, 1
      %p64 = por %p62, %p63
      %p65 = scmp.ne.s32.totalorder %s56, %s57
      %p66 = scmp.eq.s32.totalorder %s25, 0
      %p67 = por %p65, %p66
      %p68 = scmp.ne.s32.totalorder %s56, %s57
      %p69 = scmp.eq.s32.totalorder %s26, 1
      %p70 = por %p68, %p69
      %p72 = scmp.ne.s32.totalorder %s57, %s71
      %p73 = scmp.eq.s32.totalorder %s26, 0
      %p74 = por %p72, %p73
      %s76 = sadd.s32 %s75, 1
      %p79 = scmp.eq.s32.totalorder %s20, 1
      %p80 = scmp.ne.s32.totalorder %s75, %s77
      %p81 = scmp.eq.s32.totalorder %s20, 0
      %p82 = por %p80, %p81
      %p83 = scmp.ne.s32.totalorder %s75, %s77
      %p84 = scmp.eq.s32.totalorder %s25, 1
      %p85 = por %p83, %p84
      %p86 = scmp.ne.s32.totalorder %s77, %s78
      %p87 = scmp.eq.s32.totalorder %s25, 0
      %p88 = por %p86, %p87
      %p89 = scmp.ne.s32.totalorder %s77, %s78
      %p90 = scmp.eq.s32.totalorder %s26, 1
      %p91 = por %p89, %p90
      %p93 = scmp.ne.s32.totalorder %s78, %s92
      %p94 = scmp.eq.s32.totalorder %s26, 0
      %p95 = por %p93, %p94
      %s96 = ssub.s32 %s20, %s27
      %p97 = scmp.eq.s32.totalorder %s96, 0
      %s99 = sadd.s32 %s98, 1
      %s100 = scalar_select %p97, %s98, %s99
      %p103 = pneg %p97
      %p104 = scmp.eq.s32.totalorder %s20, 1
      %p105 = por %p103, %p104
      %p106 = scmp.ne.s32.totalorder %s98, %s101
      %p107 = scmp.eq.s32.totalorder %s20, 0
      %p108 = por %p106, %p107
      %p109 = scmp.ne.s32.totalorder %s98, %s101
      %p110 = scmp.eq.s32.totalorder %s25, 1
      %p111 = por %p109, %p110
      %p112 = scmp.ne.s32.totalorder %s101, %s102
      %p113 = scmp.eq.s32.totalorder %s25, 0
      %p114 = por %p112, %p113
      %p115 = scmp.ne.s32.totalorder %s101, %s102
      %p116 = scmp.eq.s32.totalorder %s26, 1
      %p117 = por %p115, %p116
      %p119 = scmp.ne.s32.totalorder %s102, %s118
      %p120 = scmp.eq.s32.totalorder %s26, 0
      %p121 = por %p119, %p120
      %s122 = ssub.s32 %s20, %s27
      %p123 = scmp.eq.s32.totalorder %s122, 0
      %s125 = sadd.s32 %s124, 1
      %s126 = scalar_select %p123, %s124, %s125
      %p129 = pneg %p123
      %p130 = scmp.eq.s32.totalorder %s20, 1
      %p131 = por %p129, %p130
      %p132 = scmp.ne.s32.totalorder %s124, %s127
      %p133 = scmp.eq.s32.totalorder %s20, 0
      %p134 = por %p132, %p133
      %p135 = scmp.ne.s32.totalorder %s124, %s127
      %p136 = scmp.eq.s32.totalorder %s25, 1
      %p137 = por %p135, %p136
      %p138 = scmp.ne.s32.totalorder %s127, %s128
      %p139 = scmp.eq.s32.totalorder %s25, 0
      %p140 = por %p138, %p139
      %p141 = scmp.ne.s32.totalorder %s127, %s128
      %p142 = scmp.eq.s32.totalorder %s26, 1
      %p143 = por %p141, %p142
      %p145 = scmp.ne.s32.totalorder %s128, %s144
      %p146 = scmp.eq.s32.totalorder %s26, 0
      %p147 = por %p145, %p146
      %p148 = scmp.le.s32.totalorder 1, %s20
      %p149 = scmp.lt.s32.totalorder %s20, 3
      %p150 = pnand %p148, %p149
      %p151 = pneg %p150
      // Predicated region
      $region9: #{tpu_custom_call.1} parent=5 // pred_check
        _
      $region10: #{tpu_custom_call.1} parent=5 // pred_check_branch
        %153 = sbr.rel (%p150) target = $region12
      $region11: #{tpu_custom_call.1} parent=5 // pred_region
        %s154 = ssub.s32 %s20, 1
        // Predicated region
        $region13: #{tpu_custom_call.1} parent=11 // pred_check
          %p155 = pneg %p67
        $region14: #{tpu_custom_call.1} parent=11 // pred_check_branch
          %157 = sbr.rel (%p155) target = $region16
        $region15: #{tpu_custom_call.1} parent=11 // pred_region
          _
        $region16: #{tpu_custom_call.1} parent=11 // pred_fallthru
          _
        // Predicated region
        $region17: #{tpu_custom_call.1} parent=11 // pred_check
          %p158 = pneg %p88
        $region18: #{tpu_custom_call.1} parent=11 // pred_check_branch
          %160 = sbr.rel (%p158) target = $region20
        $region19: #{tpu_custom_call.1} parent=11 // pred_region
          _
        $region20: #{tpu_custom_call.1} parent=11 // pred_fallthru
          _
      $region12: #{tpu_custom_call.1} parent=5 // pred_fallthru
        _
      %p161 = scmp.lt.s32.totalorder %s20, 2
      // Predicated region
      $region21: #{tpu_custom_call.1} parent=5 // pred_check
        %p162 = pneg %p161
      $region22: #{tpu_custom_call.1} parent=5 // pred_check_branch
        %164 = sbr.rel (%p162) target = $region24
      $region23: #{tpu_custom_call.1} parent=5 // pred_region
        // Predicated region
        $region25: #{tpu_custom_call.1} parent=23 // pred_check
          %p165 = pneg %p40
        $region26: #{tpu_custom_call.1} parent=23 // pred_check_branch
          %167 = sbr.rel (%p165) target = $region28
        $region27: #{tpu_custom_call.1} parent=23 // pred_region
          %s168 = sand.u32 %s30, 1
          %s169 = scalar_lea.sflag [#allocation5], %s168
          %s170 = sand.u32 %s30, 1
          %s171 = smul.addr %s170, 56
          %s172 = scalar_lea.vmem [#allocation4], %s171
          %s174 = ssub.s32 896, 896
          %175 = vsyncadd %s169, %s174
          %s176 = smul.addr %s20, 7
          %s177 = smul.addr %s176, 128
          %s178 = scalar_lea.hbm %s0, %s177
          %s180 = sshll.u32 %s172, 4
          %s181 = int_to_ptr.vmem [resolvable:$true] %s180
          %183 = dma.hbm_to_vmem [thread:$0]  %s178, 896, %s181, %s169
        $region28: #{tpu_custom_call.1} parent=23 // pred_fallthru
          _
      $region24: #{tpu_custom_call.1} parent=5 // pred_fallthru
        _
      %p184 = scmp.le.s32.totalorder 1, %s20
      %p185 = scmp.lt.s32.totalorder %s20, 3
      %p186 = pnand %p184, %p185
      %p187 = pneg %p186
      // Predicated region
      $region29: #{tpu_custom_call.1} parent=5 // pred_check
        _
      $region30: #{tpu_custom_call.1} parent=5 // pred_check_branch
        %189 = sbr.rel (%p186) target = $region32
      $region31: #{tpu_custom_call.1} parent=5 // pred_region
        %s190 = ssub.s32 %s20, 1
        %s191 = sand.u32 %s33, 1
        %s192 = scalar_lea.sflag [#allocation5], %s191
        %s193 = sand.u32 %s33, 1
        %s194 = smul.addr %s193, 56
        %s195 = scalar_lea.vmem [#allocation4], %s194
        // Predicated region
        $region33: #{tpu_custom_call.1} parent=31 // pred_check
          %p196 = pneg %p46
        $region34: #{tpu_custom_call.1} parent=31 // pred_check_branch
          %198 = sbr.rel (%p196) target = $region36
        $region35: #{tpu_custom_call.1} parent=31 // pred_region
          %199 = dma.done %s192, 896
        $region36: #{tpu_custom_call.1} parent=31 // pred_fallthru
          _
        %s200 = sand.u32 %s33, 1
        %s201 = scalar_lea.sflag [#allocation5], %s200
        %s202 = sand.u32 %s33, 1
        %s203 = smul.addr %s202, 56
        %s204 = scalar_lea.vmem [#allocation4], %s203
        %p205 = pneg %p46
        %p206 = pneg %p43
        %p207 = pneg %p67
        %p208 = pneg %p64
        %p209 = pneg %p88
        %p210 = pneg %p85
        %p211 = pneg %p114
        %p212 = pneg %p111
        %s213 = sand.u32 %s101, 1
        %s214 = scalar_lea.sflag [#allocation6], %s213
        %s215 = sand.u32 %s101, 1
        %s216 = smul.addr %s215, 16
        %s217 = scalar_lea.vmem [#allocation7], %s216
        %p218 = pneg %p140
        %p219 = pneg %p137
        %s220 = sand.u32 %s127, 1
        %s221 = scalar_lea.sflag [#allocation9], %s220
        %s222 = sand.u32 %s127, 1
        %s223 = smul.addr %s222, 8
        %s224 = scalar_lea.vmem [#allocation8], %s223
        %225 = vst [vmem:[#allocation3] sm:$0xff] 0.0
        %s226 = scalar_lea.vmem [#allocation3], 56
        %227 = vst [vmem:[%s226] sm:$0xff] 0.0
        %s228 = scalar_lea.vmem [#allocation3], 112
        %229 = vst [vmem:[%s228] sm:$0xff] 0.0
        %s230 = scalar_lea.vmem [#allocation3], 168
        %231 = vst [vmem:[%s230] sm:$0xff] 0.0
        %v232 = vlaneseq
        %v233 = vand.u32 %v232, 127
        %v234 = vadd.s32 %v233, 128
        %v235 = vadd.s32 %v233, 256
        %v236 = vadd.s32 %v233, 384
        %v237 = vadd.s32 %v233, 512
        %v238 = vadd.s32 %v233, 640
        %vm239 = vcmp.lt.s32.totalorder %v233, 0
        %v240 = vsub.s32 0, %v233
        %v241 = vsel %vm239, %v240, %v233
        %v242 = vshrl.u32 %v241, 5
        %v243 = vand.u32 %v241, 31
        %v244 = vsub.s32 0, %v243
        %v245 = vsel %vm239, %v244, %v243
        %vm246 = vcmp.lt.s32.totalorder %v234, 0
        %v247 = vsub.s32 0, %v234
        %v248 = vsel %vm246, %v247, %v234
        %v249 = vshrl.u32 %v248, 5
        %v250 = vand.u32 %v248, 31
        %v251 = vsub.s32 0, %v250
        %v252 = vsel %vm246, %v251, %v250
        %vm253 = vcmp.lt.s32.totalorder %v235, 0
        %v254 = vsub.s32 0, %v235
        %v255 = vsel %vm253, %v254, %v235
        %v256 = vshrl.u32 %v255, 5
        %v257 = vand.u32 %v255, 31
        %v258 = vsub.s32 0, %v257
        %v259 = vsel %vm253, %v258, %v257
        %vm260 = vcmp.lt.s32.totalorder %v236, 0
        %v261 = vsub.s32 0, %v236
        %v262 = vsel %vm260, %v261, %v236
        %v263 = vshrl.u32 %v262, 5
        %v264 = vand.u32 %v262, 31
        %v265 = vsub.s32 0, %v264
        %v266 = vsel %vm260, %v265, %v264
        %vm267 = vcmp.lt.s32.totalorder %v237, 0
        %v268 = vsub.s32 0, %v237
        %v269 = vsel %vm267, %v268, %v237
        %v270 = vshrl.u32 %v269, 5
        %v271 = vand.u32 %v269, 31
        %v272 = vsub.s32 0, %v271
        %v273 = vsel %vm267, %v272, %v271
        %vm274 = vcmp.lt.s32.totalorder %v238, 0
        %v275 = vsub.s32 0, %v238
        %v276 = vsel %vm274, %v275, %v238
        %v277 = vshrl.u32 %v276, 5
        %v278 = vand.u32 %v276, 31
        %v279 = vsub.s32 0, %v278
        %v280 = vsel %vm274, %v279, %v278
        %vm281 = vcmp.ne.s32.totalorder %v245, 0
        %vm282 = vcmp.ne.s32.totalorder %v252, 0
        %vm283 = vcmp.ne.s32.totalorder %v259, 0
        %vm284 = vcmp.ne.s32.totalorder %v266, 0
        %vm285 = vcmp.ne.s32.totalorder %v273, 0
        %vm286 = vcmp.ne.s32.totalorder %v280, 0
        %vm287 = vcmp.lt.s32.totalorder %v245, 0
        %vm288 = vcmp.lt.s32.totalorder %v252, 0
        %vm289 = vcmp.lt.s32.totalorder %v259, 0
        %vm290 = vcmp.lt.s32.totalorder %v266, 0
        %vm291 = vcmp.lt.s32.totalorder %v273, 0
        %vm292 = vcmp.lt.s32.totalorder %v280, 0
        %vm293 = vmand %vm287, %vm281
        %vm294 = vmand %vm288, %vm282
        %vm295 = vmand %vm289, %vm283
        %vm296 = vmand %vm290, %vm284
        %vm297 = vmand %vm291, %vm285
        %vm298 = vmand %vm292, %vm286
        %v299 = vadd.s32 %v245, 32
        %v300 = vadd.s32 %v252, 32
        %v301 = vadd.s32 %v259, 32
        %v302 = vadd.s32 %v266, 32
        %v303 = vadd.s32 %v273, 32
        %v304 = vadd.s32 %v280, 32
        %v305 = vsel %vm293, %v299, %v245
        %v306 = vsel %vm294, %v300, %v252
        %v307 = vsel %vm295, %v301, %v259
        %v308 = vsel %vm296, %v302, %v266
        %v309 = vsel %vm297, %v303, %v273
        %v310 = vsel %vm298, %v304, %v280
        %v311 = vlaneseq
        %v312 = vshrl.u32 %v311, 7
        %v313 = vadd.s32 %v312, 8
        %v314 = vmul.u32 %v233, 2
        %vm315 = vcmp.eq.s32.totalorder %v312, %v314
        %vm316 = vcmp.eq.s32.totalorder %v313, %v314
        %v317 = vsel %vm315, 1, 0
        %v318 = vsel %vm316, 1, 0
        %v319 = vcvt.s32.f32 %v317
        %v320 = vcvt.s32.f32 %v318
        %v321 = vld [vmem:[%s195] sm:$0xff]
        %v322 = vld [vmem:[%s195 + $0x8] sm:$0xff]
        %v323 = vld [vmem:[%s195 + $0x10] sm:$0xff]
        %v324 = vld [vmem:[%s195 + $0x18] sm:$0xff]
        %v325 = vld [vmem:[%s195 + $0x20] sm:$0xff]
        %v326 = vld [vmem:[%s195 + $0x28] sm:$0xff]
        %332 = vrot.lane.b32.xlu0 %v321, 33
        %v333 = vpop.permute.xlu0 %332
        %334 = vrot.lane.b32.xlu0 %v322, 33
        %v335 = vpop.permute.xlu0 %334
        %336 = vrot.lane.b32.xlu0 %v323, 33
        %v337 = vpop.permute.xlu0 %336
        %338 = vrot.lane.b32.xlu0 %v324, 33
        %v339 = vpop.permute.xlu0 %338
        %340 = vrot.lane.b32.xlu0 %v325, 33
        %v341 = vpop.permute.xlu0 %340
        %vm342 = vcmask 269312
        %v343 = vsel %vm342, %v333, %v335
        %v344 = vsel %vm342, %v335, %v337
        %v345 = vsel %vm342, %v337, %v339
        %v346 = vsel %vm342, %v339, %v341
        %351 = vst [vmem:[#allocation2] sm:$0xff] %v343
        %352 = vst [vmem:[#allocation2 + $0x8] sm:$0xff] %v344
        %353 = vst [vmem:[#allocation2 + $0x10] sm:$0xff] %v345
        %354 = vst [vmem:[#allocation2 + $0x18] sm:$0xff] %v346
        %355 = vrot.lane.b32.xlu0 %v321, 32
        %v356 = vpop.permute.xlu0 %355
        %357 = vrot.lane.b32.xlu0 %v322, 32
        %v358 = vpop.permute.xlu0 %357
        %359 = vrot.lane.b32.xlu0 %v323, 32
        %v360 = vpop.permute.xlu0 %359
        %361 = vrot.lane.b32.xlu0 %v324, 32
        %v362 = vpop.permute.xlu0 %361
        %363 = vrot.lane.b32.xlu0 %v325, 32
        %v364 = vpop.permute.xlu0 %363
        %vm365 = vcmask 261120
        %v366 = vsel %vm365, %v356, %v358
        %v367 = vsel %vm365, %v358, %v360
        %v368 = vsel %vm365, %v360, %v362
        %v369 = vsel %vm365, %v362, %v364
        %374 = vst [vmem:[#allocation2 + $0x30] sm:$0xff] %v366
        %375 = vst [vmem:[#allocation2 + $0x38] sm:$0xff] %v367
        %376 = vst [vmem:[#allocation2 + $0x40] sm:$0xff] %v368
        %377 = vst [vmem:[#allocation2 + $0x48] sm:$0xff] %v369
        %378 = vrot.lane.b32.xlu0 %v321, 31
        %v379 = vpop.permute.xlu0 %378
        %380 = vrot.lane.b32.xlu0 %v322, 31
        %v381 = vpop.permute.xlu0 %380
        %382 = vrot.lane.b32.xlu0 %v323, 31
        %v383 = vpop.permute.xlu0 %382
        %384 = vrot.lane.b32.xlu0 %v324, 31
        %v385 = vpop.permute.xlu0 %384
        %386 = vrot.lane.b32.xlu0 %v325, 31
        %v387 = vpop.permute.xlu0 %386
        %vm388 = vcmask 252928
        %v389 = vsel %vm388, %v379, %v381
        %v390 = vsel %vm388, %v381, %v383
        %v391 = vsel %vm388, %v383, %v385
        %v392 = vsel %vm388, %v385, %v387
        %397 = vst [vmem:[#allocation2 + $0x60] sm:$0xff] %v389
        %398 = vst [vmem:[#allocation2 + $0x68] sm:$0xff] %v390
        %399 = vst [vmem:[#allocation2 + $0x70] sm:$0xff] %v391
        %400 = vst [vmem:[#allocation2 + $0x78] sm:$0xff] %v392
        %401 = vrot.lane.b32.xlu0 %v321, 1
        %v402 = vpop.permute.xlu0 %401
        %403 = vrot.lane.b32.xlu0 %v322, 1
        %v404 = vpop.permute.xlu0 %403
        %405 = vrot.lane.b32.xlu0 %v323, 1
        %v406 = vpop.permute.xlu0 %405
        %407 = vrot.lane.b32.xlu0 %v324, 1
        %v408 = vpop.permute.xlu0 %407
        %409 = vrot.lane.b32.xlu0 %v325, 1
        %v410 = vpop.permute.xlu0 %409
        %vm411 = vcmask 7168
        %v412 = vsel %vm411, %v402, %v404
        %v413 = vsel %vm411, %v404, %v406
        %v414 = vsel %vm411, %v406, %v408
        %v415 = vsel %vm411, %v408, %v410
        %420 = vst [vmem:[#allocation2 + $0x90] sm:$0xff] %v412
        %421 = vst [vmem:[#allocation2 + $0x98] sm:$0xff] %v413
        %422 = vst [vmem:[#allocation2 + $0xa0] sm:$0xff] %v414
        %423 = vst [vmem:[#allocation2 + $0xa8] sm:$0xff] %v415
        %424 = vst [vmem:[#allocation2 + $0xc0] sm:$0xff] %v322
        %425 = vst [vmem:[#allocation2 + $0xc8] sm:$0xff] %v323
        %426 = vst [vmem:[#allocation2 + $0xd0] sm:$0xff] %v324
        %427 = vst [vmem:[#allocation2 + $0xd8] sm:$0xff] %v325
        %429 = vrot.lane.b32.xlu0 %v322, 127
        %v430 = vpop.permute.xlu0 %429
        %431 = vrot.lane.b32.xlu0 %v323, 127
        %v432 = vpop.permute.xlu0 %431
        %433 = vrot.lane.b32.xlu0 %v324, 127
        %v434 = vpop.permute.xlu0 %433
        %435 = vrot.lane.b32.xlu0 %v325, 127
        %v436 = vpop.permute.xlu0 %435
        %437 = vrot.lane.b32.xlu0 %v326, 127
        %v438 = vpop.permute.xlu0 %437
        %vm439 = vcmask 1039360
        %v440 = vsel %vm439, %v430, %v432
        %v441 = vsel %vm439, %v432, %v434
        %v442 = vsel %vm439, %v434, %v436
        %v443 = vsel %vm439, %v436, %v438
        %448 = vst [vmem:[#allocation2 + $0xf0] sm:$0xff] %v440
        %449 = vst [vmem:[#allocation2 + $0xf8] sm:$0xff] %v441
        %450 = vst [vmem:[#allocation2 + $0x100] sm:$0xff] %v442
        %451 = vst [vmem:[#allocation2 + $0x108] sm:$0xff] %v443
        %452 = vrot.lane.b32.xlu0 %v322, 97
        %v453 = vpop.permute.xlu0 %452
        %454 = vrot.lane.b32.xlu0 %v323, 97
        %v455 = vpop.permute.xlu0 %454
        %456 = vrot.lane.b32.xlu0 %v324, 97
        %v457 = vpop.permute.xlu0 %456
        %458 = vrot.lane.b32.xlu0 %v325, 97
        %v459 = vpop.permute.xlu0 %458
        %460 = vrot.lane.b32.xlu0 %v326, 97
        %v461 = vpop.permute.xlu0 %460
        %vm462 = vcmask 793600
        %v463 = vsel %vm462, %v453, %v455
        %v464 = vsel %vm462, %v455, %v457
        %v465 = vsel %vm462, %v457, %v459
        %v466 = vsel %vm462, %v459, %v461
        %471 = vst [vmem:[#allocation2 + $0x120] sm:$0xff] %v463
        %472 = vst [vmem:[#allocation2 + $0x128] sm:$0xff] %v464
        %473 = vst [vmem:[#allocation2 + $0x130] sm:$0xff] %v465
        %474 = vst [vmem:[#allocation2 + $0x138] sm:$0xff] %v466
        %475 = vrot.lane.b32.xlu0 %v322, 96
        %v476 = vpop.permute.xlu0 %475
        %477 = vrot.lane.b32.xlu0 %v323, 96
        %v478 = vpop.permute.xlu0 %477
        %479 = vrot.lane.b32.xlu0 %v324, 96
        %v480 = vpop.permute.xlu0 %479
        %481 = vrot.lane.b32.xlu0 %v325, 96
        %v482 = vpop.permute.xlu0 %481
        %483 = vrot.lane.b32.xlu0 %v326, 96
        %v484 = vpop.permute.xlu0 %483
        %vm485 = vcmask 785408
        %v486 = vsel %vm485, %v476, %v478
        %v487 = vsel %vm485, %v478, %v480
        %v488 = vsel %vm485, %v480, %v482
        %v489 = vsel %vm485, %v482, %v484
        %494 = vst [vmem:[#allocation2 + $0x150] sm:$0xff] %v486
        %495 = vst [vmem:[#allocation2 + $0x158] sm:$0xff] %v487
        %496 = vst [vmem:[#allocation2 + $0x160] sm:$0xff] %v488
        %497 = vst [vmem:[#allocation2 + $0x168] sm:$0xff] %v489
        %498 = vrot.lane.b32.xlu0 %v322, 95
        %v499 = vpop.permute.xlu0 %498
        %500 = vrot.lane.b32.xlu0 %v323, 95
        %v501 = vpop.permute.xlu0 %500
        %502 = vrot.lane.b32.xlu0 %v324, 95
        %v503 = vpop.permute.xlu0 %502
        %504 = vrot.lane.b32.xlu0 %v325, 95
        %v505 = vpop.permute.xlu0 %504
        %506 = vrot.lane.b32.xlu0 %v326, 95
        %v507 = vpop.permute.xlu0 %506
        %vm508 = vcmask 777216
        %v509 = vsel %vm508, %v499, %v501
        %v510 = vsel %vm508, %v501, %v503
        %v511 = vsel %vm508, %v503, %v505
        %v512 = vsel %vm508, %v505, %v507
        %517 = vst [vmem:[#allocation2 + $0x180] sm:$0xff] %v509
        %518 = vst [vmem:[#allocation2 + $0x188] sm:$0xff] %v510
        %519 = vst [vmem:[#allocation2 + $0x190] sm:$0xff] %v511
        %520 = vst [vmem:[#allocation2 + $0x198] sm:$0xff] %v512
        %v521 = vld [vmem:[%s1] sm:$0xff]
        %v522 = vld [vmem:[#allocation2] sm:$0xff]
        %v523 = vld [vmem:[#allocation2 + $0x8] sm:$0xff]
        %v524 = vld [vmem:[#allocation2 + $0x10] sm:$0xff]
        %v525 = vld [vmem:[#allocation2 + $0x18] sm:$0xff]
        %v526 = vld [vmem:[#allocation2 + $0x30] sm:$0xff]
        %v527 = vld [vmem:[#allocation2 + $0x38] sm:$0xff]
        %v528 = vld [vmem:[#allocation2 + $0x40] sm:$0xff]
        %v529 = vld [vmem:[#allocation2 + $0x48] sm:$0xff]
        %v530 = vld [vmem:[#allocation2 + $0x60] sm:$0xff]
        %v531 = vld [vmem:[#allocation2 + $0x68] sm:$0xff]
        %v532 = vld [vmem:[#allocation2 + $0x70] sm:$0xff]
        %v533 = vld [vmem:[#allocation2 + $0x78] sm:$0xff]
        %v534 = vld [vmem:[#allocation2 + $0x90] sm:$0xff]
        %v535 = vld [vmem:[#allocation2 + $0x98] sm:$0xff]
        %v536 = vld [vmem:[#allocation2 + $0xa0] sm:$0xff]
        %v537 = vld [vmem:[#allocation2 + $0xa8] sm:$0xff]
        %v538 = vld [vmem:[#allocation2 + $0xc0] sm:$0xff]
        %v539 = vld [vmem:[#allocation2 + $0xc8] sm:$0xff]
        %v540 = vld [vmem:[#allocation2 + $0xd0] sm:$0xff]
        %v541 = vld [vmem:[#allocation2 + $0xd8] sm:$0xff]
        %v542 = vld [vmem:[#allocation2 + $0xf0] sm:$0xff]
        %v543 = vld [vmem:[#allocation2 + $0xf8] sm:$0xff]
        %v544 = vld [vmem:[#allocation2 + $0x100] sm:$0xff]
        %v545 = vld [vmem:[#allocation2 + $0x108] sm:$0xff]
        %v546 = vld [vmem:[#allocation2 + $0x120] sm:$0xff]
        %v547 = vld [vmem:[#allocation2 + $0x128] sm:$0xff]
        %v548 = vld [vmem:[#allocation2 + $0x130] sm:$0xff]
        %v549 = vld [vmem:[#allocation2 + $0x138] sm:$0xff]
        %v550 = vld [vmem:[#allocation2 + $0x150] sm:$0xff]
        %v551 = vld [vmem:[#allocation2 + $0x158] sm:$0xff]
        %v552 = vld [vmem:[#allocation2 + $0x160] sm:$0xff]
        %v553 = vld [vmem:[#allocation2 + $0x168] sm:$0xff]
        %v554 = vld [vmem:[#allocation2 + $0x180] sm:$0xff]
        %v555 = vld [vmem:[#allocation2 + $0x188] sm:$0xff]
        %v556 = vld [vmem:[#allocation2 + $0x190] sm:$0xff]
        %v557 = vld [vmem:[#allocation2 + $0x198] sm:$0xff]
        %v558 = vld [vmem:[%s2] sm:$0xff]
        %560 = vset.pattern.permute.xlu0 0
        %561 = vperm.xlu0 %560, %v558
        %v562 = vpop.permute.xlu0 %561
        %vm564 = vcmask 588800
        %v566 = vsel %vm564, %v521, 0
        %568 = vmatprep.subr.mxu0 %v523
        %569 = vmatpush1.msra.mxu0 %v522
        %570 = vmatprep.subr.mxu0 %v527
        %571 = vmatpush1.msra.mxu0 %v526
        %572 = vmatprep.subr.mxu0 %v531
        %573 = vmatpush1.msra.mxu0 %v530
        %574 = vmatprep.subr.mxu0 %v535
        %575 = vmatpush1.msra.mxu0 %v534
        %576 = vmatprep.subr.mxu0 %v539
        %577 = vmatpush1.msra.mxu0 %v538
        %578 = vmatprep.subr.mxu0 %v543
        %579 = vmatpush1.msra.mxu0 %v542
        %580 = vmatprep.subr.mxu0 %v547
        %581 = vmatpush1.msra.mxu0 %v546
        %582 = vmatprep.subr.mxu0 %v551
        %583 = vmatpush1.msra.mxu0 %v550
        %584 = vmatprep.subr.mxu0 %v555
        %585 = vmatpush1.msra.mxu0 %v554
        %586 = vmatprep.subr.mxu0 0.0
        %587 = vmatpush1.msra.mxu0 0.0
        %588 = vmatprep.subr.mxu0 0.0
        %589 = vmatpush1.msra.mxu0 0.0
        %590 = vmatprep.subr.mxu0 0.0
        %591 = vmatpush1.msra.mxu0 0.0
        %592 = vmatprep.subr.mxu0 0.0
        %593 = vmatpush1.msra.mxu0 0.0
        %594 = vmatprep.subr.mxu0 0.0
        %595 = vmatpush1.msra.mxu0 0.0
        %596 = vmatprep.subr.mxu0 0.0
        %597 = vmatpush1.msra.mxu0 0.0
        %598 = vmatprep.subr.mxu0 0.0
        %599 = vmatpush1.msra.mxu0 0.0
        %600 = vmatprep.subr.mxu0 0.0
        %601 = vmatpush1.msra.mxu0 0.0
        %602 = vmatprep.subr.mxu0 0.0
        %603 = vmatpush1.msra.mxu0 0.0
        %604 = vmatprep.subr.mxu0 0.0
        %605 = vmatpush1.msra.mxu0 0.0
        %606 = vmatprep.subr.mxu0 0.0
        %607 = vmatpush1.msra.mxu0 0.0
        %608 = vmatprep.subr.mxu0 0.0
        %609 = vmatpush1.msra.mxu0 0.0
        %610 = vmatprep.subr.mxu0 0.0
        %611 = vmatpush1.msra.mxu0 0.0
        %612 = vmatprep.subr.mxu0 0.0
        %613 = vmatpush1.msra.mxu0 0.0
        %614 = vmatprep.subr.mxu0 0.0
        %615 = vmatpush1.msra.mxu0 0.0
        %616 = vmatprep.subr.mxu0 0.0
        %617 = vmatpush1.msra.mxu0 0.0
        %618 = vmatprep.subr.mxu0 0.0
        %619 = vmatpush1.msra.mxu0 0.0
        %620 = vmatprep.subr.mxu0 0.0
        %621 = vmatpush1.msra.mxu0 0.0
        %622 = vmatprep.subr.mxu0 0.0
        %623 = vmatpush1.msra.mxu0 0.0
        %624 = vmatprep.subr.mxu0 0.0
        %625 = vmatpush1.msra.mxu0 0.0
        %626 = vmatprep.subr.mxu0 0.0
        %627 = vmatpush1.msra.mxu0 0.0
        %628 = vmatprep.subr.mxu0 0.0
        %629 = vmatpush1.msra.mxu0 0.0
        %630 = vmatprep.subr.mxu0 0.0
        %631 = vmatpush1.msra.mxu0 0.0
        %632 = vmatprep.mubr.f32.mxu0 0.0
        %633 = vmatmul.mubr.f32.gmra.mrb[0].mxu0 %v566
        %v634 = vpop.f32.mrb[0].mxu0
        %v635 = vadd.f32 %v562, %v634
        %v636 = vpop.f32.mrb[0].mxu0
        %v637 = vadd.f32 %v562, %v636
        %638 = vdwg.mxu0
        %639 = vmatprep.subr.mxu0 %v525
        %640 = vmatpush1.msra.mxu0 %v524
        %641 = vmatprep.subr.mxu0 %v529
        %642 = vmatpush1.msra.mxu0 %v528
        %643 = vmatprep.subr.mxu0 %v533
        %644 = vmatpush1.msra.mxu0 %v532
        %645 = vmatprep.subr.mxu0 %v537
        %646 = vmatpush1.msra.mxu0 %v536
        %647 = vmatprep.subr.mxu0 %v541
        %648 = vmatpush1.msra.mxu0 %v540
        %649 = vmatprep.subr.mxu0 %v545
        %650 = vmatpush1.msra.mxu0 %v544
        %651 = vmatprep.subr.mxu0 %v549
        %652 = vmatpush1.msra.mxu0 %v548
        %653 = vmatprep.subr.mxu0 %v553
        %654 = vmatpush1.msra.mxu0 %v552
        %655 = vmatprep.subr.mxu0 %v557
        %656 = vmatpush1.msra.mxu0 %v556
        %657 = vmatprep.subr.mxu0 0.0
        %658 = vmatpush1.msra.mxu0 0.0
        %659 = vmatprep.subr.mxu0 0.0
        %660 = vmatpush1.msra.mxu0 0.0
        %661 = vmatprep.subr.mxu0 0.0
        %662 = vmatpush1.msra.mxu0 0.0
        %663 = vmatprep.subr.mxu0 0.0
        %664 = vmatpush1.msra.mxu0 0.0
        %665 = vmatprep.subr.mxu0 0.0
        %666 = vmatpush1.msra.mxu0 0.0
        %667 = vmatprep.subr.mxu0 0.0
        %668 = vmatpush1.msra.mxu0 0.0
        %669 = vmatprep.subr.mxu0 0.0
        %670 = vmatpush1.msra.mxu0 0.0
        %671 = vmatprep.subr.mxu0 0.0
        %672 = vmatpush1.msra.mxu0 0.0
        %673 = vmatprep.subr.mxu0 0.0
        %674 = vmatpush1.msra.mxu0 0.0
        %675 = vmatprep.subr.mxu0 0.0
        %676 = vmatpush1.msra.mxu0 0.0
        %677 = vmatprep.subr.mxu0 0.0
        %678 = vmatpush1.msra.mxu0 0.0
        %679 = vmatprep.subr.mxu0 0.0
        %680 = vmatpush1.msra.mxu0 0.0
        %681 = vmatprep.subr.mxu0 0.0
        %682 = vmatpush1.msra.mxu0 0.0
        %683 = vmatprep.subr.mxu0 0.0
        %684 = vmatpush1.msra.mxu0 0.0
        %685 = vmatprep.subr.mxu0 0.0
        %686 = vmatpush1.msra.mxu0 0.0
        %687 = vmatprep.subr.mxu0 0.0
        %688 = vmatpush1.msra.mxu0 0.0
        %689 = vmatprep.subr.mxu0 0.0
        %690 = vmatpush1.msra.mxu0 0.0
        %691 = vmatprep.subr.mxu0 0.0
        %692 = vmatpush1.msra.mxu0 0.0
        %693 = vmatprep.subr.mxu0 0.0
        %694 = vmatpush1.msra.mxu0 0.0
        %695 = vmatprep.subr.mxu0 0.0
        %696 = vmatpush1.msra.mxu0 0.0
        %697 = vmatprep.subr.mxu0 0.0
        %698 = vmatpush1.msra.mxu0 0.0
        %699 = vmatprep.subr.mxu0 0.0
        %700 = vmatpush1.msra.mxu0 0.0
        %701 = vmatprep.subr.mxu0 0.0
        %702 = vmatpush1.msra.mxu0 0.0
        %703 = vmatprep.mubr.f32.mxu0 0.0
        %704 = vmatmul.mubr.f32.gmra.mrb[0].mxu0 %v566
        %v705 = vpop.f32.mrb[0].mxu0
        %v706 = vadd.f32 %v562, %v705
        %v707 = vpop.f32.mrb[0].mxu0
        %v708 = vadd.f32 %v562, %v707
        %709 = vdwg.mxu0
        %v710 = vmax.f32 %v635, 0.0
        %v711 = vmax.f32 %v637, 0.0
        %v712 = vmax.f32 %v706, 0.0
        %v713 = vmax.f32 %v708, 0.0
        %vm714 = vcmp.lt.s32.totalorder %v305, 16
        %vm715 = vcmp.lt.s32.totalorder %v306, 16
        %vm716 = vcmp.lt.s32.totalorder %v307, 16
        %vm717 = vcmp.lt.s32.totalorder %v308, 16
        %v718 = vsel %vm714, %v710, 0.0
        %v719 = vsel %vm715, %v711, 0.0
        %v720 = vsel %vm716, %v712, 0.0
        %v721 = vsel %vm717, %v713, 0.0
        %722 = vst [vmem:[#allocation3 + $0x8] sm:$0xff] %v718
        %723 = vst [vmem:[#allocation3 + $0x10] sm:$0xff] %v719
        %724 = vst [vmem:[#allocation3 + $0x18] sm:$0xff] %v720
        %725 = vst [vmem:[#allocation3 + $0x20] sm:$0xff] %v721
        %726 = vst [vmem:[#allocation3 + $0x28] sm:$0xff] 0.0
        %727 = vst [vmem:[#allocation3 + $0x30] sm:$0xff] 0.0
        %v728 = vld [vmem:[#allocation3] sm:$0xff]
        %v729 = vld [vmem:[#allocation3 + $0x8] sm:$0xff]
        %v730 = vld [vmem:[#allocation3 + $0x10] sm:$0xff]
        %v731 = vld [vmem:[#allocation3 + $0x18] sm:$0xff]
        %v732 = vld [vmem:[#allocation3 + $0x20] sm:$0xff]
        %v733 = vld [vmem:[#allocation3 + $0x28] sm:$0xff]
        %739 = vrot.lane.b32.xlu0 %v728, 33
        %v740 = vpop.permute.xlu0 %739
        %741 = vrot.lane.b32.xlu0 %v729, 33
        %v742 = vpop.permute.xlu0 %741
        %743 = vrot.lane.b32.xlu0 %v730, 33
        %v744 = vpop.permute.xlu0 %743
        %745 = vrot.lane.b32.xlu0 %v731, 33
        %v746 = vpop.permute.xlu0 %745
        %747 = vrot.lane.b32.xlu0 %v732, 33
        %v748 = vpop.permute.xlu0 %747
        %v749 = vsel %vm342, %v740, %v742
        %v750 = vsel %vm342, %v742, %v744
        %v751 = vsel %vm342, %v744, %v746
        %v752 = vsel %vm342, %v746, %v748
        %757 = vst [vmem:[#allocation2] sm:$0xff] %v749
        %758 = vst [vmem:[#allocation2 + $0x8] sm:$0xff] %v750
        %759 = vst [vmem:[#allocation2 + $0x10] sm:$0xff] %v751
        %760 = vst [vmem:[#allocation2 + $0x18] sm:$0xff] %v752
        %761 = vrot.lane.b32.xlu0 %v728, 32
        %v762 = vpop.permute.xlu0 %761
        %763 = vrot.lane.b32.xlu0 %v729, 32
        %v764 = vpop.permute.xlu0 %763
        %765 = vrot.lane.b32.xlu0 %v730, 32
        %v766 = vpop.permute.xlu0 %765
        %767 = vrot.lane.b32.xlu0 %v731, 32
        %v768 = vpop.permute.xlu0 %767
        %769 = vrot.lane.b32.xlu0 %v732, 32
        %v770 = vpop.permute.xlu0 %769
        %v771 = vsel %vm365, %v762, %v764
        %v772 = vsel %vm365, %v764, %v766
        %v773 = vsel %vm365, %v766, %v768
        %v774 = vsel %vm365, %v768, %v770
        %779 = vst [vmem:[#allocation2 + $0x30] sm:$0xff] %v771
        %780 = vst [vmem:[#allocation2 + $0x38] sm:$0xff] %v772
        %781 = vst [vmem:[#allocation2 + $0x40] sm:$0xff] %v773
        %782 = vst [vmem:[#allocation2 + $0x48] sm:$0xff] %v774
        %783 = vrot.lane.b32.xlu0 %v728, 31
        %v784 = vpop.permute.xlu0 %783
        %785 = vrot.lane.b32.xlu0 %v729, 31
        %v786 = vpop.permute.xlu0 %785
        %787 = vrot.lane.b32.xlu0 %v730, 31
        %v788 = vpop.permute.xlu0 %787
        %789 = vrot.lane.b32.xlu0 %v731, 31
        %v790 = vpop.permute.xlu0 %789
        %791 = vrot.lane.b32.xlu0 %v732, 31
        %v792 = vpop.permute.xlu0 %791
        %v793 = vsel %vm388, %v784, %v786
        %v794 = vsel %vm388, %v786, %v788
        %v795 = vsel %vm388, %v788, %v790
        %v796 = vsel %vm388, %v790, %v792
        %801 = vst [vmem:[#allocation2 + $0x60] sm:$0xff] %v793
        %802 = vst [vmem:[#allocation2 + $0x68] sm:$0xff] %v794
        %803 = vst [vmem:[#allocation2 + $0x70] sm:$0xff] %v795
        %804 = vst [vmem:[#allocation2 + $0x78] sm:$0xff] %v796
        %805 = vrot.lane.b32.xlu0 %v728, 1
        %v806 = vpop.permute.xlu0 %805
        %807 = vrot.lane.b32.xlu0 %v729, 1
        %v808 = vpop.permute.xlu0 %807
        %809 = vrot.lane.b32.xlu0 %v730, 1
        %v810 = vpop.permute.xlu0 %809
        %811 = vrot.lane.b32.xlu0 %v731, 1
        %v812 = vpop.permute.xlu0 %811
        %813 = vrot.lane.b32.xlu0 %v732, 1
        %v814 = vpop.permute.xlu0 %813
        %v815 = vsel %vm411, %v806, %v808
        %v816 = vsel %vm411, %v808, %v810
        %v817 = vsel %vm411, %v810, %v812
        %v818 = vsel %vm411, %v812, %v814
        %823 = vst [vmem:[#allocation2 + $0x90] sm:$0xff] %v815
        %824 = vst [vmem:[#allocation2 + $0x98] sm:$0xff] %v816
        %825 = vst [vmem:[#allocation2 + $0xa0] sm:$0xff] %v817
        %826 = vst [vmem:[#allocation2 + $0xa8] sm:$0xff] %v818
        %827 = vst [vmem:[#allocation2 + $0xc0] sm:$0xff] %v729
        %828 = vst [vmem:[#allocation2 + $0xc8] sm:$0xff] %v730
        %829 = vst [vmem:[#allocation2 + $0xd0] sm:$0xff] %v731
        %830 = vst [vmem:[#allocation2 + $0xd8] sm:$0xff] %v732
        %832 = vrot.lane.b32.xlu0 %v729, 127
        %v833 = vpop.permute.xlu0 %832
        %834 = vrot.lane.b32.xlu0 %v730, 127
        %v835 = vpop.permute.xlu0 %834
        %836 = vrot.lane.b32.xlu0 %v731, 127
        %v837 = vpop.permute.xlu0 %836
        %838 = vrot.lane.b32.xlu0 %v732, 127
        %v839 = vpop.permute.xlu0 %838
        %840 = vrot.lane.b32.xlu0 %v733, 127
        %v841 = vpop.permute.xlu0 %840
        %v842 = vsel %vm439, %v833, %v835
        %v843 = vsel %vm439, %v835, %v837
        %v844 = vsel %vm439, %v837, %v839
        %v845 = vsel %vm439, %v839, %v841
        %850 = vst [vmem:[#allocation2 + $0xf0] sm:$0xff] %v842
        %851 = vst [vmem:[#allocation2 + $0xf8] sm:$0xff] %v843
        %852 = vst [vmem:[#allocation2 + $0x100] sm:$0xff] %v844
        %853 = vst [vmem:[#allocation2 + $0x108] sm:$0xff] %v845
        %854 = vrot.lane.b32.xlu0 %v729, 97
        %v855 = vpop.permute.xlu0 %854
        %856 = vrot.lane.b32.xlu0 %v730, 97
        %v857 = vpop.permute.xlu0 %856
        %858 = vrot.lane.b32.xlu0 %v731, 97
        %v859 = vpop.permute.xlu0 %858
        %860 = vrot.lane.b32.xlu0 %v732, 97
        %v861 = vpop.permute.xlu0 %860
        %862 = vrot.lane.b32.xlu0 %v733, 97
        %v863 = vpop.permute.xlu0 %862
        %v864 = vsel %vm462, %v855, %v857
        %v865 = vsel %vm462, %v857, %v859
        %v866 = vsel %vm462, %v859, %v861
        %v867 = vsel %vm462, %v861, %v863
        %872 = vst [vmem:[#allocation2 + $0x120] sm:$0xff] %v864
        %873 = vst [vmem:[#allocation2 + $0x128] sm:$0xff] %v865
        %874 = vst [vmem:[#allocation2 + $0x130] sm:$0xff] %v866
        %875 = vst [vmem:[#allocation2 + $0x138] sm:$0xff] %v867
        %876 = vrot.lane.b32.xlu0 %v729, 96
        %v877 = vpop.permute.xlu0 %876
        %878 = vrot.lane.b32.xlu0 %v730, 96
        %v879 = vpop.permute.xlu0 %878
        %880 = vrot.lane.b32.xlu0 %v731, 96
        %v881 = vpop.permute.xlu0 %880
        %882 = vrot.lane.b32.xlu0 %v732, 96
        %v883 = vpop.permute.xlu0 %882
        %884 = vrot.lane.b32.xlu0 %v733, 96
        %v885 = vpop.permute.xlu0 %884
        %v886 = vsel %vm485, %v877, %v879
        %v887 = vsel %vm485, %v879, %v881
        %v888 = vsel %vm485, %v881, %v883
        %v889 = vsel %vm485, %v883, %v885
        %894 = vst [vmem:[#allocation2 + $0x150] sm:$0xff] %v886
        %895 = vst [vmem:[#allocation2 + $0x158] sm:$0xff] %v887
        %896 = vst [vmem:[#allocation2 + $0x160] sm:$0xff] %v888
        %897 = vst [vmem:[#allocation2 + $0x168] sm:$0xff] %v889
        %898 = vrot.lane.b32.xlu0 %v729, 95
        %v899 = vpop.permute.xlu0 %898
        %900 = vrot.lane.b32.xlu0 %v730, 95
        %v901 = vpop.permute.xlu0 %900
        %902 = vrot.lane.b32.xlu0 %v731, 95
        %v903 = vpop.permute.xlu0 %902
        %904 = vrot.lane.b32.xlu0 %v732, 95
        %v905 = vpop.permute.xlu0 %904
        %906 = vrot.lane.b32.xlu0 %v733, 95
        %v907 = vpop.permute.xlu0 %906
        %v908 = vsel %vm508, %v899, %v901
        %v909 = vsel %vm508, %v901, %v903
        %v910 = vsel %vm508, %v903, %v905
        %v911 = vsel %vm508, %v905, %v907
        %916 = vst [vmem:[#allocation2 + $0x180] sm:$0xff] %v908
        %917 = vst [vmem:[#allocation2 + $0x188] sm:$0xff] %v909
        %918 = vst [vmem:[#allocation2 + $0x190] sm:$0xff] %v910
        %919 = vst [vmem:[#allocation2 + $0x198] sm:$0xff] %v911
        %s920 = scalar_lea.vmem %s1, 8
        %v921 = vld [vmem:[%s920] sm:$0xff]
        %v922 = vld [vmem:[#allocation2] sm:$0xff]
        %v923 = vld [vmem:[#allocation2 + $0x8] sm:$0xff]
        %v924 = vld [vmem:[#allocation2 + $0x10] sm:$0xff]
        %v925 = vld [vmem:[#allocation2 + $0x18] sm:$0xff]
        %v926 = vld [vmem:[#allocation2 + $0x30] sm:$0xff]
        %v927 = vld [vmem:[#allocation2 + $0x38] sm:$0xff]
        %v928 = vld [vmem:[#allocation2 + $0x40] sm:$0xff]
        %v929 = vld [vmem:[#allocation2 + $0x48] sm:$0xff]
        %v930 = vld [vmem:[#allocation2 + $0x60] sm:$0xff]
        %v931 = vld [vmem:[#allocation2 + $0x68] sm:$0xff]
        %v932 = vld [vmem:[#allocation2 + $0x70] sm:$0xff]
        %v933 = vld [vmem:[#allocation2 + $0x78] sm:$0xff]
        %v934 = vld [vmem:[#allocation2 + $0x90] sm:$0xff]
        %v935 = vld [vmem:[#allocation2 + $0x98] sm:$0xff]
        %v936 = vld [vmem:[#allocation2 + $0xa0] sm:$0xff]
        %v937 = vld [vmem:[#allocation2 + $0xa8] sm:$0xff]
        %v938 = vld [vmem:[#allocation2 + $0xc0] sm:$0xff]
        %v939 = vld [vmem:[#allocation2 + $0xc8] sm:$0xff]
        %v940 = vld [vmem:[#allocation2 + $0xd0] sm:$0xff]
        %v941 = vld [vmem:[#allocation2 + $0xd8] sm:$0xff]
        %v942 = vld [vmem:[#allocation2 + $0xf0] sm:$0xff]
        %v943 = vld [vmem:[#allocation2 + $0xf8] sm:$0xff]
        %v944 = vld [vmem:[#allocation2 + $0x100] sm:$0xff]
        %v945 = vld [vmem:[#allocation2 + $0x108] sm:$0xff]
        %v946 = vld [vmem:[#allocation2 + $0x120] sm:$0xff]
        %v947 = vld [vmem:[#allocation2 + $0x128] sm:$0xff]
        %v948 = vld [vmem:[#allocation2 + $0x130] sm:$0xff]
        %v949 = vld [vmem:[#allocation2 + $0x138] sm:$0xff]
        %v950 = vld [vmem:[#allocation2 + $0x150] sm:$0xff]
        %v951 = vld [vmem:[#allocation2 + $0x158] sm:$0xff]
        %v952 = vld [vmem:[#allocation2 + $0x160] sm:$0xff]
        %v953 = vld [vmem:[#allocation2 + $0x168] sm:$0xff]
        %v954 = vld [vmem:[#allocation2 + $0x180] sm:$0xff]
        %v955 = vld [vmem:[#allocation2 + $0x188] sm:$0xff]
        %v956 = vld [vmem:[#allocation2 + $0x190] sm:$0xff]
        %v957 = vld [vmem:[#allocation2 + $0x198] sm:$0xff]
        %s958 = scalar_lea.vmem %s2, 8
        %v959 = vld [vmem:[%s958] sm:$0xff]
        %961 = vset.pattern.permute.xlu0 0
        %962 = vperm.xlu0 %961, %v959
        %v963 = vpop.permute.xlu0 %962
        %v966 = vsel %vm564, %v921, 0
        %968 = vmatprep.subr.mxu0 %v923
        %969 = vmatpush1.msra.mxu0 %v922
        %970 = vmatprep.subr.mxu0 %v927
        %971 = vmatpush1.msra.mxu0 %v926
        %972 = vmatprep.subr.mxu0 %v931
        %973 = vmatpush1.msra.mxu0 %v930
        %974 = vmatprep.subr.mxu0 %v935
        %975 = vmatpush1.msra.mxu0 %v934
        %976 = vmatprep.subr.mxu0 %v939
        %977 = vmatpush1.msra.mxu0 %v938
        %978 = vmatprep.subr.mxu0 %v943
        %979 = vmatpush1.msra.mxu0 %v942
        %980 = vmatprep.subr.mxu0 %v947
        %981 = vmatpush1.msra.mxu0 %v946
        %982 = vmatprep.subr.mxu0 %v951
        %983 = vmatpush1.msra.mxu0 %v950
        %984 = vmatprep.subr.mxu0 %v955
        %985 = vmatpush1.msra.mxu0 %v954
        %986 = vmatprep.subr.mxu0 0.0
        %987 = vmatpush1.msra.mxu0 0.0
        %988 = vmatprep.subr.mxu0 0.0
        %989 = vmatpush1.msra.mxu0 0.0
        %990 = vmatprep.subr.mxu0 0.0
        %991 = vmatpush1.msra.mxu0 0.0
        %992 = vmatprep.subr.mxu0 0.0
        %993 = vmatpush1.msra.mxu0 0.0
        %994 = vmatprep.subr.mxu0 0.0
        %995 = vmatpush1.msra.mxu0 0.0
        %996 = vmatprep.subr.mxu0 0.0
        %997 = vmatpush1.msra.mxu0 0.0
        %998 = vmatprep.subr.mxu0 0.0
        %999 = vmatpush1.msra.mxu0 0.0
        %1000 = vmatprep.subr.mxu0 0.0
        %1001 = vmatpush1.msra.mxu0 0.0
        %1002 = vmatprep.subr.mxu0 0.0
        %1003 = vmatpush1.msra.mxu0 0.0
        %1004 = vmatprep.subr.mxu0 0.0
        %1005 = vmatpush1.msra.mxu0 0.0
        %1006 = vmatprep.subr.mxu0 0.0
        %1007 = vmatpush1.msra.mxu0 0.0
        %1008 = vmatprep.subr.mxu0 0.0
        %1009 = vmatpush1.msra.mxu0 0.0
        %1010 = vmatprep.subr.mxu0 0.0
        %1011 = vmatpush1.msra.mxu0 0.0
        %1012 = vmatprep.subr.mxu0 0.0
        %1013 = vmatpush1.msra.mxu0 0.0
        %1014 = vmatprep.subr.mxu0 0.0
        %1015 = vmatpush1.msra.mxu0 0.0
        %1016 = vmatprep.subr.mxu0 0.0
        %1017 = vmatpush1.msra.mxu0 0.0
        %1018 = vmatprep.subr.mxu0 0.0
        %1019 = vmatpush1.msra.mxu0 0.0
        %1020 = vmatprep.subr.mxu0 0.0
        %1021 = vmatpush1.msra.mxu0 0.0
        %1022 = vmatprep.subr.mxu0 0.0
        %1023 = vmatpush1.msra.mxu0 0.0
        %1024 = vmatprep.subr.mxu0 0.0
        %1025 = vmatpush1.msra.mxu0 0.0
        %1026 = vmatprep.subr.mxu0 0.0
        %1027 = vmatpush1.msra.mxu0 0.0
        %1028 = vmatprep.subr.mxu0 0.0
        %1029 = vmatpush1.msra.mxu0 0.0
        %1030 = vmatprep.subr.mxu0 0.0
        %1031 = vmatpush1.msra.mxu0 0.0
        %1032 = vmatprep.mubr.f32.mxu0 0.0
        %1033 = vmatmul.mubr.f32.gmra.mrb[0].mxu0 %v966
        %v1034 = vpop.f32.mrb[0].mxu0
        %v1035 = vadd.f32 %v963, %v1034
        %v1036 = vpop.f32.mrb[0].mxu0
        %v1037 = vadd.f32 %v963, %v1036
        %1038 = vdwg.mxu0
        %1039 = vmatprep.subr.mxu0 %v925
        %1040 = vmatpush1.msra.mxu0 %v924
        %1041 = vmatprep.subr.mxu0 %v929
        %1042 = vmatpush1.msra.mxu0 %v928
        %1043 = vmatprep.subr.mxu0 %v933
        %1044 = vmatpush1.msra.mxu0 %v932
        %1045 = vmatprep.subr.mxu0 %v937
        %1046 = vmatpush1.msra.mxu0 %v936
        %1047 = vmatprep.subr.mxu0 %v941
        %1048 = vmatpush1.msra.mxu0 %v940
        %1049 = vmatprep.subr.mxu0 %v945
        %1050 = vmatpush1.msra.mxu0 %v944
        %1051 = vmatprep.subr.mxu0 %v949
        %1052 = vmatpush1.msra.mxu0 %v948
        %1053 = vmatprep.subr.mxu0 %v953
        %1054 = vmatpush1.msra.mxu0 %v952
        %1055 = vmatprep.subr.mxu0 %v957
        %1056 = vmatpush1.msra.mxu0 %v956
        %1057 = vmatprep.subr.mxu0 0.0
        %1058 = vmatpush1.msra.mxu0 0.0
        %1059 = vmatprep.subr.mxu0 0.0
        %1060 = vmatpush1.msra.mxu0 0.0
        %1061 = vmatprep.subr.mxu0 0.0
        %1062 = vmatpush1.msra.mxu0 0.0
        %1063 = vmatprep.subr.mxu0 0.0
        %1064 = vmatpush1.msra.mxu0 0.0
        %1065 = vmatprep.subr.mxu0 0.0
        %1066 = vmatpush1.msra.mxu0 0.0
        %1067 = vmatprep.subr.mxu0 0.0
        %1068 = vmatpush1.msra.mxu0 0.0
        %1069 = vmatprep.subr.mxu0 0.0
        %1070 = vmatpush1.msra.mxu0 0.0
        %1071 = vmatprep.subr.mxu0 0.0
        %1072 = vmatpush1.msra.mxu0 0.0
        %1073 = vmatprep.subr.mxu0 0.0
        %1074 = vmatpush1.msra.mxu0 0.0
        %1075 = vmatprep.subr.mxu0 0.0
        %1076 = vmatpush1.msra.mxu0 0.0
        %1077 = vmatprep.subr.mxu0 0.0
        %1078 = vmatpush1.msra.mxu0 0.0
        %1079 = vmatprep.subr.mxu0 0.0
        %1080 = vmatpush1.msra.mxu0 0.0
        %1081 = vmatprep.subr.mxu0 0.0
        %1082 = vmatpush1.msra.mxu0 0.0
        %1083 = vmatprep.subr.mxu0 0.0
        %1084 = vmatpush1.msra.mxu0 0.0
        %1085 = vmatprep.subr.mxu0 0.0
        %1086 = vmatpush1.msra.mxu0 0.0
        %1087 = vmatprep.subr.mxu0 0.0
        %1088 = vmatpush1.msra.mxu0 0.0
        %1089 = vmatprep.subr.mxu0 0.0
        %1090 = vmatpush1.msra.mxu0 0.0
        %1091 = vmatprep.subr.mxu0 0.0
        %1092 = vmatpush1.msra.mxu0 0.0
        %1093 = vmatprep.subr.mxu0 0.0
        %1094 = vmatpush1.msra.mxu0 0.0
        %1095 = vmatprep.subr.mxu0 0.0
        %1096 = vmatpush1.msra.mxu0 0.0
        %1097 = vmatprep.subr.mxu0 0.0
        %1098 = vmatpush1.msra.mxu0 0.0
        %1099 = vmatprep.subr.mxu0 0.0
        %1100 = vmatpush1.msra.mxu0 0.0
        %1101 = vmatprep.subr.mxu0 0.0
        %1102 = vmatpush1.msra.mxu0 0.0
        %1103 = vmatprep.mubr.f32.mxu0 0.0
        %1104 = vmatmul.mubr.f32.gmra.mrb[0].mxu0 %v966
        %v1105 = vpop.f32.mrb[0].mxu0
        %v1106 = vadd.f32 %v963, %v1105
        %v1107 = vpop.f32.mrb[0].mxu0
        %v1108 = vadd.f32 %v963, %v1107
        %1109 = vdwg.mxu0
        %v1110 = vmax.f32 %v1035, 0.0
        %v1111 = vmax.f32 %v1037, 0.0
        %v1112 = vmax.f32 %v1106, 0.0
        %v1113 = vmax.f32 %v1108, 0.0
        %v1114 = vsel %vm714, %v1110, 0.0
        %v1115 = vsel %vm715, %v1111, 0.0
        %v1116 = vsel %vm716, %v1112, 0.0
        %v1117 = vsel %vm717, %v1113, 0.0
        %1118 = vst [vmem:[%s226 + $0x8] sm:$0xff] %v1114
        %1119 = vst [vmem:[%s226 + $0x10] sm:$0xff] %v1115
        %1120 = vst [vmem:[%s226 + $0x18] sm:$0xff] %v1116
        %1121 = vst [vmem:[%s226 + $0x20] sm:$0xff] %v1117
        %1122 = vst [vmem:[%s226 + $0x28] sm:$0xff] 0.0
        %1123 = vst [vmem:[%s226 + $0x30] sm:$0xff] 0.0
        %v1124 = vld [vmem:[%s226] sm:$0xff]
        %v1125 = vld [vmem:[%s226 + $0x8] sm:$0xff]
        %v1126 = vld [vmem:[%s226 + $0x10] sm:$0xff]
        %v1127 = vld [vmem:[%s226 + $0x18] sm:$0xff]
        %v1128 = vld [vmem:[%s226 + $0x20] sm:$0xff]
        %v1129 = vld [vmem:[%s226 + $0x28] sm:$0xff]
        %1135 = vrot.lane.b32.xlu0 %v1124, 96
        %v1136 = vpop.permute.xlu0 %1135
        %1137 = vrot.lane.b32.xlu0 %v1125, 96
        %v1138 = vpop.permute.xlu0 %1137
        %1139 = vrot.lane.b32.xlu0 %v1126, 96
        %v1140 = vpop.permute.xlu0 %1139
        %1141 = vrot.lane.b32.xlu0 %v1127, 96
        %v1142 = vpop.permute.xlu0 %1141
        %1143 = vrot.lane.b32.xlu0 %v1128, 96
        %v1144 = vpop.permute.xlu0 %1143
        %v1145 = vsel %vm485, %v1136, %v1138
        %v1146 = vsel %vm485, %v1138, %v1140
        %v1147 = vsel %vm485, %v1140, %v1142
        %v1148 = vsel %vm485, %v1142, %v1144
        %1153 = vst [vmem:[#allocation2] sm:$0xff] %v1145
        %1154 = vst [vmem:[#allocation2 + $0x8] sm:$0xff] %v1146
        %1155 = vst [vmem:[#allocation2 + $0x10] sm:$0xff] %v1147
        %1156 = vst [vmem:[#allocation2 + $0x18] sm:$0xff] %v1148
        %1157 = vrot.lane.b32.xlu0 %v1124, 64
        %v1158 = vpop.permute.xlu0 %1157
        %1159 = vrot.lane.b32.xlu0 %v1125, 64
        %v1160 = vpop.permute.xlu0 %1159
        %1161 = vrot.lane.b32.xlu0 %v1126, 64
        %v1162 = vpop.permute.xlu0 %1161
        %1163 = vrot.lane.b32.xlu0 %v1127, 64
        %v1164 = vpop.permute.xlu0 %1163
        %1165 = vrot.lane.b32.xlu0 %v1128, 64
        %v1166 = vpop.permute.xlu0 %1165
        %vm1167 = vcmask 523264
        %v1168 = vsel %vm1167, %v1158, %v1160
        %v1169 = vsel %vm1167, %v1160, %v1162
        %v1170 = vsel %vm1167, %v1162, %v1164
        %v1171 = vsel %vm1167, %v1164, %v1166
        %1176 = vst [vmem:[#allocation2 + $0x30] sm:$0xff] %v1168
        %1177 = vst [vmem:[#allocation2 + $0x38] sm:$0xff] %v1169
        %1178 = vst [vmem:[#allocation2 + $0x40] sm:$0xff] %v1170
        %1179 = vst [vmem:[#allocation2 + $0x48] sm:$0xff] %v1171
        %1180 = vrot.lane.b32.xlu0 %v1124, 32
        %v1181 = vpop.permute.xlu0 %1180
        %1182 = vrot.lane.b32.xlu0 %v1125, 32
        %v1183 = vpop.permute.xlu0 %1182
        %1184 = vrot.lane.b32.xlu0 %v1126, 32
        %v1185 = vpop.permute.xlu0 %1184
        %1186 = vrot.lane.b32.xlu0 %v1127, 32
        %v1187 = vpop.permute.xlu0 %1186
        %1188 = vrot.lane.b32.xlu0 %v1128, 32
        %v1189 = vpop.permute.xlu0 %1188
        %v1190 = vsel %vm365, %v1181, %v1183
        %v1191 = vsel %vm365, %v1183, %v1185
        %v1192 = vsel %vm365, %v1185, %v1187
        %v1193 = vsel %vm365, %v1187, %v1189
        %1198 = vst [vmem:[#allocation2 + $0x60] sm:$0xff] %v1190
        %1199 = vst [vmem:[#allocation2 + $0x68] sm:$0xff] %v1191
        %1200 = vst [vmem:[#allocation2 + $0x70] sm:$0xff] %v1192
        %1201 = vst [vmem:[#allocation2 + $0x78] sm:$0xff] %v1193
        %1202 = vst [vmem:[#allocation2 + $0x90] sm:$0xff] %v1125
        %1203 = vst [vmem:[#allocation2 + $0x98] sm:$0xff] %v1126
        %1204 = vst [vmem:[#allocation2 + $0xa0] sm:$0xff] %v1127
        %1205 = vst [vmem:[#allocation2 + $0xa8] sm:$0xff] %v1128
        %1207 = vrot.lane.b32.xlu0 %v1129, 96
        %v1208 = vpop.permute.xlu0 %1207
        %v1209 = vsel %vm485, %v1144, %v1208
        %1211 = vst [vmem:[#allocation2 + $0xc0] sm:$0xff] %v1146
        %1212 = vst [vmem:[#allocation2 + $0xc8] sm:$0xff] %v1147
        %1213 = vst [vmem:[#allocation2 + $0xd0] sm:$0xff] %v1148
        %1214 = vst [vmem:[#allocation2 + $0xd8] sm:$0xff] %v1209
        %1215 = vrot.lane.b32.xlu0 %v1129, 64
        %v1216 = vpop.permute.xlu0 %1215
        %v1217 = vsel %vm1167, %v1166, %v1216
        %1219 = vst [vmem:[#allocation2 + $0xf0] sm:$0xff] %v1169
        %1220 = vst [vmem:[#allocation2 + $0xf8] sm:$0xff] %v1170
        %1221 = vst [vmem:[#allocation2 + $0x100] sm:$0xff] %v1171
        %1222 = vst [vmem:[#allocation2 + $0x108] sm:$0xff] %v1217
        %1223 = vrot.lane.b32.xlu0 %v1129, 32
        %v1224 = vpop.permute.xlu0 %1223
        %v1225 = vsel %vm365, %v1189, %v1224
        %1227 = vst [vmem:[#allocation2 + $0x120] sm:$0xff] %v1191
        %1228 = vst [vmem:[#allocation2 + $0x128] sm:$0xff] %v1192
        %1229 = vst [vmem:[#allocation2 + $0x130] sm:$0xff] %v1193
        %1230 = vst [vmem:[#allocation2 + $0x138] sm:$0xff] %v1225
        %s1231 = scalar_lea.vmem %s1, 16
        %v1232 = vld [vmem:[%s1231] sm:$0xff]
        %v1233 = vld [vmem:[#allocation2] sm:$0xff]
        %v1234 = vld [vmem:[#allocation2 + $0x8] sm:$0xff]
        %v1235 = vld [vmem:[#allocation2 + $0x10] sm:$0xff]
        %v1236 = vld [vmem:[#allocation2 + $0x18] sm:$0xff]
        %v1237 = vld [vmem:[#allocation2 + $0x30] sm:$0xff]
        %v1238 = vld [vmem:[#allocation2 + $0x38] sm:$0xff]
        %v1239 = vld [vmem:[#allocation2 + $0x40] sm:$0xff]
        %v1240 = vld [vmem:[#allocation2 + $0x48] sm:$0xff]
        %v1241 = vld [vmem:[#allocation2 + $0x60] sm:$0xff]
        %v1242 = vld [vmem:[#allocation2 + $0x68] sm:$0xff]
        %v1243 = vld [vmem:[#allocation2 + $0x70] sm:$0xff]
        %v1244 = vld [vmem:[#allocation2 + $0x78] sm:$0xff]
        %v1245 = vld [vmem:[#allocation2 + $0x90] sm:$0xff]
        %v1246 = vld [vmem:[#allocation2 + $0x98] sm:$0xff]
        %v1247 = vld [vmem:[#allocation2 + $0xa0] sm:$0xff]
        %v1248 = vld [vmem:[#allocation2 + $0xa8] sm:$0xff]
        %v1249 = vld [vmem:[#allocation2 + $0xc0] sm:$0xff]
        %v1250 = vld [vmem:[#allocation2 + $0xc8] sm:$0xff]
        %v1251 = vld [vmem:[#allocation2 + $0xd0] sm:$0xff]
        %v1252 = vld [vmem:[#allocation2 + $0xd8] sm:$0xff]
        %v1253 = vld [vmem:[#allocation2 + $0xf0] sm:$0xff]
        %v1254 = vld [vmem:[#allocation2 + $0xf8] sm:$0xff]
        %v1255 = vld [vmem:[#allocation2 + $0x100] sm:$0xff]
        %v1256 = vld [vmem:[#allocation2 + $0x108] sm:$0xff]
        %v1257 = vld [vmem:[#allocation2 + $0x120] sm:$0xff]
        %v1258 = vld [vmem:[#allocation2 + $0x128] sm:$0xff]
        %v1259 = vld [vmem:[#allocation2 + $0x130] sm:$0xff]
        %v1260 = vld [vmem:[#allocation2 + $0x138] sm:$0xff]
        %s1261 = scalar_lea.vmem %s2, 16
        %v1262 = vld [vmem:[%s1261] sm:$0xff]
        %1264 = vset.pattern.permute.xlu0 0
        %1265 = vperm.xlu0 %1264, %v1262
        %v1266 = vpop.permute.xlu0 %1265
        %vm1268 = vcmask 457728
        %v1270 = vsel %vm1268, %v1232, 0
        %1272 = vmatprep.subr.mxu0 %v1234
        %1273 = vmatpush1.msra.mxu0 %v1233
        %1274 = vmatprep.subr.mxu0 %v1238
        %1275 = vmatpush1.msra.mxu0 %v1237
        %1276 = vmatprep.subr.mxu0 %v1242
        %1277 = vmatpush1.msra.mxu0 %v1241
        %1278 = vmatprep.subr.mxu0 %v1246
        %1279 = vmatpush1.msra.mxu0 %v1245
        %1280 = vmatprep.subr.mxu0 %v1250
        %1281 = vmatpush1.msra.mxu0 %v1249
        %1282 = vmatprep.subr.mxu0 %v1254
        %1283 = vmatpush1.msra.mxu0 %v1253
        %1284 = vmatprep.subr.mxu0 %v1258
        %1285 = vmatpush1.msra.mxu0 %v1257
        %1286 = vmatprep.subr.mxu0 0.0
        %1287 = vmatpush1.msra.mxu0 0.0
        %1288 = vmatprep.subr.mxu0 0.0
        %1289 = vmatpush1.msra.mxu0 0.0
        %1290 = vmatprep.subr.mxu0 0.0
        %1291 = vmatpush1.msra.mxu0 0.0
        %1292 = vmatprep.subr.mxu0 0.0
        %1293 = vmatpush1.msra.mxu0 0.0
        %1294 = vmatprep.subr.mxu0 0.0
        %1295 = vmatpush1.msra.mxu0 0.0
        %1296 = vmatprep.subr.mxu0 0.0
        %1297 = vmatpush1.msra.mxu0 0.0
        %1298 = vmatprep.subr.mxu0 0.0
        %1299 = vmatpush1.msra.mxu0 0.0
        %1300 = vmatprep.subr.mxu0 0.0
        %1301 = vmatpush1.msra.mxu0 0.0
        %1302 = vmatprep.subr.mxu0 0.0
        %1303 = vmatpush1.msra.mxu0 0.0
        %1304 = vmatprep.subr.mxu0 0.0
        %1305 = vmatpush1.msra.mxu0 0.0
        %1306 = vmatprep.subr.mxu0 0.0
        %1307 = vmatpush1.msra.mxu0 0.0
        %1308 = vmatprep.subr.mxu0 0.0
        %1309 = vmatpush1.msra.mxu0 0.0
        %1310 = vmatprep.subr.mxu0 0.0
        %1311 = vmatpush1.msra.mxu0 0.0
        %1312 = vmatprep.subr.mxu0 0.0
        %1313 = vmatpush1.msra.mxu0 0.0
        %1314 = vmatprep.subr.mxu0 0.0
        %1315 = vmatpush1.msra.mxu0 0.0
        %1316 = vmatprep.subr.mxu0 0.0
        %1317 = vmatpush1.msra.mxu0 0.0
        %1318 = vmatprep.subr.mxu0 0.0
        %1319 = vmatpush1.msra.mxu0 0.0
        %1320 = vmatprep.subr.mxu0 0.0
        %1321 = vmatpush1.msra.mxu0 0.0
        %1322 = vmatprep.subr.mxu0 0.0
        %1323 = vmatpush1.msra.mxu0 0.0
        %1324 = vmatprep.subr.mxu0 0.0
        %1325 = vmatpush1.msra.mxu0 0.0
        %1326 = vmatprep.subr.mxu0 0.0
        %1327 = vmatpush1.msra.mxu0 0.0
        %1328 = vmatprep.subr.mxu0 0.0
        %1329 = vmatpush1.msra.mxu0 0.0
        %1330 = vmatprep.subr.mxu0 0.0
        %1331 = vmatpush1.msra.mxu0 0.0
        %1332 = vmatprep.subr.mxu0 0.0
        %1333 = vmatpush1.msra.mxu0 0.0
        %1334 = vmatprep.subr.mxu0 0.0
        %1335 = vmatpush1.msra.mxu0 0.0
        %1336 = vmatprep.mubr.f32.mxu0 0.0
        %1337 = vmatmul.mubr.f32.gmra.mrb[0].mxu0 %v1270
        %v1338 = vpop.f32.mrb[0].mxu0
        %v1339 = vadd.f32 %v1266, %v1338
        %v1340 = vpop.f32.mrb[0].mxu0
        %v1341 = vadd.f32 %v1266, %v1340
        %1342 = vdwg.mxu0
        %1343 = vmatprep.subr.mxu0 %v1236
        %1344 = vmatpush1.msra.mxu0 %v1235
        %1345 = vmatprep.subr.mxu0 %v1240
        %1346 = vmatpush1.msra.mxu0 %v1239
        %1347 = vmatprep.subr.mxu0 %v1244
        %1348 = vmatpush1.msra.mxu0 %v1243
        %1349 = vmatprep.subr.mxu0 %v1248
        %1350 = vmatpush1.msra.mxu0 %v1247
        %1351 = vmatprep.subr.mxu0 %v1252
        %1352 = vmatpush1.msra.mxu0 %v1251
        %1353 = vmatprep.subr.mxu0 %v1256
        %1354 = vmatpush1.msra.mxu0 %v1255
        %1355 = vmatprep.subr.mxu0 %v1260
        %1356 = vmatpush1.msra.mxu0 %v1259
        %1357 = vmatprep.subr.mxu0 0.0
        %1358 = vmatpush1.msra.mxu0 0.0
        %1359 = vmatprep.subr.mxu0 0.0
        %1360 = vmatpush1.msra.mxu0 0.0
        %1361 = vmatprep.subr.mxu0 0.0
        %1362 = vmatpush1.msra.mxu0 0.0
        %1363 = vmatprep.subr.mxu0 0.0
        %1364 = vmatpush1.msra.mxu0 0.0
        %1365 = vmatprep.subr.mxu0 0.0
        %1366 = vmatpush1.msra.mxu0 0.0
        %1367 = vmatprep.subr.mxu0 0.0
        %1368 = vmatpush1.msra.mxu0 0.0
        %1369 = vmatprep.subr.mxu0 0.0
        %1370 = vmatpush1.msra.mxu0 0.0
        %1371 = vmatprep.subr.mxu0 0.0
        %1372 = vmatpush1.msra.mxu0 0.0
        %1373 = vmatprep.subr.mxu0 0.0
        %1374 = vmatpush1.msra.mxu0 0.0
        %1375 = vmatprep.subr.mxu0 0.0
        %1376 = vmatpush1.msra.mxu0 0.0
        %1377 = vmatprep.subr.mxu0 0.0
        %1378 = vmatpush1.msra.mxu0 0.0
        %1379 = vmatprep.subr.mxu0 0.0
        %1380 = vmatpush1.msra.mxu0 0.0
        %1381 = vmatprep.subr.mxu0 0.0
        %1382 = vmatpush1.msra.mxu0 0.0
        %1383 = vmatprep.subr.mxu0 0.0
        %1384 = vmatpush1.msra.mxu0 0.0
        %1385 = vmatprep.subr.mxu0 0.0
        %1386 = vmatpush1.msra.mxu0 0.0
        %1387 = vmatprep.subr.mxu0 0.0
        %1388 = vmatpush1.msra.mxu0 0.0
        %1389 = vmatprep.subr.mxu0 0.0
        %1390 = vmatpush1.msra.mxu0 0.0
        %1391 = vmatprep.subr.mxu0 0.0
        %1392 = vmatpush1.msra.mxu0 0.0
        %1393 = vmatprep.subr.mxu0 0.0
        %1394 = vmatpush1.msra.mxu0 0.0
        %1395 = vmatprep.subr.mxu0 0.0
        %1396 = vmatpush1.msra.mxu0 0.0
        %1397 = vmatprep.subr.mxu0 0.0
        %1398 = vmatpush1.msra.mxu0 0.0
        %1399 = vmatprep.subr.mxu0 0.0
        %1400 = vmatpush1.msra.mxu0 0.0
        %1401 = vmatprep.subr.mxu0 0.0
        %1402 = vmatpush1.msra.mxu0 0.0
        %1403 = vmatprep.subr.mxu0 0.0
        %1404 = vmatpush1.msra.mxu0 0.0
        %1405 = vmatprep.subr.mxu0 0.0
        %1406 = vmatpush1.msra.mxu0 0.0
        %1407 = vmatprep.mubr.f32.mxu0 0.0
        %1408 = vmatmul.mubr.f32.gmra.mrb[0].mxu0 %v1270
        %v1409 = vpop.f32.mrb[0].mxu0
        %v1410 = vadd.f32 %v1266, %v1409
        %v1411 = vpop.f32.mrb[0].mxu0
        %v1412 = vadd.f32 %v1266, %v1411
        %1413 = vdwg.mxu0
        %v1414 = vmax.f32 %v1339, 0.0
        %v1415 = vmax.f32 %v1341, 0.0
        %v1416 = vmax.f32 %v1410, 0.0
        %v1417 = vmax.f32 %v1412, 0.0
        %v1418 = vsel %vm714, %v1414, 0.0
        %v1419 = vsel %vm715, %v1415, 0.0
        %v1420 = vsel %vm716, %v1416, 0.0
        %v1421 = vsel %vm717, %v1417, 0.0
        %1422 = vst [vmem:[%s228 + $0x8] sm:$0xff] %v1418
        %1423 = vst [vmem:[%s228 + $0x10] sm:$0xff] %v1419
        %1424 = vst [vmem:[%s228 + $0x18] sm:$0xff] %v1420
        %1425 = vst [vmem:[%s228 + $0x20] sm:$0xff] %v1421
        %1426 = vst [vmem:[%s228 + $0x28] sm:$0xff] 0.0
        %1427 = vst [vmem:[%s228 + $0x30] sm:$0xff] 0.0
        %v1428 = vld [vmem:[%s228] sm:$0xff]
        %v1429 = vld [vmem:[%s228 + $0x8] sm:$0xff]
        %v1430 = vld [vmem:[%s228 + $0x10] sm:$0xff]
        %v1431 = vld [vmem:[%s228 + $0x18] sm:$0xff]
        %v1432 = vld [vmem:[%s228 + $0x20] sm:$0xff]
        %v1433 = vld [vmem:[%s228 + $0x28] sm:$0xff]
        %1439 = vrot.lane.b32.xlu0 %v1428, 3
        %v1440 = vpop.permute.xlu0 %1439
        %1441 = vrot.lane.b32.xlu0 %v1429, 3
        %v1442 = vpop.permute.xlu0 %1441
        %1443 = vrot.lane.b32.xlu0 %v1430, 3
        %v1444 = vpop.permute.xlu0 %1443
        %1445 = vrot.lane.b32.xlu0 %v1431, 3
        %v1446 = vpop.permute.xlu0 %1445
        %1447 = vrot.lane.b32.xlu0 %v1432, 3
        %v1448 = vpop.permute.xlu0 %1447
        %vm1449 = vcmask 23552
        %v1450 = vsel %vm1449, %v1440, %v1442
        %v1451 = vsel %vm1449, %v1442, %v1444
        %v1452 = vsel %vm1449, %v1444, %v1446
        %v1453 = vsel %vm1449, %v1446, %v1448
        %1458 = vst [vmem:[#allocation2] sm:$0xff] %v1450
        %1459 = vst [vmem:[#allocation2 + $0x8] sm:$0xff] %v1451
        %1460 = vst [vmem:[#allocation2 + $0x10] sm:$0xff] %v1452
        %1461 = vst [vmem:[#allocation2 + $0x18] sm:$0xff] %v1453
        %1462 = vrot.lane.b32.xlu0 %v1428, 2
        %v1463 = vpop.permute.xlu0 %1462
        %1464 = vrot.lane.b32.xlu0 %v1429, 2
        %v1465 = vpop.permute.xlu0 %1464
        %1466 = vrot.lane.b32.xlu0 %v1430, 2
        %v1467 = vpop.permute.xlu0 %1466
        %1468 = vrot.lane.b32.xlu0 %v1431, 2
        %v1469 = vpop.permute.xlu0 %1468
        %1470 = vrot.lane.b32.xlu0 %v1432, 2
        %v1471 = vpop.permute.xlu0 %1470
        %vm1472 = vcmask 15360
        %v1473 = vsel %vm1472, %v1463, %v1465
        %v1474 = vsel %vm1472, %v1465, %v1467
        %v1475 = vsel %vm1472, %v1467, %v1469
        %v1476 = vsel %vm1472, %v1469, %v1471
        %1481 = vst [vmem:[#allocation2 + $0x30] sm:$0xff] %v1473
        %1482 = vst [vmem:[#allocation2 + $0x38] sm:$0xff] %v1474
        %1483 = vst [vmem:[#allocation2 + $0x40] sm:$0xff] %v1475
        %1484 = vst [vmem:[#allocation2 + $0x48] sm:$0xff] %v1476
        %1485 = vrot.lane.b32.xlu0 %v1428, 1
        %v1486 = vpop.permute.xlu0 %1485
        %1487 = vrot.lane.b32.xlu0 %v1429, 1
        %v1488 = vpop.permute.xlu0 %1487
        %1489 = vrot.lane.b32.xlu0 %v1430, 1
        %v1490 = vpop.permute.xlu0 %1489
        %1491 = vrot.lane.b32.xlu0 %v1431, 1
        %v1492 = vpop.permute.xlu0 %1491
        %1493 = vrot.lane.b32.xlu0 %v1432, 1
        %v1494 = vpop.permute.xlu0 %1493
        %v1495 = vsel %vm411, %v1486, %v1488
        %v1496 = vsel %vm411, %v1488, %v1490
        %v1497 = vsel %vm411, %v1490, %v1492
        %v1498 = vsel %vm411, %v1492, %v1494
        %1503 = vst [vmem:[#allocation2 + $0x60] sm:$0xff] %v1495
        %1504 = vst [vmem:[#allocation2 + $0x68] sm:$0xff] %v1496
        %1505 = vst [vmem:[#allocation2 + $0x70] sm:$0xff] %v1497
        %1506 = vst [vmem:[#allocation2 + $0x78] sm:$0xff] %v1498
        %1507 = vst [vmem:[#allocation2 + $0x90] sm:$0xff] %v1429
        %1508 = vst [vmem:[#allocation2 + $0x98] sm:$0xff] %v1430
        %1509 = vst [vmem:[#allocation2 + $0xa0] sm:$0xff] %v1431
        %1510 = vst [vmem:[#allocation2 + $0xa8] sm:$0xff] %v1432
        %1512 = vrot.lane.b32.xlu0 %v1429, 127
        %v1513 = vpop.permute.xlu0 %1512
        %1514 = vrot.lane.b32.xlu0 %v1430, 127
        %v1515 = vpop.permute.xlu0 %1514
        %1516 = vrot.lane.b32.xlu0 %v1431, 127
        %v1517 = vpop.permute.xlu0 %1516
        %1518 = vrot.lane.b32.xlu0 %v1432, 127
        %v1519 = vpop.permute.xlu0 %1518
        %1520 = vrot.lane.b32.xlu0 %v1433, 127
        %v1521 = vpop.permute.xlu0 %1520
        %v1522 = vsel %vm439, %v1513, %v1515
        %v1523 = vsel %vm439, %v1515, %v1517
        %v1524 = vsel %vm439, %v1517, %v1519
        %v1525 = vsel %vm439, %v1519, %v1521
        %1530 = vst [vmem:[#allocation2 + $0xc0] sm:$0xff] %v1522
        %1531 = vst [vmem:[#allocation2 + $0xc8] sm:$0xff] %v1523
        %1532 = vst [vmem:[#allocation2 + $0xd0] sm:$0xff] %v1524
        %1533 = vst [vmem:[#allocation2 + $0xd8] sm:$0xff] %v1525
        %1534 = vrot.lane.b32.xlu0 %v1429, 126
        %v1535 = vpop.permute.xlu0 %1534
        %1536 = vrot.lane.b32.xlu0 %v1430, 126
        %v1537 = vpop.permute.xlu0 %1536
        %1538 = vrot.lane.b32.xlu0 %v1431, 126
        %v1539 = vpop.permute.xlu0 %1538
        %1540 = vrot.lane.b32.xlu0 %v1432, 126
        %v1541 = vpop.permute.xlu0 %1540
        %1542 = vrot.lane.b32.xlu0 %v1433, 126
        %v1543 = vpop.permute.xlu0 %1542
        %vm1544 = vcmask 1031168
        %v1545 = vsel %vm1544, %v1535, %v1537
        %v1546 = vsel %vm1544, %v1537, %v1539
        %v1547 = vsel %vm1544, %v1539, %v1541
        %v1548 = vsel %vm1544, %v1541, %v1543
        %1553 = vst [vmem:[#allocation2 + $0xf0] sm:$0xff] %v1545
        %1554 = vst [vmem:[#allocation2 + $0xf8] sm:$0xff] %v1546
        %1555 = vst [vmem:[#allocation2 + $0x100] sm:$0xff] %v1547
        %1556 = vst [vmem:[#allocation2 + $0x108] sm:$0xff] %v1548
        %1557 = vrot.lane.b32.xlu0 %v1429, 125
        %v1558 = vpop.permute.xlu0 %1557
        %1559 = vrot.lane.b32.xlu0 %v1430, 125
        %v1560 = vpop.permute.xlu0 %1559
        %1561 = vrot.lane.b32.xlu0 %v1431, 125
        %v1562 = vpop.permute.xlu0 %1561
        %1563 = vrot.lane.b32.xlu0 %v1432, 125
        %v1564 = vpop.permute.xlu0 %1563
        %1565 = vrot.lane.b32.xlu0 %v1433, 125
        %v1566 = vpop.permute.xlu0 %1565
        %vm1567 = vcmask 1022976
        %v1568 = vsel %vm1567, %v1558, %v1560
        %v1569 = vsel %vm1567, %v1560, %v1562
        %v1570 = vsel %vm1567, %v1562, %v1564
        %v1571 = vsel %vm1567, %v1564, %v1566
        %1576 = vst [vmem:[#allocation2 + $0x120] sm:$0xff] %v1568
        %1577 = vst [vmem:[#allocation2 + $0x128] sm:$0xff] %v1569
        %1578 = vst [vmem:[#allocation2 + $0x130] sm:$0xff] %v1570
        %1579 = vst [vmem:[#allocation2 + $0x138] sm:$0xff] %v1571
        %s1580 = scalar_lea.vmem %s1, 24
        %v1581 = vld [vmem:[%s1580] sm:$0xff]
        %v1582 = vld [vmem:[#allocation2] sm:$0xff]
        %v1583 = vld [vmem:[#allocation2 + $0x8] sm:$0xff]
        %v1584 = vld [vmem:[#allocation2 + $0x10] sm:$0xff]
        %v1585 = vld [vmem:[#allocation2 + $0x18] sm:$0xff]
        %v1586 = vld [vmem:[#allocation2 + $0x30] sm:$0xff]
        %v1587 = vld [vmem:[#allocation2 + $0x38] sm:$0xff]
        %v1588 = vld [vmem:[#allocation2 + $0x40] sm:$0xff]
        %v1589 = vld [vmem:[#allocation2 + $0x48] sm:$0xff]
        %v1590 = vld [vmem:[#allocation2 + $0x60] sm:$0xff]
        %v1591 = vld [vmem:[#allocation2 + $0x68] sm:$0xff]
        %v1592 = vld [vmem:[#allocation2 + $0x70] sm:$0xff]
        %v1593 = vld [vmem:[#allocation2 + $0x78] sm:$0xff]
        %v1594 = vld [vmem:[#allocation2 + $0x90] sm:$0xff]
        %v1595 = vld [vmem:[#allocation2 + $0x98] sm:$0xff]
        %v1596 = vld [vmem:[#allocation2 + $0xa0] sm:$0xff]
        %v1597 = vld [vmem:[#allocation2 + $0xa8] sm:$0xff]
        %v1598 = vld [vmem:[#allocation2 + $0xc0] sm:$0xff]
        %v1599 = vld [vmem:[#allocation2 + $0xc8] sm:$0xff]
        %v1600 = vld [vmem:[#allocation2 + $0xd0] sm:$0xff]
        %v1601 = vld [vmem:[#allocation2 + $0xd8] sm:$0xff]
        %v1602 = vld [vmem:[#allocation2 + $0xf0] sm:$0xff]
        %v1603 = vld [vmem:[#allocation2 + $0xf8] sm:$0xff]
        %v1604 = vld [vmem:[#allocation2 + $0x100] sm:$0xff]
        %v1605 = vld [vmem:[#allocation2 + $0x108] sm:$0xff]
        %v1606 = vld [vmem:[#allocation2 + $0x120] sm:$0xff]
        %v1607 = vld [vmem:[#allocation2 + $0x128] sm:$0xff]
        %v1608 = vld [vmem:[#allocation2 + $0x130] sm:$0xff]
        %v1609 = vld [vmem:[#allocation2 + $0x138] sm:$0xff]
        %s1610 = scalar_lea.vmem %s2, 24
        %v1611 = vld [vmem:[%s1610] sm:$0xff]
        %1613 = vset.pattern.permute.xlu0 0
        %1614 = vperm.xlu0 %1613, %v1611
        %v1615 = vpop.permute.xlu0 %1614
        %v1618 = vsel %vm1268, %v1581, 0
        %1620 = vmatprep.subr.mxu0 %v1583
        %1621 = vmatpush1.msra.mxu0 %v1582
        %1622 = vmatprep.subr.mxu0 %v1587
        %1623 = vmatpush1.msra.mxu0 %v1586
        %1624 = vmatprep.subr.mxu0 %v1591
        %1625 = vmatpush1.msra.mxu0 %v1590
        %1626 = vmatprep.subr.mxu0 %v1595
        %1627 = vmatpush1.msra.mxu0 %v1594
        %1628 = vmatprep.subr.mxu0 %v1599
        %1629 = vmatpush1.msra.mxu0 %v1598
        %1630 = vmatprep.subr.mxu0 %v1603
        %1631 = vmatpush1.msra.mxu0 %v1602
        %1632 = vmatprep.subr.mxu0 %v1607
        %1633 = vmatpush1.msra.mxu0 %v1606
        %1634 = vmatprep.subr.mxu0 0.0
        %1635 = vmatpush1.msra.mxu0 0.0
        %1636 = vmatprep.subr.mxu0 0.0
        %1637 = vmatpush1.msra.mxu0 0.0
        %1638 = vmatprep.subr.mxu0 0.0
        %1639 = vmatpush1.msra.mxu0 0.0
        %1640 = vmatprep.subr.mxu0 0.0
        %1641 = vmatpush1.msra.mxu0 0.0
        %1642 = vmatprep.subr.mxu0 0.0
        %1643 = vmatpush1.msra.mxu0 0.0
        %1644 = vmatprep.subr.mxu0 0.0
        %1645 = vmatpush1.msra.mxu0 0.0
        %1646 = vmatprep.subr.mxu0 0.0
        %1647 = vmatpush1.msra.mxu0 0.0
        %1648 = vmatprep.subr.mxu0 0.0
        %1649 = vmatpush1.msra.mxu0 0.0
        %1650 = vmatprep.subr.mxu0 0.0
        %1651 = vmatpush1.msra.mxu0 0.0
        %1652 = vmatprep.subr.mxu0 0.0
        %1653 = vmatpush1.msra.mxu0 0.0
        %1654 = vmatprep.subr.mxu0 0.0
        %1655 = vmatpush1.msra.mxu0 0.0
        %1656 = vmatprep.subr.mxu0 0.0
        %1657 = vmatpush1.msra.mxu0 0.0
        %1658 = vmatprep.subr.mxu0 0.0
        %1659 = vmatpush1.msra.mxu0 0.0
        %1660 = vmatprep.subr.mxu0 0.0
        %1661 = vmatpush1.msra.mxu0 0.0
        %1662 = vmatprep.subr.mxu0 0.0
        %1663 = vmatpush1.msra.mxu0 0.0
        %1664 = vmatprep.subr.mxu0 0.0
        %1665 = vmatpush1.msra.mxu0 0.0
        %1666 = vmatprep.subr.mxu0 0.0
        %1667 = vmatpush1.msra.mxu0 0.0
        %1668 = vmatprep.subr.mxu0 0.0
        %1669 = vmatpush1.msra.mxu0 0.0
        %1670 = vmatprep.subr.mxu0 0.0
        %1671 = vmatpush1.msra.mxu0 0.0
        %1672 = vmatprep.subr.mxu0 0.0
        %1673 = vmatpush1.msra.mxu0 0.0
        %1674 = vmatprep.subr.mxu0 0.0
        %1675 = vmatpush1.msra.mxu0 0.0
        %1676 = vmatprep.subr.mxu0 0.0
        %1677 = vmatpush1.msra.mxu0 0.0
        %1678 = vmatprep.subr.mxu0 0.0
        %1679 = vmatpush1.msra.mxu0 0.0
        %1680 = vmatprep.subr.mxu0 0.0
        %1681 = vmatpush1.msra.mxu0 0.0
        %1682 = vmatprep.subr.mxu0 0.0
        %1683 = vmatpush1.msra.mxu0 0.0
        %1684 = vmatprep.mubr.f32.mxu0 0.0
        %1685 = vmatmul.mubr.f32.gmra.mrb[0].mxu0 %v1618
        %v1686 = vpop.f32.mrb[0].mxu0
        %v1687 = vadd.f32 %v1615, %v1686
        %v1688 = vpop.f32.mrb[0].mxu0
        %v1689 = vadd.f32 %v1615, %v1688
        %1690 = vdwg.mxu0
        %1691 = vmatprep.subr.mxu0 %v1585
        %1692 = vmatpush1.msra.mxu0 %v1584
        %1693 = vmatprep.subr.mxu0 %v1589
        %1694 = vmatpush1.msra.mxu0 %v1588
        %1695 = vmatprep.subr.mxu0 %v1593
        %1696 = vmatpush1.msra.mxu0 %v1592
        %1697 = vmatprep.subr.mxu0 %v1597
        %1698 = vmatpush1.msra.mxu0 %v1596
        %1699 = vmatprep.subr.mxu0 %v1601
        %1700 = vmatpush1.msra.mxu0 %v1600
        %1701 = vmatprep.subr.mxu0 %v1605
        %1702 = vmatpush1.msra.mxu0 %v1604
        %1703 = vmatprep.subr.mxu0 %v1609
        %1704 = vmatpush1.msra.mxu0 %v1608
        %1705 = vmatprep.subr.mxu0 0.0
        %1706 = vmatpush1.msra.mxu0 0.0
        %1707 = vmatprep.subr.mxu0 0.0
        %1708 = vmatpush1.msra.mxu0 0.0
        %1709 = vmatprep.subr.mxu0 0.0
        %1710 = vmatpush1.msra.mxu0 0.0
        %1711 = vmatprep.subr.mxu0 0.0
        %1712 = vmatpush1.msra.mxu0 0.0
        %1713 = vmatprep.subr.mxu0 0.0
        %1714 = vmatpush1.msra.mxu0 0.0
        %1715 = vmatprep.subr.mxu0 0.0
        %1716 = vmatpush1.msra.mxu0 0.0
        %1717 = vmatprep.subr.mxu0 0.0
        %1718 = vmatpush1.msra.mxu0 0.0
        %1719 = vmatprep.subr.mxu0 0.0
        %1720 = vmatpush1.msra.mxu0 0.0
        %1721 = vmatprep.subr.mxu0 0.0
        %1722 = vmatpush1.msra.mxu0 0.0
        %1723 = vmatprep.subr.mxu0 0.0
        %1724 = vmatpush1.msra.mxu0 0.0
        %1725 = vmatprep.subr.mxu0 0.0
        %1726 = vmatpush1.msra.mxu0 0.0
        %1727 = vmatprep.subr.mxu0 0.0
        %1728 = vmatpush1.msra.mxu0 0.0
        %1729 = vmatprep.subr.mxu0 0.0
        %1730 = vmatpush1.msra.mxu0 0.0
        %1731 = vmatprep.subr.mxu0 0.0
        %1732 = vmatpush1.msra.mxu0 0.0
        %1733 = vmatprep.subr.mxu0 0.0
        %1734 = vmatpush1.msra.mxu0 0.0
        %1735 = vmatprep.subr.mxu0 0.0
        %1736 = vmatpush1.msra.mxu0 0.0
        %1737 = vmatprep.subr.mxu0 0.0
        %1738 = vmatpush1.msra.mxu0 0.0
        %1739 = vmatprep.subr.mxu0 0.0
        %1740 = vmatpush1.msra.mxu0 0.0
        %1741 = vmatprep.subr.mxu0 0.0
        %1742 = vmatpush1.msra.mxu0 0.0
        %1743 = vmatprep.subr.mxu0 0.0
        %1744 = vmatpush1.msra.mxu0 0.0
        %1745 = vmatprep.subr.mxu0 0.0
        %1746 = vmatpush1.msra.mxu0 0.0
        %1747 = vmatprep.subr.mxu0 0.0
        %1748 = vmatpush1.msra.mxu0 0.0
        %1749 = vmatprep.subr.mxu0 0.0
        %1750 = vmatpush1.msra.mxu0 0.0
        %1751 = vmatprep.subr.mxu0 0.0
        %1752 = vmatpush1.msra.mxu0 0.0
        %1753 = vmatprep.subr.mxu0 0.0
        %1754 = vmatpush1.msra.mxu0 0.0
        %1755 = vmatprep.mubr.f32.mxu0 0.0
        %1756 = vmatmul.mubr.f32.gmra.mrb[0].mxu0 %v1618
        %v1757 = vpop.f32.mrb[0].mxu0
        %v1758 = vadd.f32 %v1615, %v1757
        %v1759 = vpop.f32.mrb[0].mxu0
        %v1760 = vadd.f32 %v1615, %v1759
        %1761 = vdwg.mxu0
        %v1762 = vmax.f32 %v1687, 0.0
        %v1763 = vmax.f32 %v1689, 0.0
        %v1764 = vmax.f32 %v1758, 0.0
        %v1765 = vmax.f32 %v1760, 0.0
        %v1766 = vsel %vm714, %v1762, 0.0
        %v1767 = vsel %vm715, %v1763, 0.0
        %v1768 = vsel %vm716, %v1764, 0.0
        %v1769 = vsel %vm717, %v1765, 0.0
        %1770 = vst [vmem:[#allocation3 + $0x8] sm:$0xff] %v1766
        %1771 = vst [vmem:[#allocation3 + $0x10] sm:$0xff] %v1767
        %1772 = vst [vmem:[#allocation3 + $0x18] sm:$0xff] %v1768
        %1773 = vst [vmem:[#allocation3 + $0x20] sm:$0xff] %v1769
        %1774 = vst [vmem:[#allocation3 + $0x28] sm:$0xff] 0.0
        %1775 = vst [vmem:[#allocation3 + $0x30] sm:$0xff] 0.0
        %v1776 = vld [vmem:[%s226] sm:$0xff]
        %v1777 = vld [vmem:[%s226 + $0x8] sm:$0xff]
        %v1778 = vld [vmem:[%s226 + $0x10] sm:$0xff]
        %v1779 = vld [vmem:[%s226 + $0x18] sm:$0xff]
        %v1780 = vld [vmem:[%s226 + $0x20] sm:$0xff]
        %v1781 = vld [vmem:[%s226 + $0x28] sm:$0xff]
        %1788 = vrot.lane.b32.xlu0 %v1776, 96
        %v1789 = vpop.permute.xlu0 %1788
        %1790 = vrot.lane.b32.xlu0 %v1777, 96
        %v1791 = vpop.permute.xlu0 %1790
        %1792 = vrot.lane.b32.xlu0 %v1778, 96
        %v1793 = vpop.permute.xlu0 %1792
        %1794 = vrot.lane.b32.xlu0 %v1779, 96
        %v1795 = vpop.permute.xlu0 %1794
        %1796 = vrot.lane.b32.xlu0 %v1780, 96
        %v1797 = vpop.permute.xlu0 %1796
        %1798 = vrot.lane.b32.xlu0 %v1781, 96
        %v1799 = vpop.permute.xlu0 %1798
        %v1800 = vsel %vm485, %v1789, %v1791
        %v1801 = vsel %vm485, %v1791, %v1793
        %v1802 = vsel %vm485, %v1793, %v1795
        %v1803 = vsel %vm485, %v1795, %v1797
        %v1804 = vsel %vm485, %v1797, %v1799
        %1811 = vst [vmem:[#allocation2] sm:$0xff] %v1800
        %1812 = vst [vmem:[#allocation2 + $0x8] sm:$0xff] %v1801
        %1813 = vst [vmem:[#allocation2 + $0x10] sm:$0xff] %v1802
        %1814 = vst [vmem:[#allocation2 + $0x18] sm:$0xff] %v1803
        %1815 = vst [vmem:[#allocation2 + $0x20] sm:$0xff] %v1804
        %1816 = vst.msk [vmem:[#allocation2 + $0x28] sm:$0xff] %vm1167, %v1799
        %1817 = vrot.lane.b32.xlu0 %v1776, 95
        %v1818 = vpop.permute.xlu0 %1817
        %1819 = vrot.lane.b32.xlu0 %v1777, 95
        %v1820 = vpop.permute.xlu0 %1819
        %1821 = vrot.lane.b32.xlu0 %v1778, 95
        %v1822 = vpop.permute.xlu0 %1821
        %1823 = vrot.lane.b32.xlu0 %v1779, 95
        %v1824 = vpop.permute.xlu0 %1823
        %1825 = vrot.lane.b32.xlu0 %v1780, 95
        %v1826 = vpop.permute.xlu0 %1825
        %1827 = vrot.lane.b32.xlu0 %v1781, 95
        %v1828 = vpop.permute.xlu0 %1827
        %v1829 = vsel %vm508, %v1818, %v1820
        %v1830 = vsel %vm508, %v1820, %v1822
        %v1831 = vsel %vm508, %v1822, %v1824
        %v1832 = vsel %vm508, %v1824, %v1826
        %v1833 = vsel %vm508, %v1826, %v1828
        %1840 = vst [vmem:[#allocation2 + $0x30] sm:$0xff] %v1829
        %1841 = vst [vmem:[#allocation2 + $0x38] sm:$0xff] %v1830
        %1842 = vst [vmem:[#allocation2 + $0x40] sm:$0xff] %v1831
        %1843 = vst [vmem:[#allocation2 + $0x48] sm:$0xff] %v1832
        %1844 = vst [vmem:[#allocation2 + $0x50] sm:$0xff] %v1833
        %1845 = vst.msk [vmem:[#allocation2 + $0x58] sm:$0xff] %vm1167, %v1828
        %1846 = vrot.lane.b32.xlu0 %v1776, 94
        %v1847 = vpop.permute.xlu0 %1846
        %1848 = vrot.lane.b32.xlu0 %v1777, 94
        %v1849 = vpop.permute.xlu0 %1848
        %1850 = vrot.lane.b32.xlu0 %v1778, 94
        %v1851 = vpop.permute.xlu0 %1850
        %1852 = vrot.lane.b32.xlu0 %v1779, 94
        %v1853 = vpop.permute.xlu0 %1852
        %1854 = vrot.lane.b32.xlu0 %v1780, 94
        %v1855 = vpop.permute.xlu0 %1854
        %1856 = vrot.lane.b32.xlu0 %v1781, 94
        %v1857 = vpop.permute.xlu0 %1856
        %vm1858 = vcmask 769024
        %v1859 = vsel %vm1858, %v1847, %v1849
        %v1860 = vsel %vm1858, %v1849, %v1851
        %v1861 = vsel %vm1858, %v1851, %v1853
        %v1862 = vsel %vm1858, %v1853, %v1855
        %v1863 = vsel %vm1858, %v1855, %v1857
        %1870 = vst [vmem:[#allocation2 + $0x60] sm:$0xff] %v1859
        %1871 = vst [vmem:[#allocation2 + $0x68] sm:$0xff] %v1860
        %1872 = vst [vmem:[#allocation2 + $0x70] sm:$0xff] %v1861
        %1873 = vst [vmem:[#allocation2 + $0x78] sm:$0xff] %v1862
        %1874 = vst [vmem:[#allocation2 + $0x80] sm:$0xff] %v1863
        %1875 = vst.msk [vmem:[#allocation2 + $0x88] sm:$0xff] %vm1167, %v1857
        %1876 = vrot.lane.b32.xlu0 %v1776, 93
        %v1877 = vpop.permute.xlu0 %1876
        %1878 = vrot.lane.b32.xlu0 %v1777, 93
        %v1879 = vpop.permute.xlu0 %1878
        %1880 = vrot.lane.b32.xlu0 %v1778, 93
        %v1881 = vpop.permute.xlu0 %1880
        %1882 = vrot.lane.b32.xlu0 %v1779, 93
        %v1883 = vpop.permute.xlu0 %1882
        %1884 = vrot.lane.b32.xlu0 %v1780, 93
        %v1885 = vpop.permute.xlu0 %1884
        %1886 = vrot.lane.b32.xlu0 %v1781, 93
        %v1887 = vpop.permute.xlu0 %1886
        %vm1888 = vcmask 760832
        %v1889 = vsel %vm1888, %v1877, %v1879
        %v1890 = vsel %vm1888, %v1879, %v1881
        %v1891 = vsel %vm1888, %v1881, %v1883
        %v1892 = vsel %vm1888, %v1883, %v1885
        %v1893 = vsel %vm1888, %v1885, %v1887
        %1900 = vst [vmem:[#allocation2 + $0x90] sm:$0xff] %v1889
        %1901 = vst [vmem:[#allocation2 + $0x98] sm:$0xff] %v1890
        %1902 = vst [vmem:[#allocation2 + $0xa0] sm:$0xff] %v1891
        %1903 = vst [vmem:[#allocation2 + $0xa8] sm:$0xff] %v1892
        %1904 = vst [vmem:[#allocation2 + $0xb0] sm:$0xff] %v1893
        %1905 = vst.msk [vmem:[#allocation2 + $0xb8] sm:$0xff] %vm1167, %v1887
        %1906 = vrot.lane.b32.xlu0 %v1776, 92
        %v1907 = vpop.permute.xlu0 %1906
        %1908 = vrot.lane.b32.xlu0 %v1777, 92
        %v1909 = vpop.permute.xlu0 %1908
        %1910 = vrot.lane.b32.xlu0 %v1778, 92
        %v1911 = vpop.permute.xlu0 %1910
        %1912 = vrot.lane.b32.xlu0 %v1779, 92
        %v1913 = vpop.permute.xlu0 %1912
        %1914 = vrot.lane.b32.xlu0 %v1780, 92
        %v1915 = vpop.permute.xlu0 %1914
        %1916 = vrot.lane.b32.xlu0 %v1781, 92
        %v1917 = vpop.permute.xlu0 %1916
        %vm1918 = vcmask 752640
        %v1919 = vsel %vm1918, %v1907, %v1909
        %v1920 = vsel %vm1918, %v1909, %v1911
        %v1921 = vsel %vm1918, %v1911, %v1913
        %v1922 = vsel %vm1918, %v1913, %v1915
        %v1923 = vsel %vm1918, %v1915, %v1917
        %1930 = vst [vmem:[#allocation2 + $0xc0] sm:$0xff] %v1919
        %1931 = vst [vmem:[#allocation2 + $0xc8] sm:$0xff] %v1920
        %1932 = vst [vmem:[#allocation2 + $0xd0] sm:$0xff] %v1921
        %1933 = vst [vmem:[#allocation2 + $0xd8] sm:$0xff] %v1922
        %1934 = vst [vmem:[#allocation2 + $0xe0] sm:$0xff] %v1923
        %1935 = vst.msk [vmem:[#allocation2 + $0xe8] sm:$0xff] %vm1167, %v1917
        %1936 = vrot.lane.b32.xlu0 %v1776, 91
        %v1937 = vpop.permute.xlu0 %1936
        %1938 = vrot.lane.b32.xlu0 %v1777, 91
        %v1939 = vpop.permute.xlu0 %1938
        %1940 = vrot.lane.b32.xlu0 %v1778, 91
        %v1941 = vpop.permute.xlu0 %1940
        %1942 = vrot.lane.b32.xlu0 %v1779, 91
        %v1943 = vpop.permute.xlu0 %1942
        %1944 = vrot.lane.b32.xlu0 %v1780, 91
        %v1945 = vpop.permute.xlu0 %1944
        %1946 = vrot.lane.b32.xlu0 %v1781, 91
        %v1947 = vpop.permute.xlu0 %1946
        %vm1948 = vcmask 744448
        %v1949 = vsel %vm1948, %v1937, %v1939
        %v1950 = vsel %vm1948, %v1939, %v1941
        %v1951 = vsel %vm1948, %v1941, %v1943
        %v1952 = vsel %vm1948, %v1943, %v1945
        %v1953 = vsel %vm1948, %v1945, %v1947
        %1960 = vst [vmem:[#allocation2 + $0xf0] sm:$0xff] %v1949
        %1961 = vst [vmem:[#allocation2 + $0xf8] sm:$0xff] %v1950
        %1962 = vst [vmem:[#allocation2 + $0x100] sm:$0xff] %v1951
        %1963 = vst [vmem:[#allocation2 + $0x108] sm:$0xff] %v1952
        %1964 = vst [vmem:[#allocation2 + $0x110] sm:$0xff] %v1953
        %1965 = vst.msk [vmem:[#allocation2 + $0x118] sm:$0xff] %vm1167, %v1947
        %1966 = vrot.lane.b32.xlu0 %v1776, 90
        %v1967 = vpop.permute.xlu0 %1966
        %1968 = vrot.lane.b32.xlu0 %v1777, 90
        %v1969 = vpop.permute.xlu0 %1968
        %1970 = vrot.lane.b32.xlu0 %v1778, 90
        %v1971 = vpop.permute.xlu0 %1970
        %1972 = vrot.lane.b32.xlu0 %v1779, 90
        %v1973 = vpop.permute.xlu0 %1972
        %1974 = vrot.lane.b32.xlu0 %v1780, 90
        %v1975 = vpop.permute.xlu0 %1974
        %1976 = vrot.lane.b32.xlu0 %v1781, 90
        %v1977 = vpop.permute.xlu0 %1976
        %vm1978 = vcmask 736256
        %v1979 = vsel %vm1978, %v1967, %v1969
        %v1980 = vsel %vm1978, %v1969, %v1971
        %v1981 = vsel %vm1978, %v1971, %v1973
        %v1982 = vsel %vm1978, %v1973, %v1975
        %v1983 = vsel %vm1978, %v1975, %v1977
        %1990 = vst [vmem:[#allocation2 + $0x120] sm:$0xff] %v1979
        %1991 = vst [vmem:[#allocation2 + $0x128] sm:$0xff] %v1980
        %1992 = vst [vmem:[#allocation2 + $0x130] sm:$0xff] %v1981
        %1993 = vst [vmem:[#allocation2 + $0x138] sm:$0xff] %v1982
        %1994 = vst [vmem:[#allocation2 + $0x140] sm:$0xff] %v1983
        %1995 = vst.msk [vmem:[#allocation2 + $0x148] sm:$0xff] %vm1167, %v1977
        %s1996 = scalar_lea.vmem %s1, 32
        %v1997 = vld [vmem:[%s1996] sm:$0xff]
        %v1998 = vld [vmem:[#allocation2] sm:$0xff]
        %v1999 = vld [vmem:[#allocation2 + $0x8] sm:$0xff]
        %v2000 = vld [vmem:[#allocation2 + $0x10] sm:$0xff]
        %v2001 = vld [vmem:[#allocation2 + $0x18] sm:$0xff]
        %v2002 = vld [vmem:[#allocation2 + $0x20] sm:$0xff]
        %v2003 = vld [vmem:[#allocation2 + $0x28] sm:$0xff]
        %v2004 = vld [vmem:[#allocation2 + $0x30] sm:$0xff]
        %v2005 = vld [vmem:[#allocation2 + $0x38] sm:$0xff]
        %v2006 = vld [vmem:[#allocation2 + $0x40] sm:$0xff]
        %v2007 = vld [vmem:[#allocation2 + $0x48] sm:$0xff]
        %v2008 = vld [vmem:[#allocation2 + $0x50] sm:$0xff]
        %v2009 = vld [vmem:[#allocation2 + $0x58] sm:$0xff]
        %v2010 = vld [vmem:[#allocation2 + $0x60] sm:$0xff]
        %v2011 = vld [vmem:[#allocation2 + $0x68] sm:$0xff]
        %v2012 = vld [vmem:[#allocation2 + $0x70] sm:$0xff]
        %v2013 = vld [vmem:[#allocation2 + $0x78] sm:$0xff]
        %v2014 = vld [vmem:[#allocation2 + $0x80] sm:$0xff]
        %v2015 = vld [vmem:[#allocation2 + $0x88] sm:$0xff]
        %v2016 = vld [vmem:[#allocation2 + $0x90] sm:$0xff]
        %v2017 = vld [vmem:[#allocation2 + $0x98] sm:$0xff]
        %v2018 = vld [vmem:[#allocation2 + $0xa0] sm:$0xff]
        %v2019 = vld [vmem:[#allocation2 + $0xa8] sm:$0xff]
        %v2020 = vld [vmem:[#allocation2 + $0xb0] sm:$0xff]
        %v2021 = vld [vmem:[#allocation2 + $0xb8] sm:$0xff]
        %v2022 = vld [vmem:[#allocation2 + $0xc0] sm:$0xff]
        %v2023 = vld [vmem:[#allocation2 + $0xc8] sm:$0xff]
        %v2024 = vld [vmem:[#allocation2 + $0xd0] sm:$0xff]
        %v2025 = vld [vmem:[#allocation2 + $0xd8] sm:$0xff]
        %v2026 = vld [vmem:[#allocation2 + $0xe0] sm:$0xff]
        %v2027 = vld [vmem:[#allocation2 + $0xe8] sm:$0xff]
        %v2028 = vld [vmem:[#allocation2 + $0xf0] sm:$0xff]
        %v2029 = vld [vmem:[#allocation2 + $0xf8] sm:$0xff]
        %v2030 = vld [vmem:[#allocation2 + $0x100] sm:$0xff]
        %v2031 = vld [vmem:[#allocation2 + $0x108] sm:$0xff]
        %v2032 = vld [vmem:[#allocation2 + $0x110] sm:$0xff]
        %v2033 = vld [vmem:[#allocation2 + $0x118] sm:$0xff]
        %v2034 = vld [vmem:[#allocation2 + $0x120] sm:$0xff]
        %v2035 = vld [vmem:[#allocation2 + $0x128] sm:$0xff]
        %v2036 = vld [vmem:[#allocation2 + $0x130] sm:$0xff]
        %v2037 = vld [vmem:[#allocation2 + $0x138] sm:$0xff]
        %v2038 = vld [vmem:[#allocation2 + $0x140] sm:$0xff]
        %v2039 = vld [vmem:[#allocation2 + $0x148] sm:$0xff]
        %s2040 = scalar_lea.vmem %s2, 32
        %v2041 = vld [vmem:[%s2040] sm:$0xff]
        %2043 = vset.pattern.permute.xlu0 0
        %2044 = vperm.xlu0 %2043, %v2041
        %v2045 = vpop.permute.xlu0 %2044
        %v2048 = vsel %vm1268, %v1997, 0
        %2050 = vmatprep.subr.mxu0 %v1999
        %2051 = vmatpush1.msra.mxu0 %v1998
        %2052 = vmatprep.subr.mxu0 %v2005
        %2053 = vmatpush1.msra.mxu0 %v2004
        %2054 = vmatprep.subr.mxu0 %v2011
        %2055 = vmatpush1.msra.mxu0 %v2010
        %2056 = vmatprep.subr.mxu0 %v2017
        %2057 = vmatpush1.msra.mxu0 %v2016
        %2058 = vmatprep.subr.mxu0 %v2023
        %2059 = vmatpush1.msra.mxu0 %v2022
        %2060 = vmatprep.subr.mxu0 %v2029
        %2061 = vmatpush1.msra.mxu0 %v2028
        %2062 = vmatprep.subr.mxu0 %v2035
        %2063 = vmatpush1.msra.mxu0 %v2034
        %2064 = vmatprep.subr.mxu0 0.0
        %2065 = vmatpush1.msra.mxu0 0.0
        %2066 = vmatprep.subr.mxu0 0.0
        %2067 = vmatpush1.msra.mxu0 0.0
        %2068 = vmatprep.subr.mxu0 0.0
        %2069 = vmatpush1.msra.mxu0 0.0
        %2070 = vmatprep.subr.mxu0 0.0
        %2071 = vmatpush1.msra.mxu0 0.0
        %2072 = vmatprep.subr.mxu0 0.0
        %2073 = vmatpush1.msra.mxu0 0.0
        %2074 = vmatprep.subr.mxu0 0.0
        %2075 = vmatpush1.msra.mxu0 0.0
        %2076 = vmatprep.subr.mxu0 0.0
        %2077 = vmatpush1.msra.mxu0 0.0
        %2078 = vmatprep.subr.mxu0 0.0
        %2079 = vmatpush1.msra.mxu0 0.0
        %2080 = vmatprep.subr.mxu0 0.0
        %2081 = vmatpush1.msra.mxu0 0.0
        %2082 = vmatprep.subr.mxu0 0.0
        %2083 = vmatpush1.msra.mxu0 0.0
        %2084 = vmatprep.subr.mxu0 0.0
        %2085 = vmatpush1.msra.mxu0 0.0
        %2086 = vmatprep.subr.mxu0 0.0
        %2087 = vmatpush1.msra.mxu0 0.0
        %2088 = vmatprep.subr.mxu0 0.0
        %2089 = vmatpush1.msra.mxu0 0.0
        %2090 = vmatprep.subr.mxu0 0.0
        %2091 = vmatpush1.msra.mxu0 0.0
        %2092 = vmatprep.subr.mxu0 0.0
        %2093 = vmatpush1.msra.mxu0 0.0
        %2094 = vmatprep.subr.mxu0 0.0
        %2095 = vmatpush1.msra.mxu0 0.0
        %2096 = vmatprep.subr.mxu0 0.0
        %2097 = vmatpush1.msra.mxu0 0.0
        %2098 = vmatprep.subr.mxu0 0.0
        %2099 = vmatpush1.msra.mxu0 0.0
        %2100 = vmatprep.subr.mxu0 0.0
        %2101 = vmatpush1.msra.mxu0 0.0
        %2102 = vmatprep.subr.mxu0 0.0
        %2103 = vmatpush1.msra.mxu0 0.0
        %2104 = vmatprep.subr.mxu0 0.0
        %2105 = vmatpush1.msra.mxu0 0.0
        %2106 = vmatprep.subr.mxu0 0.0
        %2107 = vmatpush1.msra.mxu0 0.0
        %2108 = vmatprep.subr.mxu0 0.0
        %2109 = vmatpush1.msra.mxu0 0.0
        %2110 = vmatprep.subr.mxu0 0.0
        %2111 = vmatpush1.msra.mxu0 0.0
        %2112 = vmatprep.subr.mxu0 0.0
        %2113 = vmatpush1.msra.mxu0 0.0
        %2114 = vmatprep.mubr.f32.mxu0 0.0
        %2115 = vmatmul.mubr.f32.gmra.mrb[0].mxu0 %v2048
        %v2116 = vpop.f32.mrb[0].mxu0
        %v2117 = vadd.f32 %v2045, %v2116
        %v2118 = vpop.f32.mrb[0].mxu0
        %v2119 = vadd.f32 %v2045, %v2118
        %2120 = vdwg.mxu0
        %2121 = vmatprep.subr.mxu0 %v2001
        %2122 = vmatpush1.msra.mxu0 %v2000
        %2123 = vmatprep.subr.mxu0 %v2007
        %2124 = vmatpush1.msra.mxu0 %v2006
        %2125 = vmatprep.subr.mxu0 %v2013
        %2126 = vmatpush1.msra.mxu0 %v2012
        %2127 = vmatprep.subr.mxu0 %v2019
        %2128 = vmatpush1.msra.mxu0 %v2018
        %2129 = vmatprep.subr.mxu0 %v2025
        %2130 = vmatpush1.msra.mxu0 %v2024
        %2131 = vmatprep.subr.mxu0 %v2031
        %2132 = vmatpush1.msra.mxu0 %v2030
        %2133 = vmatprep.subr.mxu0 %v2037
        %2134 = vmatpush1.msra.mxu0 %v2036
        %2135 = vmatprep.subr.mxu0 0.0
        %2136 = vmatpush1.msra.mxu0 0.0
        %2137 = vmatprep.subr.mxu0 0.0
        %2138 = vmatpush1.msra.mxu0 0.0
        %2139 = vmatprep.subr.mxu0 0.0
        %2140 = vmatpush1.msra.mxu0 0.0
        %2141 = vmatprep.subr.mxu0 0.0
        %2142 = vmatpush1.msra.mxu0 0.0
        %2143 = vmatprep.subr.mxu0 0.0
        %2144 = vmatpush1.msra.mxu0 0.0
        %2145 = vmatprep.subr.mxu0 0.0
        %2146 = vmatpush1.msra.mxu0 0.0
        %2147 = vmatprep.subr.mxu0 0.0
        %2148 = vmatpush1.msra.mxu0 0.0
        %2149 = vmatprep.subr.mxu0 0.0
        %2150 = vmatpush1.msra.mxu0 0.0
        %2151 = vmatprep.subr.mxu0 0.0
        %2152 = vmatpush1.msra.mxu0 0.0
        %2153 = vmatprep.subr.mxu0 0.0
        %2154 = vmatpush1.msra.mxu0 0.0
        %2155 = vmatprep.subr.mxu0 0.0
        %2156 = vmatpush1.msra.mxu0 0.0
        %2157 = vmatprep.subr.mxu0 0.0
        %2158 = vmatpush1.msra.mxu0 0.0
        %2159 = vmatprep.subr.mxu0 0.0
        %2160 = vmatpush1.msra.mxu0 0.0
        %2161 = vmatprep.subr.mxu0 0.0
        %2162 = vmatpush1.msra.mxu0 0.0
        %2163 = vmatprep.subr.mxu0 0.0
        %2164 = vmatpush1.msra.mxu0 0.0
        %2165 = vmatprep.subr.mxu0 0.0
        %2166 = vmatpush1.msra.mxu0 0.0
        %2167 = vmatprep.subr.mxu0 0.0
        %2168 = vmatpush1.msra.mxu0 0.0
        %2169 = vmatprep.subr.mxu0 0.0
        %2170 = vmatpush1.msra.mxu0 0.0
        %2171 = vmatprep.subr.mxu0 0.0
        %2172 = vmatpush1.msra.mxu0 0.0
        %2173 = vmatprep.subr.mxu0 0.0
        %2174 = vmatpush1.msra.mxu0 0.0
        %2175 = vmatprep.subr.mxu0 0.0
        %2176 = vmatpush1.msra.mxu0 0.0
        %2177 = vmatprep.subr.mxu0 0.0
        %2178 = vmatpush1.msra.mxu0 0.0
        %2179 = vmatprep.subr.mxu0 0.0
        %2180 = vmatpush1.msra.mxu0 0.0
        %2181 = vmatprep.subr.mxu0 0.0
        %2182 = vmatpush1.msra.mxu0 0.0
        %2183 = vmatprep.subr.mxu0 0.0
        %2184 = vmatpush1.msra.mxu0 0.0
        %2185 = vmatprep.mubr.f32.mxu0 0.0
        %2186 = vmatmul.mubr.f32.gmra.mrb[0].mxu0 %v2048
        %v2187 = vpop.f32.mrb[0].mxu0
        %v2188 = vadd.f32 %v2045, %v2187
        %v2189 = vpop.f32.mrb[0].mxu0
        %v2190 = vadd.f32 %v2045, %v2189
        %2191 = vdwg.mxu0
        %2192 = vmatprep.subr.mxu0 %v2003
        %2193 = vmatpush1.msra.mxu0 %v2002
        %2194 = vmatprep.subr.mxu0 %v2009
        %2195 = vmatpush1.msra.mxu0 %v2008
        %2196 = vmatprep.subr.mxu0 %v2015
        %2197 = vmatpush1.msra.mxu0 %v2014
        %2198 = vmatprep.subr.mxu0 %v2021
        %2199 = vmatpush1.msra.mxu0 %v2020
        %2200 = vmatprep.subr.mxu0 %v2027
        %2201 = vmatpush1.msra.mxu0 %v2026
        %2202 = vmatprep.subr.mxu0 %v2033
        %2203 = vmatpush1.msra.mxu0 %v2032
        %2204 = vmatprep.subr.mxu0 %v2039
        %2205 = vmatpush1.msra.mxu0 %v2038
        %2206 = vmatprep.subr.mxu0 0.0
        %2207 = vmatpush1.msra.mxu0 0.0
        %2208 = vmatprep.subr.mxu0 0.0
        %2209 = vmatpush1.msra.mxu0 0.0
        %2210 = vmatprep.subr.mxu0 0.0
        %2211 = vmatpush1.msra.mxu0 0.0
        %2212 = vmatprep.subr.mxu0 0.0
        %2213 = vmatpush1.msra.mxu0 0.0
        %2214 = vmatprep.subr.mxu0 0.0
        %2215 = vmatpush1.msra.mxu0 0.0
        %2216 = vmatprep.subr.mxu0 0.0
        %2217 = vmatpush1.msra.mxu0 0.0
        %2218 = vmatprep.subr.mxu0 0.0
        %2219 = vmatpush1.msra.mxu0 0.0
        %2220 = vmatprep.subr.mxu0 0.0
        %2221 = vmatpush1.msra.mxu0 0.0
        %2222 = vmatprep.subr.mxu0 0.0
        %2223 = vmatpush1.msra.mxu0 0.0
        %2224 = vmatprep.subr.mxu0 0.0
        %2225 = vmatpush1.msra.mxu0 0.0
        %2226 = vmatprep.subr.mxu0 0.0
        %2227 = vmatpush1.msra.mxu0 0.0
        %2228 = vmatprep.subr.mxu0 0.0
        %2229 = vmatpush1.msra.mxu0 0.0
        %2230 = vmatprep.subr.mxu0 0.0
        %2231 = vmatpush1.msra.mxu0 0.0
        %2232 = vmatprep.subr.mxu0 0.0
        %2233 = vmatpush1.msra.mxu0 0.0
        %2234 = vmatprep.subr.mxu0 0.0
        %2235 = vmatpush1.msra.mxu0 0.0
        %2236 = vmatprep.subr.mxu0 0.0
        %2237 = vmatpush1.msra.mxu0 0.0
        %2238 = vmatprep.subr.mxu0 0.0
        %2239 = vmatpush1.msra.mxu0 0.0
        %2240 = vmatprep.subr.mxu0 0.0
        %2241 = vmatpush1.msra.mxu0 0.0
        %2242 = vmatprep.subr.mxu0 0.0
        %2243 = vmatpush1.msra.mxu0 0.0
        %2244 = vmatprep.subr.mxu0 0.0
        %2245 = vmatpush1.msra.mxu0 0.0
        %2246 = vmatprep.subr.mxu0 0.0
        %2247 = vmatpush1.msra.mxu0 0.0
        %2248 = vmatprep.subr.mxu0 0.0
        %2249 = vmatpush1.msra.mxu0 0.0
        %2250 = vmatprep.subr.mxu0 0.0
        %2251 = vmatpush1.msra.mxu0 0.0
        %2252 = vmatprep.subr.mxu0 0.0
        %2253 = vmatpush1.msra.mxu0 0.0
        %2254 = vmatprep.subr.mxu0 0.0
        %2255 = vmatpush1.msra.mxu0 0.0
        %2256 = vmatprep.mubr.f32.mxu0 0.0
        %2257 = vmatmul.mubr.f32.gmra.mrb[0].mxu0 %v2048
        %v2258 = vpop.f32.mrb[0].mxu0
        %v2259 = vadd.f32 %v2045, %v2258
        %v2260 = vpop.f32.mrb[0].mxu0
        %v2261 = vadd.f32 %v2045, %v2260
        %2262 = vdwg.mxu0
        %v2263 = vmax.f32 %v2117, 0.0
        %v2264 = vmax.f32 %v2119, 0.0
        %v2265 = vmax.f32 %v2188, 0.0
        %v2266 = vmax.f32 %v2190, 0.0
        %v2267 = vmax.f32 %v2259, 0.0
        %v2268 = vmax.f32 %v2261, 0.0
        %vm2269 = vcmp.lt.s32.totalorder %v305, 10
        %vm2270 = vcmp.lt.s32.totalorder %v306, 10
        %vm2271 = vcmp.lt.s32.totalorder %v307, 10
        %vm2272 = vcmp.lt.s32.totalorder %v308, 10
        %vm2273 = vcmp.lt.s32.totalorder %v309, 10
        %vm2274 = vcmp.lt.s32.totalorder %v310, 10
        %v2275 = vsel %vm2269, %v2263, 0.0
        %v2276 = vsel %vm2270, %v2264, 0.0
        %v2277 = vsel %vm2271, %v2265, 0.0
        %v2278 = vsel %vm2272, %v2266, 0.0
        %v2279 = vsel %vm2273, %v2267, 0.0
        %v2280 = vsel %vm2274, %v2268, 0.0
        %2281 = vst [vmem:[%s228 + $0x8] sm:$0xff] %v2275
        %2282 = vst [vmem:[%s228 + $0x10] sm:$0xff] %v2276
        %2283 = vst [vmem:[%s228 + $0x18] sm:$0xff] %v2277
        %2284 = vst [vmem:[%s228 + $0x20] sm:$0xff] %v2278
        %2285 = vst [vmem:[%s228 + $0x28] sm:$0xff] %v2279
        %2286 = vst.msk [vmem:[%s228 + $0x30] sm:$0xff] %vm1167, %v2280
        %vm2287 = vcmask 1048064
        %2288 = vst.msk [vmem:[%s228 + $0x30] sm:$0xff] %vm2287, 0.0
        %v2289 = vld [vmem:[%s228] sm:$0xff]
        %v2290 = vld [vmem:[%s228 + $0x8] sm:$0xff]
        %v2291 = vld [vmem:[%s228 + $0x10] sm:$0xff]
        %v2292 = vld [vmem:[%s228 + $0x18] sm:$0xff]
        %v2293 = vld [vmem:[%s228 + $0x20] sm:$0xff]
        %v2294 = vld [vmem:[%s228 + $0x28] sm:$0xff]
        %v2295 = vld [vmem:[%s228 + $0x30] sm:$0xff]
        %2301 = vrot.lane.b32.xlu0 %v2289, 3
        %v2302 = vpop.permute.xlu0 %2301
        %2303 = vrot.lane.b32.xlu0 %v2290, 3
        %v2304 = vpop.permute.xlu0 %2303
        %2305 = vrot.lane.b32.xlu0 %v2291, 3
        %v2306 = vpop.permute.xlu0 %2305
        %2307 = vrot.lane.b32.xlu0 %v2292, 3
        %v2308 = vpop.permute.xlu0 %2307
        %2309 = vrot.lane.b32.xlu0 %v2293, 3
        %v2310 = vpop.permute.xlu0 %2309
        %v2311 = vsel %vm1449, %v2302, %v2304
        %v2312 = vsel %vm1449, %v2304, %v2306
        %v2313 = vsel %vm1449, %v2306, %v2308
        %v2314 = vsel %vm1449, %v2308, %v2310
        %2319 = vst [vmem:[#allocation2] sm:$0xff] %v2311
        %2320 = vst [vmem:[#allocation2 + $0x8] sm:$0xff] %v2312
        %2321 = vst [vmem:[#allocation2 + $0x10] sm:$0xff] %v2313
        %2322 = vst [vmem:[#allocation2 + $0x18] sm:$0xff] %v2314
        %2324 = vrot.lane.b32.xlu0 %v2290, 99
        %v2325 = vpop.permute.xlu0 %2324
        %2326 = vrot.lane.b32.xlu0 %v2291, 99
        %v2327 = vpop.permute.xlu0 %2326
        %2328 = vrot.lane.b32.xlu0 %v2292, 99
        %v2329 = vpop.permute.xlu0 %2328
        %2330 = vrot.lane.b32.xlu0 %v2293, 99
        %v2331 = vpop.permute.xlu0 %2330
        %2332 = vrot.lane.b32.xlu0 %v2294, 99
        %v2333 = vpop.permute.xlu0 %2332
        %vm2334 = vcmask 809984
        %v2335 = vsel %vm2334, %v2325, %v2327
        %v2336 = vsel %vm2334, %v2327, %v2329
        %v2337 = vsel %vm2334, %v2329, %v2331
        %v2338 = vsel %vm2334, %v2331, %v2333
        %2343 = vst [vmem:[#allocation2 + $0x30] sm:$0xff] %v2335
        %2344 = vst [vmem:[#allocation2 + $0x38] sm:$0xff] %v2336
        %2345 = vst [vmem:[#allocation2 + $0x40] sm:$0xff] %v2337
        %2346 = vst [vmem:[#allocation2 + $0x48] sm:$0xff] %v2338
        %2347 = vrot.lane.b32.xlu0 %v2290, 67
        %v2348 = vpop.permute.xlu0 %2347
        %2349 = vrot.lane.b32.xlu0 %v2291, 67
        %v2350 = vpop.permute.xlu0 %2349
        %2351 = vrot.lane.b32.xlu0 %v2292, 67
        %v2352 = vpop.permute.xlu0 %2351
        %2353 = vrot.lane.b32.xlu0 %v2293, 67
        %v2354 = vpop.permute.xlu0 %2353
        %2355 = vrot.lane.b32.xlu0 %v2294, 67
        %v2356 = vpop.permute.xlu0 %2355
        %vm2357 = vcmask 547840
        %v2358 = vsel %vm2357, %v2348, %v2350
        %v2359 = vsel %vm2357, %v2350, %v2352
        %v2360 = vsel %vm2357, %v2352, %v2354
        %v2361 = vsel %vm2357, %v2354, %v2356
        %2366 = vst [vmem:[#allocation2 + $0x60] sm:$0xff] %v2358
        %2367 = vst [vmem:[#allocation2 + $0x68] sm:$0xff] %v2359
        %2368 = vst [vmem:[#allocation2 + $0x70] sm:$0xff] %v2360
        %2369 = vst [vmem:[#allocation2 + $0x78] sm:$0xff] %v2361
        %2370 = vrot.lane.b32.xlu0 %v2290, 35
        %v2371 = vpop.permute.xlu0 %2370
        %2372 = vrot.lane.b32.xlu0 %v2291, 35
        %v2373 = vpop.permute.xlu0 %2372
        %2374 = vrot.lane.b32.xlu0 %v2292, 35
        %v2375 = vpop.permute.xlu0 %2374
        %2376 = vrot.lane.b32.xlu0 %v2293, 35
        %v2377 = vpop.permute.xlu0 %2376
        %2378 = vrot.lane.b32.xlu0 %v2294, 35
        %v2379 = vpop.permute.xlu0 %2378
        %vm2380 = vcmask 285696
        %v2381 = vsel %vm2380, %v2371, %v2373
        %v2382 = vsel %vm2380, %v2373, %v2375
        %v2383 = vsel %vm2380, %v2375, %v2377
        %v2384 = vsel %vm2380, %v2377, %v2379
        %2389 = vst [vmem:[#allocation2 + $0x90] sm:$0xff] %v2381
        %2390 = vst [vmem:[#allocation2 + $0x98] sm:$0xff] %v2382
        %2391 = vst [vmem:[#allocation2 + $0xa0] sm:$0xff] %v2383
        %2392 = vst [vmem:[#allocation2 + $0xa8] sm:$0xff] %v2384
        %2393 = vrot.lane.b32.xlu0 %v2294, 3
        %v2394 = vpop.permute.xlu0 %2393
        %v2395 = vsel %vm1449, %v2310, %v2394
        %2397 = vst [vmem:[#allocation2 + $0xc0] sm:$0xff] %v2312
        %2398 = vst [vmem:[#allocation2 + $0xc8] sm:$0xff] %v2313
        %2399 = vst [vmem:[#allocation2 + $0xd0] sm:$0xff] %v2314
        %2400 = vst [vmem:[#allocation2 + $0xd8] sm:$0xff] %v2395
        %2402 = vrot.lane.b32.xlu0 %v2295, 99
        %v2403 = vpop.permute.xlu0 %2402
        %v2404 = vsel %vm2334, %v2333, %v2403
        %2406 = vst [vmem:[#allocation2 + $0xf0] sm:$0xff] %v2336
        %2407 = vst [vmem:[#allocation2 + $0xf8] sm:$0xff] %v2337
        %2408 = vst [vmem:[#allocation2 + $0x100] sm:$0xff] %v2338
        %2409 = vst [vmem:[#allocation2 + $0x108] sm:$0xff] %v2404
        %2410 = vrot.lane.b32.xlu0 %v2295, 67
        %v2411 = vpop.permute.xlu0 %2410
        %v2412 = vsel %vm2357, %v2356, %v2411
        %2414 = vst [vmem:[#allocation2 + $0x120] sm:$0xff] %v2359
        %2415 = vst [vmem:[#allocation2 + $0x128] sm:$0xff] %v2360
        %2416 = vst [vmem:[#allocation2 + $0x130] sm:$0xff] %v2361
        %2417 = vst [vmem:[#allocation2 + $0x138] sm:$0xff] %v2412
        %s2418 = scalar_lea.vmem %s1, 40
        %v2419 = vld [vmem:[%s2418] sm:$0xff]
        %v2420 = vld [vmem:[#allocation2] sm:$0xff]
        %v2421 = vld [vmem:[#allocation2 + $0x8] sm:$0xff]
        %v2422 = vld [vmem:[#allocation2 + $0x10] sm:$0xff]
        %v2423 = vld [vmem:[#allocation2 + $0x18] sm:$0xff]
        %v2424 = vld [vmem:[#allocation2 + $0x30] sm:$0xff]
        %v2425 = vld [vmem:[#allocation2 + $0x38] sm:$0xff]
        %v2426 = vld [vmem:[#allocation2 + $0x40] sm:$0xff]
        %v2427 = vld [vmem:[#allocation2 + $0x48] sm:$0xff]
        %v2428 = vld [vmem:[#allocation2 + $0x60] sm:$0xff]
        %v2429 = vld [vmem:[#allocation2 + $0x68] sm:$0xff]
        %v2430 = vld [vmem:[#allocation2 + $0x70] sm:$0xff]
        %v2431 = vld [vmem:[#allocation2 + $0x78] sm:$0xff]
        %v2432 = vld [vmem:[#allocation2 + $0x90] sm:$0xff]
        %v2433 = vld [vmem:[#allocation2 + $0x98] sm:$0xff]
        %v2434 = vld [vmem:[#allocation2 + $0xa0] sm:$0xff]
        %v2435 = vld [vmem:[#allocation2 + $0xa8] sm:$0xff]
        %v2436 = vld [vmem:[#allocation2 + $0xc0] sm:$0xff]
        %v2437 = vld [vmem:[#allocation2 + $0xc8] sm:$0xff]
        %v2438 = vld [vmem:[#allocation2 + $0xd0] sm:$0xff]
        %v2439 = vld [vmem:[#allocation2 + $0xd8] sm:$0xff]
        %v2440 = vld [vmem:[#allocation2 + $0xf0] sm:$0xff]
        %v2441 = vld [vmem:[#allocation2 + $0xf8] sm:$0xff]
        %v2442 = vld [vmem:[#allocation2 + $0x100] sm:$0xff]
        %v2443 = vld [vmem:[#allocation2 + $0x108] sm:$0xff]
        %v2444 = vld [vmem:[#allocation2 + $0x120] sm:$0xff]
        %v2445 = vld [vmem:[#allocation2 + $0x128] sm:$0xff]
        %v2446 = vld [vmem:[#allocation2 + $0x130] sm:$0xff]
        %v2447 = vld [vmem:[#allocation2 + $0x138] sm:$0xff]
        %s2448 = scalar_lea.vmem %s2, 40
        %v2449 = vld [vmem:[%s2448] sm:$0xff]
        %2451 = vset.pattern.permute.xlu0 0
        %2452 = vperm.xlu0 %2451, %v2449
        %v2453 = vpop.permute.xlu0 %2452
        %v2456 = vsel %vm1268, %v2419, 0
        %2458 = vmatprep.subr.mxu0 %v2421
        %2459 = vmatpush1.msra.mxu0 %v2420
        %2460 = vmatprep.subr.mxu0 %v2425
        %2461 = vmatpush1.msra.mxu0 %v2424
        %2462 = vmatprep.subr.mxu0 %v2429
        %2463 = vmatpush1.msra.mxu0 %v2428
        %2464 = vmatprep.subr.mxu0 %v2433
        %2465 = vmatpush1.msra.mxu0 %v2432
        %2466 = vmatprep.subr.mxu0 %v2437
        %2467 = vmatpush1.msra.mxu0 %v2436
        %2468 = vmatprep.subr.mxu0 %v2441
        %2469 = vmatpush1.msra.mxu0 %v2440
        %2470 = vmatprep.subr.mxu0 %v2445
        %2471 = vmatpush1.msra.mxu0 %v2444
        %2472 = vmatprep.subr.mxu0 0.0
        %2473 = vmatpush1.msra.mxu0 0.0
        %2474 = vmatprep.subr.mxu0 0.0
        %2475 = vmatpush1.msra.mxu0 0.0
        %2476 = vmatprep.subr.mxu0 0.0
        %2477 = vmatpush1.msra.mxu0 0.0
        %2478 = vmatprep.subr.mxu0 0.0
        %2479 = vmatpush1.msra.mxu0 0.0
        %2480 = vmatprep.subr.mxu0 0.0
        %2481 = vmatpush1.msra.mxu0 0.0
        %2482 = vmatprep.subr.mxu0 0.0
        %2483 = vmatpush1.msra.mxu0 0.0
        %2484 = vmatprep.subr.mxu0 0.0
        %2485 = vmatpush1.msra.mxu0 0.0
        %2486 = vmatprep.subr.mxu0 0.0
        %2487 = vmatpush1.msra.mxu0 0.0
        %2488 = vmatprep.subr.mxu0 0.0
        %2489 = vmatpush1.msra.mxu0 0.0
        %2490 = vmatprep.subr.mxu0 0.0
        %2491 = vmatpush1.msra.mxu0 0.0
        %2492 = vmatprep.subr.mxu0 0.0
        %2493 = vmatpush1.msra.mxu0 0.0
        %2494 = vmatprep.subr.mxu0 0.0
        %2495 = vmatpush1.msra.mxu0 0.0
        %2496 = vmatprep.subr.mxu0 0.0
        %2497 = vmatpush1.msra.mxu0 0.0
        %2498 = vmatprep.subr.mxu0 0.0
        %2499 = vmatpush1.msra.mxu0 0.0
        %2500 = vmatprep.subr.mxu0 0.0
        %2501 = vmatpush1.msra.mxu0 0.0
        %2502 = vmatprep.subr.mxu0 0.0
        %2503 = vmatpush1.msra.mxu0 0.0
        %2504 = vmatprep.subr.mxu0 0.0
        %2505 = vmatpush1.msra.mxu0 0.0
        %2506 = vmatprep.subr.mxu0 0.0
        %2507 = vmatpush1.msra.mxu0 0.0
        %2508 = vmatprep.subr.mxu0 0.0
        %2509 = vmatpush1.msra.mxu0 0.0
        %2510 = vmatprep.subr.mxu0 0.0
        %2511 = vmatpush1.msra.mxu0 0.0
        %2512 = vmatprep.subr.mxu0 0.0
        %2513 = vmatpush1.msra.mxu0 0.0
        %2514 = vmatprep.subr.mxu0 0.0
        %2515 = vmatpush1.msra.mxu0 0.0
        %2516 = vmatprep.subr.mxu0 0.0
        %2517 = vmatpush1.msra.mxu0 0.0
        %2518 = vmatprep.subr.mxu0 0.0
        %2519 = vmatpush1.msra.mxu0 0.0
        %2520 = vmatprep.subr.mxu0 0.0
        %2521 = vmatpush1.msra.mxu0 0.0
        %2522 = vmatprep.mubr.f32.mxu0 0.0
        %2523 = vmatmul.mubr.f32.gmra.mrb[0].mxu0 %v2456
        %v2524 = vpop.f32.mrb[0].mxu0
        %v2525 = vadd.f32 %v2453, %v2524
        %v2526 = vpop.f32.mrb[0].mxu0
        %v2527 = vadd.f32 %v2453, %v2526
        %2528 = vdwg.mxu0
        %2529 = vmatprep.subr.mxu0 %v2423
        %2530 = vmatpush1.msra.mxu0 %v2422
        %2531 = vmatprep.subr.mxu0 %v2427
        %2532 = vmatpush1.msra.mxu0 %v2426
        %2533 = vmatprep.subr.mxu0 %v2431
        %2534 = vmatpush1.msra.mxu0 %v2430
        %2535 = vmatprep.subr.mxu0 %v2435
        %2536 = vmatpush1.msra.mxu0 %v2434
        %2537 = vmatprep.subr.mxu0 %v2439
        %2538 = vmatpush1.msra.mxu0 %v2438
        %2539 = vmatprep.subr.mxu0 %v2443
        %2540 = vmatpush1.msra.mxu0 %v2442
        %2541 = vmatprep.subr.mxu0 %v2447
        %2542 = vmatpush1.msra.mxu0 %v2446
        %2543 = vmatprep.subr.mxu0 0.0
        %2544 = vmatpush1.msra.mxu0 0.0
        %2545 = vmatprep.subr.mxu0 0.0
        %2546 = vmatpush1.msra.mxu0 0.0
        %2547 = vmatprep.subr.mxu0 0.0
        %2548 = vmatpush1.msra.mxu0 0.0
        %2549 = vmatprep.subr.mxu0 0.0
        %2550 = vmatpush1.msra.mxu0 0.0
        %2551 = vmatprep.subr.mxu0 0.0
        %2552 = vmatpush1.msra.mxu0 0.0
        %2553 = vmatprep.subr.mxu0 0.0
        %2554 = vmatpush1.msra.mxu0 0.0
        %2555 = vmatprep.subr.mxu0 0.0
        %2556 = vmatpush1.msra.mxu0 0.0
        %2557 = vmatprep.subr.mxu0 0.0
        %2558 = vmatpush1.msra.mxu0 0.0
        %2559 = vmatprep.subr.mxu0 0.0
        %2560 = vmatpush1.msra.mxu0 0.0
        %2561 = vmatprep.subr.mxu0 0.0
        %2562 = vmatpush1.msra.mxu0 0.0
        %2563 = vmatprep.subr.mxu0 0.0
        %2564 = vmatpush1.msra.mxu0 0.0
        %2565 = vmatprep.subr.mxu0 0.0
        %2566 = vmatpush1.msra.mxu0 0.0
        %2567 = vmatprep.subr.mxu0 0.0
        %2568 = vmatpush1.msra.mxu0 0.0
        %2569 = vmatprep.subr.mxu0 0.0
        %2570 = vmatpush1.msra.mxu0 0.0
        %2571 = vmatprep.subr.mxu0 0.0
        %2572 = vmatpush1.msra.mxu0 0.0
        %2573 = vmatprep.subr.mxu0 0.0
        %2574 = vmatpush1.msra.mxu0 0.0
        %2575 = vmatprep.subr.mxu0 0.0
        %2576 = vmatpush1.msra.mxu0 0.0
        %2577 = vmatprep.subr.mxu0 0.0
        %2578 = vmatpush1.msra.mxu0 0.0
        %2579 = vmatprep.subr.mxu0 0.0
        %2580 = vmatpush1.msra.mxu0 0.0
        %2581 = vmatprep.subr.mxu0 0.0
        %2582 = vmatpush1.msra.mxu0 0.0
        %2583 = vmatprep.subr.mxu0 0.0
        %2584 = vmatpush1.msra.mxu0 0.0
        %2585 = vmatprep.subr.mxu0 0.0
        %2586 = vmatpush1.msra.mxu0 0.0
        %2587 = vmatprep.subr.mxu0 0.0
        %2588 = vmatpush1.msra.mxu0 0.0
        %2589 = vmatprep.subr.mxu0 0.0
        %2590 = vmatpush1.msra.mxu0 0.0
        %2591 = vmatprep.subr.mxu0 0.0
        %2592 = vmatpush1.msra.mxu0 0.0
        %2593 = vmatprep.mubr.f32.mxu0 0.0
        %2594 = vmatmul.mubr.f32.gmra.mrb[0].mxu0 %v2456
        %v2595 = vpop.f32.mrb[0].mxu0
        %v2596 = vadd.f32 %v2453, %v2595
        %v2597 = vpop.f32.mrb[0].mxu0
        %v2598 = vadd.f32 %v2453, %v2597
        %2599 = vdwg.mxu0
        %v2600 = vmax.f32 %v2525, 0.0
        %v2601 = vmax.f32 %v2527, 0.0
        %v2602 = vmax.f32 %v2596, 0.0
        %v2603 = vmax.f32 %v2598, 0.0
        %v2604 = vsel %vm714, %v2600, 0.0
        %v2605 = vsel %vm715, %v2601, 0.0
        %v2606 = vsel %vm716, %v2602, 0.0
        %v2607 = vsel %vm717, %v2603, 0.0
        %2608 = vst [vmem:[%s230 + $0x8] sm:$0xff] %v2604
        %2609 = vst [vmem:[%s230 + $0x10] sm:$0xff] %v2605
        %2610 = vst [vmem:[%s230 + $0x18] sm:$0xff] %v2606
        %2611 = vst [vmem:[%s230 + $0x20] sm:$0xff] %v2607
        %2612 = vst [vmem:[%s230 + $0x28] sm:$0xff] 0.0
        %2613 = vst [vmem:[%s230 + $0x30] sm:$0xff] 0.0
        %v2614 = vld [vmem:[%s226 + $0x8] sm:$0xff]
        %v2615 = vld [vmem:[%s226 + $0x10] sm:$0xff]
        %v2616 = vld [vmem:[%s226 + $0x18] sm:$0xff]
        %v2617 = vld [vmem:[%s226 + $0x20] sm:$0xff]
        %v2618 = vld [vmem:[#allocation3 + $0x8] sm:$0xff]
        %v2619 = vld [vmem:[#allocation3 + $0x10] sm:$0xff]
        %v2620 = vld [vmem:[#allocation3 + $0x18] sm:$0xff]
        %v2621 = vld [vmem:[#allocation3 + $0x20] sm:$0xff]
        %v2622 = vld [vmem:[%s230 + $0x8] sm:$0xff]
        %v2623 = vld [vmem:[%s230 + $0x10] sm:$0xff]
        %v2624 = vld [vmem:[%s230 + $0x18] sm:$0xff]
        %v2625 = vld [vmem:[%s230 + $0x20] sm:$0xff]
        %v2626 = vadd.f32 %v2618, %v2622
        %v2627 = vadd.f32 %v2619, %v2623
        %v2628 = vadd.f32 %v2620, %v2624
        %v2629 = vadd.f32 %v2621, %v2625
        %v2630 = vadd.f32 %v2614, %v2626
        %v2631 = vadd.f32 %v2615, %v2627
        %v2632 = vadd.f32 %v2616, %v2628
        %v2633 = vadd.f32 %v2617, %v2629
        %vm2634 = vcmask 130048
        %2635 = vst.msk [vmem:[%s217] sm:$0xff] %vm2634, %v2630
        %2637 = vrot.lane.b32.xlu0 %v2630, 112
        %v2638 = vpop.permute.xlu0 %2637
        %vm2640 = vcmask 261248
        %2641 = vst.msk [vmem:[%s217] sm:$0xff] %vm2640, %v2638
        %2642 = vrot.lane.b32.xlu0 %v2630, 96
        %v2643 = vpop.permute.xlu0 %2642
        %vm2645 = vcmask 392448
        %2646 = vst.msk [vmem:[%s217] sm:$0xff] %vm2645, %v2643
        %2647 = vrot.lane.b32.xlu0 %v2630, 80
        %v2648 = vpop.permute.xlu0 %2647
        %vm2650 = vcmask 523648
        %2651 = vst.msk [vmem:[%s217] sm:$0xff] %vm2650, %v2648
        %2653 = vrot.lane.b32.xlu0 %v2631, 64
        %v2654 = vpop.permute.xlu0 %2653
        %vm2656 = vcmask 654848
        %2657 = vst.msk [vmem:[%s217] sm:$0xff] %vm2656, %v2654
        %2658 = vrot.lane.b32.xlu0 %v2631, 48
        %v2659 = vpop.permute.xlu0 %2658
        %vm2661 = vcmask 786048
        %2662 = vst.msk [vmem:[%s217] sm:$0xff] %vm2661, %v2659
        %2663 = vrot.lane.b32.xlu0 %v2631, 32
        %v2664 = vpop.permute.xlu0 %2663
        %vm2666 = vcmask 917248
        %2667 = vst.msk [vmem:[%s217] sm:$0xff] %vm2666, %v2664
        %2668 = vrot.lane.b32.xlu0 %v2631, 16
        %v2669 = vpop.permute.xlu0 %2668
        %vm2671 = vcmask 1048448
        %2672 = vst.msk [vmem:[%s217] sm:$0xff] %vm2671, %v2669
        %2673 = vst.msk [vmem:[%s217 + $0x8] sm:$0xff] %vm2634, %v2632
        %2675 = vrot.lane.b32.xlu0 %v2632, 112
        %v2676 = vpop.permute.xlu0 %2675
        %2678 = vst.msk [vmem:[%s217 + $0x8] sm:$0xff] %vm2640, %v2676
        %2679 = vrot.lane.b32.xlu0 %v2632, 96
        %v2680 = vpop.permute.xlu0 %2679
        %2682 = vst.msk [vmem:[%s217 + $0x8] sm:$0xff] %vm2645, %v2680
        %2683 = vrot.lane.b32.xlu0 %v2632, 80
        %v2684 = vpop.permute.xlu0 %2683
        %2686 = vst.msk [vmem:[%s217 + $0x8] sm:$0xff] %vm2650, %v2684
        %2688 = vrot.lane.b32.xlu0 %v2633, 64
        %v2689 = vpop.permute.xlu0 %2688
        %2691 = vst.msk [vmem:[%s217 + $0x8] sm:$0xff] %vm2656, %v2689
        %2692 = vrot.lane.b32.xlu0 %v2633, 48
        %v2693 = vpop.permute.xlu0 %2692
        %2695 = vst.msk [vmem:[%s217 + $0x8] sm:$0xff] %vm2661, %v2693
        %2696 = vrot.lane.b32.xlu0 %v2633, 32
        %v2697 = vpop.permute.xlu0 %2696
        %2699 = vst.msk [vmem:[%s217 + $0x8] sm:$0xff] %vm2666, %v2697
        %2700 = vrot.lane.b32.xlu0 %v2633, 16
        %v2701 = vpop.permute.xlu0 %2700
        %2703 = vst.msk [vmem:[%s217 + $0x8] sm:$0xff] %vm2671, %v2701
        %2708 = vrot.lane.b32.xlu0 %v2626, 127
        %v2709 = vpop.permute.xlu0 %2708
        %2710 = vrot.lane.b32.xlu0 %v2627, 127
        %v2711 = vpop.permute.xlu0 %2710
        %2712 = vrot.lane.b32.xlu0 %v2628, 127
        %v2713 = vpop.permute.xlu0 %2712
        %2714 = vrot.lane.b32.xlu0 %v2629, 127
        %v2715 = vpop.permute.xlu0 %2714
        %v2716 = vsel %vm439, %v2709, %v2711
        %v2717 = vsel %vm439, %v2711, %v2713
        %v2718 = vsel %vm439, %v2713, %v2715
        %v2723 = vmax.f32 %v2626, %v2716
        %v2724 = vmax.f32 %v2627, %v2717
        %v2725 = vmax.f32 %v2628, %v2718
        %v2726 = vmax.f32 %v2629, %v2715
        %2731 = vrot.lane.b32.xlu0 %v2723, 96
        %v2732 = vpop.permute.xlu0 %2731
        %2733 = vrot.lane.b32.xlu0 %v2724, 96
        %v2734 = vpop.permute.xlu0 %2733
        %2735 = vrot.lane.b32.xlu0 %v2725, 96
        %v2736 = vpop.permute.xlu0 %2735
        %2737 = vrot.lane.b32.xlu0 %v2726, 96
        %v2738 = vpop.permute.xlu0 %2737
        %v2739 = vsel %vm485, %v2732, %v2734
        %v2740 = vsel %vm485, %v2734, %v2736
        %v2741 = vsel %vm485, %v2736, %v2738
        %v2746 = vmax.f32 %v2723, %v2739
        %v2747 = vmax.f32 %v2724, %v2740
        %v2748 = vmax.f32 %v2725, %v2741
        %v2749 = vmax.f32 %v2726, %v2738
        %v2751 = vsel %vm2634, %v2746, 0
        %2753 = vmatprep.subr.mxu0 0.0
        %2754 = vmatpush1.msra.mxu0 %v319
        %2755 = vmatprep.subr.mxu0 0.0
        %2756 = vmatpush1.msra.mxu0 %v320
        %2757 = vmatprep.subr.mxu0 0.0
        %2758 = vmatpush1.msra.mxu0 0.0
        %2759 = vmatprep.subr.mxu0 0.0
        %2760 = vmatpush1.msra.mxu0 0.0
        %2761 = vmatprep.subr.mxu0 0.0
        %2762 = vmatpush1.msra.mxu0 0.0
        %2763 = vmatprep.subr.mxu0 0.0
        %2764 = vmatpush1.msra.mxu0 0.0
        %2765 = vmatprep.subr.mxu0 0.0
        %2766 = vmatpush1.msra.mxu0 0.0
        %2767 = vmatprep.subr.mxu0 0.0
        %2768 = vmatpush1.msra.mxu0 0.0
        %2769 = vmatprep.subr.mxu0 0.0
        %2770 = vmatpush1.msra.mxu0 0.0
        %2771 = vmatprep.subr.mxu0 0.0
        %2772 = vmatpush1.msra.mxu0 0.0
        %2773 = vmatprep.subr.mxu0 0.0
        %2774 = vmatpush1.msra.mxu0 0.0
        %2775 = vmatprep.subr.mxu0 0.0
        %2776 = vmatpush1.msra.mxu0 0.0
        %2777 = vmatprep.subr.mxu0 0.0
        %2778 = vmatpush1.msra.mxu0 0.0
        %2779 = vmatprep.subr.mxu0 0.0
        %2780 = vmatpush1.msra.mxu0 0.0
        %2781 = vmatprep.subr.mxu0 0.0
        %2782 = vmatpush1.msra.mxu0 0.0
        %2783 = vmatprep.subr.mxu0 0.0
        %2784 = vmatpush1.msra.mxu0 0.0
        %2785 = vmatprep.subr.mxu0 0.0
        %2786 = vmatpush1.msra.mxu0 0.0
        %2787 = vmatprep.subr.mxu0 0.0
        %2788 = vmatpush1.msra.mxu0 0.0
        %2789 = vmatprep.subr.mxu0 0.0
        %2790 = vmatpush1.msra.mxu0 0.0
        %2791 = vmatprep.subr.mxu0 0.0
        %2792 = vmatpush1.msra.mxu0 0.0
        %2793 = vmatprep.subr.mxu0 0.0
        %2794 = vmatpush1.msra.mxu0 0.0
        %2795 = vmatprep.subr.mxu0 0.0
        %2796 = vmatpush1.msra.mxu0 0.0
        %2797 = vmatprep.subr.mxu0 0.0
        %2798 = vmatpush1.msra.mxu0 0.0
        %2799 = vmatprep.subr.mxu0 0.0
        %2800 = vmatpush1.msra.mxu0 0.0
        %2801 = vmatprep.subr.mxu0 0.0
        %2802 = vmatpush1.msra.mxu0 0.0
        %2803 = vmatprep.subr.mxu0 0.0
        %2804 = vmatpush1.msra.mxu0 0.0
        %2805 = vmatprep.subr.mxu0 0.0
        %2806 = vmatpush1.msra.mxu0 0.0
        %2807 = vmatprep.subr.mxu0 0.0
        %2808 = vmatpush1.msra.mxu0 0.0
        %2809 = vmatprep.subr.mxu0 0.0
        %2810 = vmatpush1.msra.mxu0 0.0
        %2811 = vmatprep.subr.mxu0 0.0
        %2812 = vmatpush1.msra.mxu0 0.0
        %2813 = vmatprep.subr.mxu0 0.0
        %2814 = vmatpush1.msra.mxu0 0.0
        %2815 = vmatprep.subr.mxu0 0.0
        %2816 = vmatpush1.msra.mxu0 0.0
        %2817 = vmatprep.mubr.f32.mxu0 0.0
        %2818 = vmatmul.mubr.f32.gmra.mrb[0].mxu0 %v2751
        %v2819 = vpop.f32.mrb[0].mxu0
        %v2820 = vadd.f32 0.0, %v2819
        %v2821 = vpop.f32.mrb[0].mxu0
        %2822 = vdwg.mxu0
        %vm2823 = vcmask 64512
        %2824 = vst.msk [vmem:[%s224] sm:$0xff] %vm2823, %v2820
        %2825 = vrot.lane.b32.xlu0 %v2746, 64
        %v2826 = vpop.permute.xlu0 %2825
        %v2827 = vsel %vm2634, %v2826, 0
        %2829 = vmatprep.subr.mxu0 0.0
        %2830 = vmatpush1.msra.mxu0 %v319
        %2831 = vmatprep.subr.mxu0 0.0
        %2832 = vmatpush1.msra.mxu0 %v320
        %2833 = vmatprep.subr.mxu0 0.0
        %2834 = vmatpush1.msra.mxu0 0.0
        %2835 = vmatprep.subr.mxu0 0.0
        %2836 = vmatpush1.msra.mxu0 0.0
        %2837 = vmatprep.subr.mxu0 0.0
        %2838 = vmatpush1.msra.mxu0 0.0
        %2839 = vmatprep.subr.mxu0 0.0
        %2840 = vmatpush1.msra.mxu0 0.0
        %2841 = vmatprep.subr.mxu0 0.0
        %2842 = vmatpush1.msra.mxu0 0.0
        %2843 = vmatprep.subr.mxu0 0.0
        %2844 = vmatpush1.msra.mxu0 0.0
        %2845 = vmatprep.subr.mxu0 0.0
        %2846 = vmatpush1.msra.mxu0 0.0
        %2847 = vmatprep.subr.mxu0 0.0
        %2848 = vmatpush1.msra.mxu0 0.0
        %2849 = vmatprep.subr.mxu0 0.0
        %2850 = vmatpush1.msra.mxu0 0.0
        %2851 = vmatprep.subr.mxu0 0.0
        %2852 = vmatpush1.msra.mxu0 0.0
        %2853 = vmatprep.subr.mxu0 0.0
        %2854 = vmatpush1.msra.mxu0 0.0
        %2855 = vmatprep.subr.mxu0 0.0
        %2856 = vmatpush1.msra.mxu0 0.0
        %2857 = vmatprep.subr.mxu0 0.0
        %2858 = vmatpush1.msra.mxu0 0.0
        %2859 = vmatprep.subr.mxu0 0.0
        %2860 = vmatpush1.msra.mxu0 0.0
        %2861 = vmatprep.subr.mxu0 0.0
        %2862 = vmatpush1.msra.mxu0 0.0
        %2863 = vmatprep.subr.mxu0 0.0
        %2864 = vmatpush1.msra.mxu0 0.0
        %2865 = vmatprep.subr.mxu0 0.0
        %2866 = vmatpush1.msra.mxu0 0.0
        %2867 = vmatprep.subr.mxu0 0.0
        %2868 = vmatpush1.msra.mxu0 0.0
        %2869 = vmatprep.subr.mxu0 0.0
        %2870 = vmatpush1.msra.mxu0 0.0
        %2871 = vmatprep.subr.mxu0 0.0
        %2872 = vmatpush1.msra.mxu0 0.0
        %2873 = vmatprep.subr.mxu0 0.0
        %2874 = vmatpush1.msra.mxu0 0.0
        %2875 = vmatprep.subr.mxu0 0.0
        %2876 = vmatpush1.msra.mxu0 0.0
        %2877 = vmatprep.subr.mxu0 0.0
        %2878 = vmatpush1.msra.mxu0 0.0
        %2879 = vmatprep.subr.mxu0 0.0
        %2880 = vmatpush1.msra.mxu0 0.0
        %2881 = vmatprep.subr.mxu0 0.0
        %2882 = vmatpush1.msra.mxu0 0.0
        %2883 = vmatprep.subr.mxu0 0.0
        %2884 = vmatpush1.msra.mxu0 0.0
        %2885 = vmatprep.subr.mxu0 0.0
        %2886 = vmatpush1.msra.mxu0 0.0
        %2887 = vmatprep.subr.mxu0 0.0
        %2888 = vmatpush1.msra.mxu0 0.0
        %2889 = vmatprep.subr.mxu0 0.0
        %2890 = vmatpush1.msra.mxu0 0.0
        %2891 = vmatprep.subr.mxu0 0.0
        %2892 = vmatpush1.msra.mxu0 0.0
        %2893 = vmatprep.mubr.f32.mxu0 0.0
        %2894 = vmatmul.mubr.f32.gmra.mrb[0].mxu0 %v2827
        %v2895 = vpop.f32.mrb[0].mxu0
        %v2896 = vadd.f32 0.0, %v2895
        %v2897 = vpop.f32.mrb[0].mxu0
        %2898 = vdwg.mxu0
        %2900 = vrot.lane.b32.xlu0 %v2896, 8
        %v2901 = vpop.permute.xlu0 %2900
        %vm2903 = vcmask 130112
        %2904 = vst.msk [vmem:[%s224] sm:$0xff] %vm2903, %v2901
        %v2906 = vsel %vm2634, %v2747, 0
        %2908 = vmatprep.subr.mxu0 0.0
        %2909 = vmatpush1.msra.mxu0 %v319
        %2910 = vmatprep.subr.mxu0 0.0
        %2911 = vmatpush1.msra.mxu0 %v320
        %2912 = vmatprep.subr.mxu0 0.0
        %2913 = vmatpush1.msra.mxu0 0.0
        %2914 = vmatprep.subr.mxu0 0.0
        %2915 = vmatpush1.msra.mxu0 0.0
        %2916 = vmatprep.subr.mxu0 0.0
        %2917 = vmatpush1.msra.mxu0 0.0
        %2918 = vmatprep.subr.mxu0 0.0
        %2919 = vmatpush1.msra.mxu0 0.0
        %2920 = vmatprep.subr.mxu0 0.0
        %2921 = vmatpush1.msra.mxu0 0.0
        %2922 = vmatprep.subr.mxu0 0.0
        %2923 = vmatpush1.msra.mxu0 0.0
        %2924 = vmatprep.subr.mxu0 0.0
        %2925 = vmatpush1.msra.mxu0 0.0
        %2926 = vmatprep.subr.mxu0 0.0
        %2927 = vmatpush1.msra.mxu0 0.0
        %2928 = vmatprep.subr.mxu0 0.0
        %2929 = vmatpush1.msra.mxu0 0.0
        %2930 = vmatprep.subr.mxu0 0.0
        %2931 = vmatpush1.msra.mxu0 0.0
        %2932 = vmatprep.subr.mxu0 0.0
        %2933 = vmatpush1.msra.mxu0 0.0
        %2934 = vmatprep.subr.mxu0 0.0
        %2935 = vmatpush1.msra.mxu0 0.0
        %2936 = vmatprep.subr.mxu0 0.0
        %2937 = vmatpush1.msra.mxu0 0.0
        %2938 = vmatprep.subr.mxu0 0.0
        %2939 = vmatpush1.msra.mxu0 0.0
        %2940 = vmatprep.subr.mxu0 0.0
        %2941 = vmatpush1.msra.mxu0 0.0
        %2942 = vmatprep.subr.mxu0 0.0
        %2943 = vmatpush1.msra.mxu0 0.0
        %2944 = vmatprep.subr.mxu0 0.0
        %2945 = vmatpush1.msra.mxu0 0.0
        %2946 = vmatprep.subr.mxu0 0.0
        %2947 = vmatpush1.msra.mxu0 0.0
        %2948 = vmatprep.subr.mxu0 0.0
        %2949 = vmatpush1.msra.mxu0 0.0
        %2950 = vmatprep.subr.mxu0 0.0
        %2951 = vmatpush1.msra.mxu0 0.0
        %2952 = vmatprep.subr.mxu0 0.0
        %2953 = vmatpush1.msra.mxu0 0.0
        %2954 = vmatprep.subr.mxu0 0.0
        %2955 = vmatpush1.msra.mxu0 0.0
        %2956 = vmatprep.subr.mxu0 0.0
        %2957 = vmatpush1.msra.mxu0 0.0
        %2958 = vmatprep.subr.mxu0 0.0
        %2959 = vmatpush1.msra.mxu0 0.0
        %2960 = vmatprep.subr.mxu0 0.0
        %2961 = vmatpush1.msra.mxu0 0.0
        %2962 = vmatprep.subr.mxu0 0.0
        %2963 = vmatpush1.msra.mxu0 0.0
        %2964 = vmatprep.subr.mxu0 0.0
        %2965 = vmatpush1.msra.mxu0 0.0
        %2966 = vmatprep.subr.mxu0 0.0
        %2967 = vmatpush1.msra.mxu0 0.0
        %2968 = vmatprep.subr.mxu0 0.0
        %2969 = vmatpush1.msra.mxu0 0.0
        %2970 = vmatprep.subr.mxu0 0.0
        %2971 = vmatpush1.msra.mxu0 0.0
        %2972 = vmatprep.mubr.f32.mxu0 0.0
        %2973 = vmatmul.mubr.f32.gmra.mrb[0].mxu0 %v2906
        %v2974 = vpop.f32.mrb[0].mxu0
        %v2975 = vadd.f32 0.0, %v2974
        %v2976 = vpop.f32.mrb[0].mxu0
        %2977 = vdwg.mxu0
        %2979 = vrot.lane.b32.xlu0 %v2975, 16
        %v2980 = vpop.permute.xlu0 %2979
        %vm2982 = vcmask 195712
        %2983 = vst.msk [vmem:[%s224] sm:$0xff] %vm2982, %v2980
        %2984 = vrot.lane.b32.xlu0 %v2747, 64
        %v2985 = vpop.permute.xlu0 %2984
        %v2986 = vsel %vm2634, %v2985, 0
        %2988 = vmatprep.subr.mxu0 0.0
        %2989 = vmatpush1.msra.mxu0 %v319
        %2990 = vmatprep.subr.mxu0 0.0
        %2991 = vmatpush1.msra.mxu0 %v320
        %2992 = vmatprep.subr.mxu0 0.0
        %2993 = vmatpush1.msra.mxu0 0.0
        %2994 = vmatprep.subr.mxu0 0.0
        %2995 = vmatpush1.msra.mxu0 0.0
        %2996 = vmatprep.subr.mxu0 0.0
        %2997 = vmatpush1.msra.mxu0 0.0
        %2998 = vmatprep.subr.mxu0 0.0
        %2999 = vmatpush1.msra.mxu0 0.0
        %3000 = vmatprep.subr.mxu0 0.0
        %3001 = vmatpush1.msra.mxu0 0.0
        %3002 = vmatprep.subr.mxu0 0.0
        %3003 = vmatpush1.msra.mxu0 0.0
        %3004 = vmatprep.subr.mxu0 0.0
        %3005 = vmatpush1.msra.mxu0 0.0
        %3006 = vmatprep.subr.mxu0 0.0
        %3007 = vmatpush1.msra.mxu0 0.0
        %3008 = vmatprep.subr.mxu0 0.0
        %3009 = vmatpush1.msra.mxu0 0.0
        %3010 = vmatprep.subr.mxu0 0.0
        %3011 = vmatpush1.msra.mxu0 0.0
        %3012 = vmatprep.subr.mxu0 0.0
        %3013 = vmatpush1.msra.mxu0 0.0
        %3014 = vmatprep.subr.mxu0 0.0
        %3015 = vmatpush1.msra.mxu0 0.0
        %3016 = vmatprep.subr.mxu0 0.0
        %3017 = vmatpush1.msra.mxu0 0.0
        %3018 = vmatprep.subr.mxu0 0.0
        %3019 = vmatpush1.msra.mxu0 0.0
        %3020 = vmatprep.subr.mxu0 0.0
        %3021 = vmatpush1.msra.mxu0 0.0
        %3022 = vmatprep.subr.mxu0 0.0
        %3023 = vmatpush1.msra.mxu0 0.0
        %3024 = vmatprep.subr.mxu0 0.0
        %3025 = vmatpush1.msra.mxu0 0.0
        %3026 = vmatprep.subr.mxu0 0.0
        %3027 = vmatpush1.msra.mxu0 0.0
        %3028 = vmatprep.subr.mxu0 0.0
        %3029 = vmatpush1.msra.mxu0 0.0
        %3030 = vmatprep.subr.mxu0 0.0
        %3031 = vmatpush1.msra.mxu0 0.0
        %3032 = vmatprep.subr.mxu0 0.0
        %3033 = vmatpush1.msra.mxu0 0.0
        %3034 = vmatprep.subr.mxu0 0.0
        %3035 = vmatpush1.msra.mxu0 0.0
        %3036 = vmatprep.subr.mxu0 0.0
        %3037 = vmatpush1.msra.mxu0 0.0
        %3038 = vmatprep.subr.mxu0 0.0
        %3039 = vmatpush1.msra.mxu0 0.0
        %3040 = vmatprep.subr.mxu0 0.0
        %3041 = vmatpush1.msra.mxu0 0.0
        %3042 = vmatprep.subr.mxu0 0.0
        %3043 = vmatpush1.msra.mxu0 0.0
        %3044 = vmatprep.subr.mxu0 0.0
        %3045 = vmatpush1.msra.mxu0 0.0
        %3046 = vmatprep.subr.mxu0 0.0
        %3047 = vmatpush1.msra.mxu0 0.0
        %3048 = vmatprep.subr.mxu0 0.0
        %3049 = vmatpush1.msra.mxu0 0.0
        %3050 = vmatprep.subr.mxu0 0.0
        %3051 = vmatpush1.msra.mxu0 0.0
        %3052 = vmatprep.mubr.f32.mxu0 0.0
        %3053 = vmatmul.mubr.f32.gmra.mrb[0].mxu0 %v2986
        %v3054 = vpop.f32.mrb[0].mxu0
        %v3055 = vadd.f32 0.0, %v3054
        %v3056 = vpop.f32.mrb[0].mxu0
        %3057 = vdwg.mxu0
        %3059 = vrot.lane.b32.xlu0 %v3055, 24
        %v3060 = vpop.permute.xlu0 %3059
        %vm3062 = vcmask 261312
        %3063 = vst.msk [vmem:[%s224] sm:$0xff] %vm3062, %v3060
        %v3065 = vsel %vm2634, %v2748, 0
        %3067 = vmatprep.subr.mxu0 0.0
        %3068 = vmatpush1.msra.mxu0 %v319
        %3069 = vmatprep.subr.mxu0 0.0
        %3070 = vmatpush1.msra.mxu0 %v320
        %3071 = vmatprep.subr.mxu0 0.0
        %3072 = vmatpush1.msra.mxu0 0.0
        %3073 = vmatprep.subr.mxu0 0.0
        %3074 = vmatpush1.msra.mxu0 0.0
        %3075 = vmatprep.subr.mxu0 0.0
        %3076 = vmatpush1.msra.mxu0 0.0
        %3077 = vmatprep.subr.mxu0 0.0
        %3078 = vmatpush1.msra.mxu0 0.0
        %3079 = vmatprep.subr.mxu0 0.0
        %3080 = vmatpush1.msra.mxu0 0.0
        %3081 = vmatprep.subr.mxu0 0.0
        %3082 = vmatpush1.msra.mxu0 0.0
        %3083 = vmatprep.subr.mxu0 0.0
        %3084 = vmatpush1.msra.mxu0 0.0
        %3085 = vmatprep.subr.mxu0 0.0
        %3086 = vmatpush1.msra.mxu0 0.0
        %3087 = vmatprep.subr.mxu0 0.0
        %3088 = vmatpush1.msra.mxu0 0.0
        %3089 = vmatprep.subr.mxu0 0.0
        %3090 = vmatpush1.msra.mxu0 0.0
        %3091 = vmatprep.subr.mxu0 0.0
        %3092 = vmatpush1.msra.mxu0 0.0
        %3093 = vmatprep.subr.mxu0 0.0
        %3094 = vmatpush1.msra.mxu0 0.0
        %3095 = vmatprep.subr.mxu0 0.0
        %3096 = vmatpush1.msra.mxu0 0.0
        %3097 = vmatprep.subr.mxu0 0.0
        %3098 = vmatpush1.msra.mxu0 0.0
        %3099 = vmatprep.subr.mxu0 0.0
        %3100 = vmatpush1.msra.mxu0 0.0
        %3101 = vmatprep.subr.mxu0 0.0
        %3102 = vmatpush1.msra.mxu0 0.0
        %3103 = vmatprep.subr.mxu0 0.0
        %3104 = vmatpush1.msra.mxu0 0.0
        %3105 = vmatprep.subr.mxu0 0.0
        %3106 = vmatpush1.msra.mxu0 0.0
        %3107 = vmatprep.subr.mxu0 0.0
        %3108 = vmatpush1.msra.mxu0 0.0
        %3109 = vmatprep.subr.mxu0 0.0
        %3110 = vmatpush1.msra.mxu0 0.0
        %3111 = vmatprep.subr.mxu0 0.0
        %3112 = vmatpush1.msra.mxu0 0.0
        %3113 = vmatprep.subr.mxu0 0.0
        %3114 = vmatpush1.msra.mxu0 0.0
        %3115 = vmatprep.subr.mxu0 0.0
        %3116 = vmatpush1.msra.mxu0 0.0
        %3117 = vmatprep.subr.mxu0 0.0
        %3118 = vmatpush1.msra.mxu0 0.0
        %3119 = vmatprep.subr.mxu0 0.0
        %3120 = vmatpush1.msra.mxu0 0.0
        %3121 = vmatprep.subr.mxu0 0.0
        %3122 = vmatpush1.msra.mxu0 0.0
        %3123 = vmatprep.subr.mxu0 0.0
        %3124 = vmatpush1.msra.mxu0 0.0
        %3125 = vmatprep.subr.mxu0 0.0
        %3126 = vmatpush1.msra.mxu0 0.0
        %3127 = vmatprep.subr.mxu0 0.0
        %3128 = vmatpush1.msra.mxu0 0.0
        %3129 = vmatprep.subr.mxu0 0.0
        %3130 = vmatpush1.msra.mxu0 0.0
        %3131 = vmatprep.mubr.f32.mxu0 0.0
        %3132 = vmatmul.mubr.f32.gmra.mrb[0].mxu0 %v3065
        %v3133 = vpop.f32.mrb[0].mxu0
        %v3134 = vadd.f32 0.0, %v3133
        %v3135 = vpop.f32.mrb[0].mxu0
        %3136 = vdwg.mxu0
        %3138 = vrot.lane.b32.xlu0 %v3134, 32
        %v3139 = vpop.permute.xlu0 %3138
        %vm3141 = vcmask 326912
        %3142 = vst.msk [vmem:[%s224] sm:$0xff] %vm3141, %v3139
        %3143 = vrot.lane.b32.xlu0 %v2748, 64
        %v3144 = vpop.permute.xlu0 %3143
        %v3145 = vsel %vm2634, %v3144, 0
        %3147 = vmatprep.subr.mxu0 0.0
        %3148 = vmatpush1.msra.mxu0 %v319
        %3149 = vmatprep.subr.mxu0 0.0
        %3150 = vmatpush1.msra.mxu0 %v320
        %3151 = vmatprep.subr.mxu0 0.0
        %3152 = vmatpush1.msra.mxu0 0.0
        %3153 = vmatprep.subr.mxu0 0.0
        %3154 = vmatpush1.msra.mxu0 0.0
        %3155 = vmatprep.subr.mxu0 0.0
        %3156 = vmatpush1.msra.mxu0 0.0
        %3157 = vmatprep.subr.mxu0 0.0
        %3158 = vmatpush1.msra.mxu0 0.0
        %3159 = vmatprep.subr.mxu0 0.0
        %3160 = vmatpush1.msra.mxu0 0.0
        %3161 = vmatprep.subr.mxu0 0.0
        %3162 = vmatpush1.msra.mxu0 0.0
        %3163 = vmatprep.subr.mxu0 0.0
        %3164 = vmatpush1.msra.mxu0 0.0
        %3165 = vmatprep.subr.mxu0 0.0
        %3166 = vmatpush1.msra.mxu0 0.0
        %3167 = vmatprep.subr.mxu0 0.0
        %3168 = vmatpush1.msra.mxu0 0.0
        %3169 = vmatprep.subr.mxu0 0.0
        %3170 = vmatpush1.msra.mxu0 0.0
        %3171 = vmatprep.subr.mxu0 0.0
        %3172 = vmatpush1.msra.mxu0 0.0
        %3173 = vmatprep.subr.mxu0 0.0
        %3174 = vmatpush1.msra.mxu0 0.0
        %3175 = vmatprep.subr.mxu0 0.0
        %3176 = vmatpush1.msra.mxu0 0.0
        %3177 = vmatprep.subr.mxu0 0.0
        %3178 = vmatpush1.msra.mxu0 0.0
        %3179 = vmatprep.subr.mxu0 0.0
        %3180 = vmatpush1.msra.mxu0 0.0
        %3181 = vmatprep.subr.mxu0 0.0
        %3182 = vmatpush1.msra.mxu0 0.0
        %3183 = vmatprep.subr.mxu0 0.0
        %3184 = vmatpush1.msra.mxu0 0.0
        %3185 = vmatprep.subr.mxu0 0.0
        %3186 = vmatpush1.msra.mxu0 0.0
        %3187 = vmatprep.subr.mxu0 0.0
        %3188 = vmatpush1.msra.mxu0 0.0
        %3189 = vmatprep.subr.mxu0 0.0
        %3190 = vmatpush1.msra.mxu0 0.0
        %3191 = vmatprep.subr.mxu0 0.0
        %3192 = vmatpush1.msra.mxu0 0.0
        %3193 = vmatprep.subr.mxu0 0.0
        %3194 = vmatpush1.msra.mxu0 0.0
        %3195 = vmatprep.subr.mxu0 0.0
        %3196 = vmatpush1.msra.mxu0 0.0
        %3197 = vmatprep.subr.mxu0 0.0
        %3198 = vmatpush1.msra.mxu0 0.0
        %3199 = vmatprep.subr.mxu0 0.0
        %3200 = vmatpush1.msra.mxu0 0.0
        %3201 = vmatprep.subr.mxu0 0.0
        %3202 = vmatpush1.msra.mxu0 0.0
        %3203 = vmatprep.subr.mxu0 0.0
        %3204 = vmatpush1.msra.mxu0 0.0
        %3205 = vmatprep.subr.mxu0 0.0
        %3206 = vmatpush1.msra.mxu0 0.0
        %3207 = vmatprep.subr.mxu0 0.0
        %3208 = vmatpush1.msra.mxu0 0.0
        %3209 = vmatprep.subr.mxu0 0.0
        %3210 = vmatpush1.msra.mxu0 0.0
        %3211 = vmatprep.mubr.f32.mxu0 0.0
        %3212 = vmatmul.mubr.f32.gmra.mrb[0].mxu0 %v3145
        %v3213 = vpop.f32.mrb[0].mxu0
        %v3214 = vadd.f32 0.0, %v3213
        %v3215 = vpop.f32.mrb[0].mxu0
        %3216 = vdwg.mxu0
        %3218 = vrot.lane.b32.xlu0 %v3214, 40
        %v3219 = vpop.permute.xlu0 %3218
        %vm3221 = vcmask 392512
        %3222 = vst.msk [vmem:[%s224] sm:$0xff] %vm3221, %v3219
        %v3224 = vsel %vm2634, %v2749, 0
        %3226 = vmatprep.subr.mxu0 0.0
        %3227 = vmatpush1.msra.mxu0 %v319
        %3228 = vmatprep.subr.mxu0 0.0
        %3229 = vmatpush1.msra.mxu0 %v320
        %3230 = vmatprep.subr.mxu0 0.0
        %3231 = vmatpush1.msra.mxu0 0.0
        %3232 = vmatprep.subr.mxu0 0.0
        %3233 = vmatpush1.msra.mxu0 0.0
        %3234 = vmatprep.subr.mxu0 0.0
        %3235 = vmatpush1.msra.mxu0 0.0
        %3236 = vmatprep.subr.mxu0 0.0
        %3237 = vmatpush1.msra.mxu0 0.0
        %3238 = vmatprep.subr.mxu0 0.0
        %3239 = vmatpush1.msra.mxu0 0.0
        %3240 = vmatprep.subr.mxu0 0.0
        %3241 = vmatpush1.msra.mxu0 0.0
        %3242 = vmatprep.subr.mxu0 0.0
        %3243 = vmatpush1.msra.mxu0 0.0
        %3244 = vmatprep.subr.mxu0 0.0
        %3245 = vmatpush1.msra.mxu0 0.0
        %3246 = vmatprep.subr.mxu0 0.0
        %3247 = vmatpush1.msra.mxu0 0.0
        %3248 = vmatprep.subr.mxu0 0.0
        %3249 = vmatpush1.msra.mxu0 0.0
        %3250 = vmatprep.subr.mxu0 0.0
        %3251 = vmatpush1.msra.mxu0 0.0
        %3252 = vmatprep.subr.mxu0 0.0
        %3253 = vmatpush1.msra.mxu0 0.0
        %3254 = vmatprep.subr.mxu0 0.0
        %3255 = vmatpush1.msra.mxu0 0.0
        %3256 = vmatprep.subr.mxu0 0.0
        %3257 = vmatpush1.msra.mxu0 0.0
        %3258 = vmatprep.subr.mxu0 0.0
        %3259 = vmatpush1.msra.mxu0 0.0
        %3260 = vmatprep.subr.mxu0 0.0
        %3261 = vmatpush1.msra.mxu0 0.0
        %3262 = vmatprep.subr.mxu0 0.0
        %3263 = vmatpush1.msra.mxu0 0.0
        %3264 = vmatprep.subr.mxu0 0.0
        %3265 = vmatpush1.msra.mxu0 0.0
        %3266 = vmatprep.subr.mxu0 0.0
        %3267 = vmatpush1.msra.mxu0 0.0
        %3268 = vmatprep.subr.mxu0 0.0
        %3269 = vmatpush1.msra.mxu0 0.0
        %3270 = vmatprep.subr.mxu0 0.0
        %3271 = vmatpush1.msra.mxu0 0.0
        %3272 = vmatprep.subr.mxu0 0.0
        %3273 = vmatpush1.msra.mxu0 0.0
        %3274 = vmatprep.subr.mxu0 0.0
        %3275 = vmatpush1.msra.mxu0 0.0
        %3276 = vmatprep.subr.mxu0 0.0
        %3277 = vmatpush1.msra.mxu0 0.0
        %3278 = vmatprep.subr.mxu0 0.0
        %3279 = vmatpush1.msra.mxu0 0.0
        %3280 = vmatprep.subr.mxu0 0.0
        %3281 = vmatpush1.msra.mxu0 0.0
        %3282 = vmatprep.subr.mxu0 0.0
        %3283 = vmatpush1.msra.mxu0 0.0
        %3284 = vmatprep.subr.mxu0 0.0
        %3285 = vmatpush1.msra.mxu0 0.0
        %3286 = vmatprep.subr.mxu0 0.0
        %3287 = vmatpush1.msra.mxu0 0.0
        %3288 = vmatprep.subr.mxu0 0.0
        %3289 = vmatpush1.msra.mxu0 0.0
        %3290 = vmatprep.mubr.f32.mxu0 0.0
        %3291 = vmatmul.mubr.f32.gmra.mrb[0].mxu0 %v3224
        %v3292 = vpop.f32.mrb[0].mxu0
        %v3293 = vadd.f32 0.0, %v3292
        %v3294 = vpop.f32.mrb[0].mxu0
        %3295 = vdwg.mxu0
        %3297 = vrot.lane.b32.xlu0 %v3293, 48
        %v3298 = vpop.permute.xlu0 %3297
        %vm3300 = vcmask 458112
        %3301 = vst.msk [vmem:[%s224] sm:$0xff] %vm3300, %v3298
        %3302 = vrot.lane.b32.xlu0 %v2749, 64
        %v3303 = vpop.permute.xlu0 %3302
        %v3304 = vsel %vm2634, %v3303, 0
        %3306 = vmatprep.subr.mxu0 0.0
        %3307 = vmatpush1.msra.mxu0 %v319
        %3308 = vmatprep.subr.mxu0 0.0
        %3309 = vmatpush1.msra.mxu0 %v320
        %3310 = vmatprep.subr.mxu0 0.0
        %3311 = vmatpush1.msra.mxu0 0.0
        %3312 = vmatprep.subr.mxu0 0.0
        %3313 = vmatpush1.msra.mxu0 0.0
        %3314 = vmatprep.subr.mxu0 0.0
        %3315 = vmatpush1.msra.mxu0 0.0
        %3316 = vmatprep.subr.mxu0 0.0
        %3317 = vmatpush1.msra.mxu0 0.0
        %3318 = vmatprep.subr.mxu0 0.0
        %3319 = vmatpush1.msra.mxu0 0.0
        %3320 = vmatprep.subr.mxu0 0.0
        %3321 = vmatpush1.msra.mxu0 0.0
        %3322 = vmatprep.subr.mxu0 0.0
        %3323 = vmatpush1.msra.mxu0 0.0
        %3324 = vmatprep.subr.mxu0 0.0
        %3325 = vmatpush1.msra.mxu0 0.0
        %3326 = vmatprep.subr.mxu0 0.0
        %3327 = vmatpush1.msra.mxu0 0.0
        %3328 = vmatprep.subr.mxu0 0.0
        %3329 = vmatpush1.msra.mxu0 0.0
        %3330 = vmatprep.subr.mxu0 0.0
        %3331 = vmatpush1.msra.mxu0 0.0
        %3332 = vmatprep.subr.mxu0 0.0
        %3333 = vmatpush1.msra.mxu0 0.0
        %3334 = vmatprep.subr.mxu0 0.0
        %3335 = vmatpush1.msra.mxu0 0.0
        %3336 = vmatprep.subr.mxu0 0.0
        %3337 = vmatpush1.msra.mxu0 0.0
        %3338 = vmatprep.subr.mxu0 0.0
        %3339 = vmatpush1.msra.mxu0 0.0
        %3340 = vmatprep.subr.mxu0 0.0
        %3341 = vmatpush1.msra.mxu0 0.0
        %3342 = vmatprep.subr.mxu0 0.0
        %3343 = vmatpush1.msra.mxu0 0.0
        %3344 = vmatprep.subr.mxu0 0.0
        %3345 = vmatpush1.msra.mxu0 0.0
        %3346 = vmatprep.subr.mxu0 0.0
        %3347 = vmatpush1.msra.mxu0 0.0
        %3348 = vmatprep.subr.mxu0 0.0
        %3349 = vmatpush1.msra.mxu0 0.0
        %3350 = vmatprep.subr.mxu0 0.0
        %3351 = vmatpush1.msra.mxu0 0.0
        %3352 = vmatprep.subr.mxu0 0.0
        %3353 = vmatpush1.msra.mxu0 0.0
        %3354 = vmatprep.subr.mxu0 0.0
        %3355 = vmatpush1.msra.mxu0 0.0
        %3356 = vmatprep.subr.mxu0 0.0
        %3357 = vmatpush1.msra.mxu0 0.0
        %3358 = vmatprep.subr.mxu0 0.0
        %3359 = vmatpush1.msra.mxu0 0.0
        %3360 = vmatprep.subr.mxu0 0.0
        %3361 = vmatpush1.msra.mxu0 0.0
        %3362 = vmatprep.subr.mxu0 0.0
        %3363 = vmatpush1.msra.mxu0 0.0
        %3364 = vmatprep.subr.mxu0 0.0
        %3365 = vmatpush1.msra.mxu0 0.0
        %3366 = vmatprep.subr.mxu0 0.0
        %3367 = vmatpush1.msra.mxu0 0.0
        %3368 = vmatprep.subr.mxu0 0.0
        %3369 = vmatpush1.msra.mxu0 0.0
        %3370 = vmatprep.mubr.f32.mxu0 0.0
        %3371 = vmatmul.mubr.f32.gmra.mrb[0].mxu0 %v3304
        %v3372 = vpop.f32.mrb[0].mxu0
        %v3373 = vadd.f32 0.0, %v3372
        %v3374 = vpop.f32.mrb[0].mxu0
        %3375 = vdwg.mxu0
        %3377 = vrot.lane.b32.xlu0 %v3373, 56
        %v3378 = vpop.permute.xlu0 %3377
        %vm3380 = vcmask 523712
        %3381 = vst.msk [vmem:[%s224] sm:$0xff] %vm3380, %v3378
        %s3382 = sand.u32 %s101, 1
        %s3383 = scalar_lea.sflag [#allocation6], %s3382
        %s3384 = sand.u32 %s101, 1
        %s3385 = smul.addr %s3384, 16
        %s3386 = scalar_lea.vmem [#allocation7], %s3385
        %s3387 = sand.u32 %s127, 1
        %s3388 = scalar_lea.sflag [#allocation9], %s3387
        %s3389 = sand.u32 %s127, 1
        %s3390 = smul.addr %s3389, 8
        %s3391 = scalar_lea.vmem [#allocation8], %s3390
        // Predicated region
        $region37: #{tpu_custom_call.1} parent=31 // pred_check
          %p3392 = pneg %p111
        $region38: #{tpu_custom_call.1} parent=31 // pred_check_branch
          %3394 = sbr.rel (%p3392) target = $region40
        $region39: #{tpu_custom_call.1} parent=31 // pred_region
          %s3396 = ssub.s32 256, 256
          %3397 = vsyncadd %s3383, %s3396
          %s3398 = smul.addr %s25, 2
          %s3399 = smul.addr %s3398, 128
          %s3400 = scalar_lea.hbm %s3, %s3399
          %s3402 = sshll.u32 %s3386, 4
          %s3403 = int_to_ptr.vmem [resolvable:$true] %s3402
          %3405 = dma.vmem_to_hbm [thread:$0]  %s3403, 256, %s3400, %s3383
        $region40: #{tpu_custom_call.1} parent=31 // pred_fallthru
          _
        // Predicated region
        $region41: #{tpu_custom_call.1} parent=31 // pred_check
          %p3406 = pneg %p137
        $region42: #{tpu_custom_call.1} parent=31 // pred_check_branch
          %3408 = sbr.rel (%p3406) target = $region44
        $region43: #{tpu_custom_call.1} parent=31 // pred_region
          %s3410 = ssub.s32 128, 128
          %3411 = vsyncadd %s3388, %s3410
          %s3412 = smul.addr %s25, 128
          %s3413 = scalar_lea.hbm %s4, %s3412
          %s3415 = sshll.u32 %s3391, 4
          %s3416 = int_to_ptr.vmem [resolvable:$true] %s3415
          %3418 = dma.vmem_to_hbm [thread:$0]  %s3416, 128, %s3413, %s3388
        $region44: #{tpu_custom_call.1} parent=31 // pred_fallthru
          _
      $region32: #{tpu_custom_call.1} parent=5 // pred_fallthru
        _
      %p3419 = scmp.le.s32.totalorder 2, %s20
      // Predicated region
      $region45: #{tpu_custom_call.1} parent=5 // pred_check
        %p3420 = pneg %p3419
      $region46: #{tpu_custom_call.1} parent=5 // pred_check_branch
        %3422 = sbr.rel (%p3420) target = $region48
      $region47: #{tpu_custom_call.1} parent=5 // pred_region
        %s3423 = ssub.s32 %s20, 2
        // Predicated region
        $region49: #{tpu_custom_call.1} parent=47 // pred_check
          %p3424 = pneg %p117
        $region50: #{tpu_custom_call.1} parent=47 // pred_check_branch
          %3426 = sbr.rel (%p3424) target = $region52
        $region51: #{tpu_custom_call.1} parent=47 // pred_region
          %s3427 = sand.u32 %s102, 1
          %s3428 = scalar_lea.sflag [#allocation6], %s3427
          %s3429 = sand.u32 %s102, 1
          %s3430 = smul.addr %s3429, 16
          %s3431 = scalar_lea.vmem [#allocation7], %s3430
          %3432 = dma.done %s3428, 256
        $region52: #{tpu_custom_call.1} parent=47 // pred_fallthru
          _
        // Predicated region
        $region53: #{tpu_custom_call.1} parent=47 // pred_check
          %p3433 = pneg %p143
        $region54: #{tpu_custom_call.1} parent=47 // pred_check_branch
          %3435 = sbr.rel (%p3433) target = $region56
        $region55: #{tpu_custom_call.1} parent=47 // pred_region
          %s3436 = sand.u32 %s128, 1
          %s3437 = scalar_lea.sflag [#allocation9], %s3436
          %s3438 = sand.u32 %s128, 1
          %s3439 = smul.addr %s3438, 8
          %s3440 = scalar_lea.vmem [#allocation8], %s3439
          %3441 = dma.done %s3437, 128
        $region56: #{tpu_custom_call.1} parent=47 // pred_fallthru
          _
      $region48: #{tpu_custom_call.1} parent=5 // pred_fallthru
        _
    $region6: #{tpu_custom_call.1} parent=1 // loop_footer
      %s24 = sadd.s32 1, %s20
    $region7: #{tpu_custom_call.1} parent=1 // loop_footer_branch
      %19 = sbr.rel target = $region3
    $region8: #{tpu_custom_call.1} parent=1 // loop_exit
      _
    %3442 = vsyncpa [#allocation5], 1
    %s3443 = scalar_lea.sflag [#allocation5], 1
    %3444 = vsyncpa %s3443, 1
    %3445 = vsyncpa [#allocation6], 1
    %s3446 = scalar_lea.sflag [#allocation6], 1
    %3447 = vsyncpa %s3446, 1
    %3448 = vsyncpa [#allocation9], 1
    %s3449 = scalar_lea.sflag [#allocation9], 1
    %3450 = vsyncpa %s3449, 1

</llo_original>
